<compile_context>
chip_gen: v7x
topology: tpu7x:2x2x1
jax: 0.10.0
libtpu: 0.0.40
codegen_flags: <defaults>
</compile_context>

<pallas_src>
import functools
import itertools
import math

import jax
import jax.numpy as jnp
from jax.experimental import pallas as pl
from jax.experimental.pallas import tpu as pltpu

_BN_EPS = 1e-5
_LEAKY_SLOPE = 0.01          # nn.LeakyReLU default negative_slope
_VMEM_LIMIT = 32 * 1024 * 1024
_TARGET_M = 512              # target matmul M (batch folded in) per grid step


# ----------------------------------------------------------------------------
# small helpers
# ----------------------------------------------------------------------------
def _full_spec(a):
    return pl.BlockSpec(a.shape, lambda i: (0,) * a.ndim)


def _pick_bblk(n, prod_out, target_m=_TARGET_M):
    """Largest divisor of n so that bblk*prod_out ~ target_m and grid length >= 2."""
    cap = max(1, target_m // max(prod_out, 1))
    best = 1
    for d in range(1, min(cap, n) + 1):
        if n % d == 0 and n // d >= 2:
            best = d
    return best


def _phase_split(x, k, stride, pad):
    """(N, *spatial, C) -> (N, stride**(nd-1), stride, *q, C); pure relayout.

    xph[n, p_lead, p_w, a..., c] = xpad[n, (stride*a + p)..., c], so conv tap t reads
    the contiguous window xph[n, phase(t), t//stride : t//stride + out, ...].
    For stride=1 this is just the zero pad (single phase).
    """
    spatial = x.shape[1:-1]
    nd = len(spatial)
    out_sz = tuple((s + 2 * pad - k) // stride + 1 for s in spatial)
    q_sz = tuple(o + (k - 1) // stride for o in out_sz)
    pad_widths = [(0, 0)]
    for s, q in zip(spatial, q_sz):
        pad_widths.append((pad, stride * q - s - pad))
    pad_widths.append((0, 0))
    xp = jnp.pad(x, pad_widths)
    phases = []
    for ph in itertools.product(range(stride), repeat=nd):
        idx = (slice(None),) + tuple(slice(p0, None, stride) for p0 in ph) + (slice(None),)
        phases.append(xp[idx])
    xph = jnp.stack(phases, axis=1)
    xph = xph.reshape((x.shape[0], stride ** (nd - 1), stride) + q_sz + (x.shape[-1],))
    return xph, out_sz, q_sz


# ----------------------------------------------------------------------------
# in-kernel helpers: W-folded bf16 staging + K=3*C tap matmuls (f32 accumulate)
# ----------------------------------------------------------------------------
def _leaky(v, slope):
    return jnp.where(v > 0, v, slope * v)


def _stage_w_taps_from_phases(x_ref, s_ref, stride, spatial_out):
    """s_ref[b, p_lead, a_lead.., wo, kw*C + c] = xpad[b, .., stride*wo + kw, c]."""
    nd = len(spatial_out)
    wout = spatial_out[-1]
    cin = x_ref.shape[-1]
    for kw in range(3):
        pw, ow = kw % stride, kw // stride
        src = (slice(None), slice(None), pw) + (slice(None),) * (nd - 1) \
              + (slice(ow, ow + wout), slice(None))
        dst = (slice(None),) * (len(s_ref.shape) - 1) \
              + (slice(kw * cin, (kw + 1) * cin),)
        s_ref[dst] = x_ref[src].astype(s_ref.dtype)


def _stage_w_taps_from_padded(h_ref, s_ref, spatial_out):
    """s_ref[b, a_lead.., wo, kw*C + c] = h_ref[b, a_lead.., wo + kw, c]."""
    wout = spatial_out[-1]
    c = h_ref.shape[-1]
    for kw in range(3):
        src = (slice(None),) * (len(h_ref.shape) - 2) \
              + (slice(kw, kw + wout), slice(None))
        dst = (slice(None),) * (len(s_ref.shape) - 1) \
              + (slice(kw * c, (kw + 1) * c),)
        s_ref[dst] = h_ref[src].astype(s_ref.dtype)


def _conv_from_staged(s_ref, w_ref, stride, spatial_out, lead_pad):
    """Sum of 3**(nd-1) matmuls (K = 3*C, bf16 MXU, f32 accumulate).

    lead_pad=True : s_ref leading spatial dims are (out+2) padded (conv2 path).
    lead_pad=False: s_ref has an explicit lead-phase axis (phase-split conv1 path).
    Returns f32 (B*prod(out), Cout).
    """
    nd = len(spatial_out)
    bblk = s_ref.shape[0]
    kdim = w_ref.shape[-2]
    cout = w_ref.shape[-1]
    m = bblk * math.prod(spatial_out)
    acc = jnp.zeros((m, cout), jnp.float32)
    for t_idx, tlead in enumerate(itertools.product(range(3), repeat=nd - 1)):
        if lead_pad:
            idx = (slice(None),) + tuple(
                slice(t, t + o) for t, o in zip(tlead, spatial_out[:-1]))
        else:
            p_lead = 0
            for t in tlead:
                p_lead = p_lead * stride + (t % stride)
            idx = (slice(None), p_lead) + tuple(
                slice(t // stride, t // stride + o)
                for t, o in zip(tlead, spatial_out[:-1]))
        idx = idx + (slice(None), slice(None))
        op = s_ref[idx].reshape(m, kdim)
        acc = acc + jnp.dot(op, w_ref[t_idx], preferred_element_type=jnp.float32)
    return acc


def _zero_halo(ref, spatial_out):
    """Zero only the 1-wide halo of a (B, *(out+2), C) scratch (interior is
    fully overwritten every step)."""
    nd = len(spatial_out)
    shp = ref.shape
    for d in range(nd):
        zshape = shp[:1 + d] + (1,) + shp[2 + d:]
        z = jnp.zeros(zshape, ref.dtype)
        for edge in (0, spatial_out[d] + 1):
            idx = (slice(None),) * (1 + d) + (slice(edge, edge + 1),) \
                  + (slice(None),) * (nd - d)
            ref[idx] = z


# ----------------------------------------------------------------------------
# Pallas kernels
# ----------------------------------------------------------------------------
def _res_block_kernel(x_ref, w1_ref, b1_ref, w2_ref, b2_ref, wsc_ref, bsc_ref,
                      o_ref, s1_ref, h1_ref, s2_ref, *, stride, spatial_out,
                      neg_slope):
    """Fused ResBlock for a block of images/volumes, everything VMEM-resident:
         h1  = LeakyReLU(conv3_stride(x)  [BN folded])          (Dropout = id)
         sc  = conv1x1_stride(x)          [BN folded]
         out = LeakyReLU(conv3_1(h1)      [BN folded] + sc)
    """
    nd = len(spatial_out)
    bblk = x_ref.shape[0]
    cin = x_ref.shape[-1]
    cmid = w1_ref.shape[-1]
    cout = w2_ref.shape[-1]
    m = bblk * math.prod(spatial_out)

    # conv1: W-taps folded into K via a bf16 staging buffer (single cast)
    _stage_w_taps_from_phases(x_ref, s1_ref, stride, spatial_out)
    h1 = _leaky(_conv_from_staged(s1_ref, w1_ref, stride, spatial_out,
                                  lead_pad=False) + b1_ref[...], neg_slope)

    # keep zero-haloed h1 resident in VMEM for conv2 (no HBM round trip)
    _zero_halo(h1_ref, spatial_out)
    interior = (slice(None),) + tuple(slice(1, 1 + s) for s in spatial_out) + (slice(None),)
    h1_ref[interior] = h1.reshape((bblk,) + tuple(spatial_out) + (cmid,))

    # projection shortcut: 1x1 (stride) conv -> folded BN
    p_lead_sc = 0
    for _ in range(nd - 1):
        p_lead_sc = p_lead_sc * stride + (1 % stride)
    sc_idx = (slice(None), p_lead_sc, 1 % stride) + tuple(
        slice(1 // stride, 1 // stride + s) for s in spatial_out) + (slice(None),)
    xs = x_ref[sc_idx].reshape(m, cin).astype(jnp.bfloat16)
    sc = jnp.dot(xs, wsc_ref[...], preferred_element_type=jnp.float32) + bsc_ref[...]

    # conv2 (stride 1) over h1, same W-folded staging, + shortcut -> LeakyReLU
    _stage_w_taps_from_padded(h1_ref, s2_ref, spatial_out)
    y = _leaky(_conv_from_staged(s2_ref, w2_ref, 1, spatial_out, lead_pad=True)
               + b2_ref[...] + sc, neg_slope)
    o_ref[...] = y.reshape((bblk,) + tuple(spatial_out) + (cout,)).astype(o_ref.dtype)


def _conv_kernel(x_ref, w_ref, b_ref, o_ref, s_ref, *, spatial_out, neg_slope, act):
    """Plain 3x3 (stride 1, pad 1) conv + bias (+ LeakyReLU) for a block of images."""
    bblk = x_ref.shape[0]
    cout = w_ref.shape[-1]
    _stage_w_taps_from_phases(x_ref, s_ref, 1, spatial_out)
    y = _conv_from_staged(s_ref, w_ref, 1, spatial_out, lead_pad=False) + b_ref[...]
    if act:
        y = _leaky(y, neg_slope)
    o_ref[...] = y.reshape((bblk,) + tuple(spatial_out) + (cout,)).astype(o_ref.dtype)


def _dense_kernel(x_ref, w_ref, b_ref, o_ref):
    o_ref[...] = (jnp.dot(x_ref[...].astype(jnp.bfloat16), w_ref[...],
                          preferred_element_type=jnp.float32) + b_ref[...])


# ----------------------------------------------------------------------------
# wrappers
# ----------------------------------------------------------------------------
def res_block(x, p, stride):
    """x: (N, *spatial, Cin) f32 channels-last -> (N, *spatial_out, Cout) f32."""
    nd = x.ndim - 2
    n = x.shape[0]
    cin = x.shape[-1]
    cmid = p["w1"].shape[-1]
    cout = p["w2"].shape[-1]
    xph, spatial_out, q_sz = _phase_split(x, 3, stride, 1)
    bblk = _pick_bblk(n, math.prod(spatial_out))
    wout = spatial_out[-1]

    kernel = functools.partial(_res_block_kernel, stride=stride,
                               spatial_out=tuple(spatial_out),
                               neg_slope=_LEAKY_SLOPE)
    x_spec = pl.BlockSpec((bblk, stride ** (nd - 1), stride) + tuple(q_sz) + (cin,),
                          lambda i: (i,) + (0,) * (nd + 3))
    out_spec = pl.BlockSpec((bblk,) + tuple(spatial_out) + (cout,),
                            lambda i: (i,) + (0,) * (nd + 1))
    scratch = [
        # conv1 staging: (B, lead phases, lead q dims, Wout, 3*Cin) bf16
        pltpu.VMEM((bblk, stride ** (nd - 1)) + tuple(q_sz[:-1]) + (wout, 3 * cin),
                   jnp.bfloat16),
        # zero-haloed h1 (f32: unaligned 1-halo W shifts stay on the robust f32 path)
        pltpu.VMEM((bblk,) + tuple(s + 2 for s in spatial_out) + (cmid,), jnp.float32),
        # conv2 staging: (B, lead padded dims, Wout, 3*Cmid) bf16
        pltpu.VMEM((bblk,) + tuple(s + 2 for s in spatial_out[:-1]) + (wout, 3 * cmid),
                   jnp.bfloat16),
    ]
    return pl.pallas_call(
        kernel,
        out_shape=jax.ShapeDtypeStruct((n,) + tuple(spatial_out) + (cout,), jnp.float32),
        grid=(n // bblk,),
        in_specs=[x_spec, _full_spec(p["w1"]), _full_spec(p["b1"]),
                  _full_spec(p["w2"]), _full_spec(p["b2"]),
                  _full_spec(p["wsc"]), _full_spec(p["bsc"])],
        out_specs=out_spec,
        scratch_shapes=scratch,
        compiler_params=pltpu.CompilerParams(
            dimension_semantics=("parallel",),
            vmem_limit_bytes=_VMEM_LIMIT),
    )(xph, p["w1"], p["b1"], p["w2"], p["b2"], p["wsc"], p["bsc"])


def conv_bias_act(x, w, bias, *, act):
    """Plain 3x3 (stride 1, pad 1) conv + bias (+ LeakyReLU), channels-last."""
    nd = x.ndim - 2
    n = x.shape[0]
    cin = x.shape[-1]
    cout = w.shape[-1]
    xph, spatial_out, q_sz = _phase_split(x, 3, 1, 1)
    bblk = _pick_bblk(n, math.prod(spatial_out))
    wout = spatial_out[-1]

    kernel = functools.partial(_conv_kernel, spatial_out=tuple(spatial_out),
                               neg_slope=_LEAKY_SLOPE, act=act)
    x_spec = pl.BlockSpec((bblk, 1, 1) + tuple(q_sz) + (cin,),
                          lambda i: (i,) + (0,) * (nd + 3))
    out_spec = pl.BlockSpec((bblk,) + tuple(spatial_out) + (cout,),
                            lambda i: (i,) + (0,) * (nd + 1))
    scratch = [pltpu.VMEM((bblk, 1) + tuple(q_sz[:-1]) + (wout, 3 * cin), jnp.bfloat16)]
    return pl.pallas_call(
        kernel,
        out_shape=jax.ShapeDtypeStruct((n,) + tuple(spatial_out) + (cout,), jnp.float32),
        grid=(n // bblk,),
        in_specs=[x_spec, _full_spec(w), _full_spec(bias)],
        out_specs=out_spec,
        scratch_shapes=scratch,
        compiler_params=pltpu.CompilerParams(
            dimension_semantics=("parallel",),
            vmem_limit_bytes=_VMEM_LIMIT),
    )(xph, w, bias)


def dense(x, w, bias):
    """out = x @ w + bias (whole arrays VMEM-resident, bf16 MXU, f32 out)."""
    return pl.pallas_call(
        _dense_kernel,
        out_shape=jax.ShapeDtypeStruct((x.shape[0], w.shape[1]), jnp.float32),
        grid=(1,),
        in_specs=[pl.BlockSpec(x.shape, lambda i: (0, 0)),
                  pl.BlockSpec(w.shape, lambda i: (0, 0)),
                  pl.BlockSpec(bias.shape, lambda i: (0, 0))],
        out_specs=pl.BlockSpec((x.shape[0], w.shape[1]), lambda i: (0, 0)),
        compiler_params=pltpu.CompilerParams(vmem_limit_bytes=_VMEM_LIMIT),
    )(x, w, bias)


# ----------------------------------------------------------------------------
# parameter construction (deterministic; eval-BN folded; W-taps packed into K)
# ----------------------------------------------------------------------------
def _pack_block(key, cin, cout, nd):
    k1, k2, k3 = jax.random.split(key, 3)
    scale = 1.0 / (1.0 + _BN_EPS) ** 0.5     # eval BN: mean=0, var=1, gamma=1, beta=0

    def conv_w(k, ci, co):
        w = 0.1 * jax.random.normal(k, (3,) * nd + (ci, co), jnp.float32) * scale
        # pack (lead taps, kw*Cin + c, Cout) matching the in-kernel W-folded staging
        return w.reshape(3 ** (nd - 1), 3 * ci, co).astype(jnp.bfloat16)

    wsc = (0.1 * jax.random.normal(k3, (cin, cout), jnp.float32) * scale
           ).astype(jnp.bfloat16)
    zeros = jnp.zeros((1, cout), jnp.float32)
    return dict(w1=conv_w(k1, cin, cout), w2=conv_w(k2, cout, cout), wsc=wsc,
                b1=zeros, b2=zeros, bsc=zeros)


def init_params(key, *, in_channel, in_size, res2d_num, head_channel,
                res3d_num, seq, cls_size, tail_channel):
    keys = jax.random.split(key, 2 + res2d_num + res3d_num)
    ki = iter(keys)
    params = {"head": _pack_block(next(ki), in_channel, head_channel, nd=2)}

    channel, num = head_channel, in_size
    params["res2d"] = []
    for _ in range(res2d_num):
        params["res2d"].append(_pack_block(next(ki), channel, channel * 2, nd=2))
        channel *= 2
        num = (num + 1) // 2

    s = seq
    params["res3d"] = []
    for _ in range(res3d_num):
        params["res3d"].append(_pack_block(next(ki), channel, channel * 2, nd=3))
        channel *= 2
        num = (num + 1) // 2
        s = (s + 1) // 2

    kt, kf = jax.random.split(next(ki))
    # tail: Conv2d(s -> tail_channel, 3x3, pad 1, no bias) + LeakyReLU
    wt = 0.1 * jax.random.normal(kt, (3, 3, s, tail_channel), jnp.float32)
    params["tail_w"] = wt.reshape(3, 3 * s, tail_channel).astype(jnp.bfloat16)
    params["tail_b"] = jnp.zeros((1, tail_channel), jnp.float32)

    # fc: BatchNorm1d (eval, identity stats -> folded scalar scale) + Linear
    feat = tail_channel * num ** 2 * channel
    bn_scale = 1.0 / (1.0 + _BN_EPS) ** 0.5
    wf = 0.1 * jax.random.normal(kf, (feat, cls_size), jnp.float32) * bn_scale
    params["fc_w"] = wf.astype(jnp.bfloat16)
    params["fc_b"] = (0.01 * jnp.arange(cls_size, dtype=jnp.float32)).reshape(1, cls_size)

    params["meta"] = dict(c_final=channel, seq_final=s, num_final=num,
                          tail_channel=tail_channel, cls_size=cls_size)
    return params


# ----------------------------------------------------------------------------
# full forward pass
# ----------------------------------------------------------------------------
def res3d_forward(x, params):
    b, s, c, w, h = x.shape

    # (b, s, c, w, h) -> merge (b,s), channels-last (N, H, W, C) at real channel width
    out = jnp.transpose(x.reshape(b * s, c, w, h), (0, 2, 3, 1))

    out = res_block(out, params["head"], stride=1)
    for p in params["res2d"]:
        out = res_block(out, p, stride=2)

    _, w2, h2, c2 = out.shape
    # PyTorch: reshape(b,s,c,w,h).transpose(1,2) -> Conv3d NCDHW; in NDHWC it's a reshape
    out = out.reshape(b, s, w2, h2, c2)
    for p in params["res3d"]:
        out = res_block(out, p, stride=2)

    b3, s3, w3, h3, c3 = out.shape
    # PyTorch: (b, c, s, w, h).reshape(b*c, s, w, h) -> tail Conv2d over s channels
    out = jnp.transpose(out, (0, 4, 2, 3, 1)).reshape(b3 * c3, w3, h3, s3)
    out = conv_bias_act(out, params["tail_w"], params["tail_b"], act=True)

    # flatten exactly like PyTorch: (b, c * tail_channel * w * h)
    out = jnp.transpose(out, (0, 3, 1, 2)).reshape(b3, -1)

    # fc: folded BatchNorm1d + Linear (bias)
    return dense(out, params["fc_w"], params["fc_b"])


# ----------------------------------------------------------------------------
if __name__ == "__main__":
    # small config consistent with the module's shape arithmetic
    cfg = dict(in_channel=1, in_size=16, res2d_num=1, head_channel=4,
               res3d_num=2, seq=8, cls_size=10, tail_channel=2)
    b = 2

    key = jax.random.PRNGKey(0)
    kx, kp = jax.random.split(key)
    x = jax.random.normal(kx, (b, cfg["seq"], cfg["in_channel"],
                               cfg["in_size"], cfg["in_size"]), jnp.float32)
    params = init_params(kp, **cfg)

    out = jax.block_until_ready(res3d_forward(x, params))
    assert out.shape == (b, cfg["cls_size"]), out.shape
    assert bool(jnp.all(jnp.isfinite(out)))
    print("KERNEL_OK")
</pallas_src>

<mosaic_0001>
module attributes {stable_mosaic.version = 11 : i64} {
  func.func @_res_block_kernel(%arg0: i32, %arg1: memref<2x1x1x18x18x1xf32, #tpu.memory_space<vmem>>, %arg2: memref<3x3x4xbf16, #tpu.memory_space<vmem>>, %arg3: memref<1x4xf32, #tpu.memory_space<vmem>>, %arg4: memref<3x12x4xbf16, #tpu.memory_space<vmem>>, %arg5: memref<1x4xf32, #tpu.memory_space<vmem>>, %arg6: memref<1x4xbf16, #tpu.memory_space<vmem>>, %arg7: memref<1x4xf32, #tpu.memory_space<vmem>>, %arg8: memref<2x16x16x4xf32, #tpu.memory_space<vmem>>, %arg9: memref<2x1x18x16x3xbf16, #tpu.memory_space<vmem>>, %arg10: memref<2x18x18x4xf32, #tpu.memory_space<vmem>>, %arg11: memref<2x18x16x12xbf16, #tpu.memory_space<vmem>>) attributes {dimension_semantics = [#tpu.dimension_semantics<parallel>], iteration_bounds = array<i64: 8>, scalar_prefetch = 0 : i64, scratch_operands = 3 : i64, tpu.core_type = #tpu.core_type<tc>, window_params = [{transform_indices = @transform_0, window_bounds = array<i64: 2, 1, 1, 18, 18, 1>}, {pipeline_mode = #tpu.pipeline_mode<synchronous>, transform_indices = @transform_1, window_bounds = array<i64: 3, 3, 4>}, {pipeline_mode = #tpu.pipeline_mode<synchronous>, transform_indices = @transform_2, window_bounds = array<i64: 1, 4>}, {pipeline_mode = #tpu.pipeline_mode<synchronous>, transform_indices = @transform_3, window_bounds = array<i64: 3, 12, 4>}, {pipeline_mode = #tpu.pipeline_mode<synchronous>, transform_indices = @transform_4, window_bounds = array<i64: 1, 4>}, {pipeline_mode = #tpu.pipeline_mode<synchronous>, transform_indices = @transform_5, window_bounds = array<i64: 1, 4>}, {pipeline_mode = #tpu.pipeline_mode<synchronous>, transform_indices = @transform_6, window_bounds = array<i64: 1, 4>}, {transform_indices = @transform_7, window_bounds = array<i64: 2, 16, 16, 4>}]} {
    %c0 = arith.constant 0 : index
    %c0_0 = arith.constant 0 : index
    %c0_1 = arith.constant 0 : index
    %c0_2 = arith.constant 0 : index
    %c0_3 = arith.constant 0 : index
    %c0_4 = arith.constant 0 : index
    %0 = vector.load %arg1[%c0, %c0_0, %c0_1, %c0_2, %c0_3, %c0_4] : memref<2x1x1x18x18x1xf32, #tpu.memory_space<vmem>>, vector<2x1x1x18x16x1xf32>
    %1 = vector.shape_cast %0 : vector<2x1x1x18x16x1xf32> to vector<2x1x18x16x1xf32>
    %2 = arith.truncf %1 : vector<2x1x18x16x1xf32> to vector<2x1x18x16x1xbf16>
    %c0_5 = arith.constant 0 : index
    %c0_6 = arith.constant 0 : index
    %c0_7 = arith.constant 0 : index
    %c0_8 = arith.constant 0 : index
    %c0_9 = arith.constant 0 : index
    %3 = vector.load %arg9[%c0_5, %c0_6, %c0_7, %c0_8, %c0_9] : memref<2x1x18x16x3xbf16, #tpu.memory_space<vmem>>, vector<2x1x18x16x1xbf16>
    tpu.vector_store %arg9[%c0_5, %c0_6, %c0_7, %c0_8, %c0_9], %2 {strides = array<i32>} : memref<2x1x18x16x3xbf16, #tpu.memory_space<vmem>>, vector<2x1x18x16x1xbf16>,
    %c0_10 = arith.constant 0 : index
    %c0_11 = arith.constant 0 : index
    %c0_12 = arith.constant 0 : index
    %c0_13 = arith.constant 0 : index
    %c1 = arith.constant 1 : index
    %c0_14 = arith.constant 0 : index
    %4 = vector.load %arg1[%c0_10, %c0_11, %c0_12, %c0_13, %c1, %c0_14] : memref<2x1x1x18x18x1xf32, #tpu.memory_space<vmem>>, vector<2x1x1x18x16x1xf32>
    %5 = vector.shape_cast %4 : vector<2x1x1x18x16x1xf32> to vector<2x1x18x16x1xf32>
    %6 = arith.truncf %5 : vector<2x1x18x16x1xf32> to vector<2x1x18x16x1xbf16>
    %c0_15 = arith.constant 0 : index
    %c0_16 = arith.constant 0 : index
    %c0_17 = arith.constant 0 : index
    %c0_18 = arith.constant 0 : index
    %c1_19 = arith.constant 1 : index
    %7 = vector.load %arg9[%c0_15, %c0_16, %c0_17, %c0_18, %c1_19] : memref<2x1x18x16x3xbf16, #tpu.memory_space<vmem>>, vector<2x1x18x16x1xbf16>
    tpu.vector_store %arg9[%c0_15, %c0_16, %c0_17, %c0_18, %c1_19], %6 {strides = array<i32>} : memref<2x1x18x16x3xbf16, #tpu.memory_space<vmem>>, vector<2x1x18x16x1xbf16>,
    %c0_20 = arith.constant 0 : index
    %c0_21 = arith.constant 0 : index
    %c0_22 = arith.constant 0 : index
    %c0_23 = arith.constant 0 : index
    %c2 = arith.constant 2 : index
    %c0_24 = arith.constant 0 : index
    %8 = vector.load %arg1[%c0_20, %c0_21, %c0_22, %c0_23, %c2, %c0_24] : memref<2x1x1x18x18x1xf32, #tpu.memory_space<vmem>>, vector<2x1x1x18x16x1xf32>
    %9 = vector.shape_cast %8 : vector<2x1x1x18x16x1xf32> to vector<2x1x18x16x1xf32>
    %10 = arith.truncf %9 : vector<2x1x18x16x1xf32> to vector<2x1x18x16x1xbf16>
    %c0_25 = arith.constant 0 : index
    %c0_26 = arith.constant 0 : index
    %c0_27 = arith.constant 0 : index
    %c0_28 = arith.constant 0 : index
    %c2_29 = arith.constant 2 : index
    %11 = vector.load %arg9[%c0_25, %c0_26, %c0_27, %c0_28, %c2_29] : memref<2x1x18x16x3xbf16, #tpu.memory_space<vmem>>, vector<2x1x18x16x1xbf16>
    tpu.vector_store %arg9[%c0_25, %c0_26, %c0_27, %c0_28, %c2_29], %10 {strides = array<i32>} : memref<2x1x18x16x3xbf16, #tpu.memory_space<vmem>>, vector<2x1x18x16x1xbf16>,
    %cst = arith.constant 0.000000e+00 : f32
    %12 = vector.broadcast %cst : f32 to vector<512x4xf32>
    %c0_30 = arith.constant 0 : index
    %c0_31 = arith.constant 0 : index
    %c0_32 = arith.constant 0 : index
    %c0_33 = arith.constant 0 : index
    %c0_34 = arith.constant 0 : index
    %13 = vector.load %arg9[%c0_30, %c0_31, %c0_32, %c0_33, %c0_34] : memref<2x1x18x16x3xbf16, #tpu.memory_space<vmem>>, vector<2x1x16x16x3xbf16>
    %14 = vector.shape_cast %13 : vector<2x1x16x16x3xbf16> to vector<2x16x16x3xbf16>
    %15 = vector.shape_cast %14 : vector<2x16x16x3xbf16> to vector<512x3xbf16>
    %c0_35 = arith.constant 0 : index
    %c0_36 = arith.constant 0 : index
    %c0_37 = arith.constant 0 : index
    %16 = vector.load %arg2[%c0_35, %c0_36, %c0_37] : memref<3x3x4xbf16, #tpu.memory_space<vmem>>, vector<1x3x4xbf16>
    %17 = vector.shape_cast %16 : vector<1x3x4xbf16> to vector<3x4xbf16>
    %cst_38 = arith.constant dense<0.000000e+00> : vector<512x4xf32>
    %18 = tpu.matmul %15, %17, %cst_38 {dimension_numbers = #tpu.dot_dimension_numbers<[1], [0], [0], [1], [0, 0, 1, 1], [], []>} : vector<512x3xbf16>, vector<3x4xbf16>, vector<512x4xf32> -> vector<512x4xf32>
    %19 = arith.addf %12, %18 : vector<512x4xf32>
    %c0_39 = arith.constant 0 : index
    %c0_40 = arith.constant 0 : index
    %c1_41 = arith.constant 1 : index
    %c0_42 = arith.constant 0 : index
    %c0_43 = arith.constant 0 : index
    %20 = vector.load %arg9[%c0_39, %c0_40, %c1_41, %c0_42, %c0_43] : memref<2x1x18x16x3xbf16, #tpu.memory_space<vmem>>, vector<2x1x16x16x3xbf16>
    %21 = vector.shape_cast %20 : vector<2x1x16x16x3xbf16> to vector<2x16x16x3xbf16>
    %22 = vector.shape_cast %21 : vector<2x16x16x3xbf16> to vector<512x3xbf16>
    %c1_44 = arith.constant 1 : index
    %c0_45 = arith.constant 0 : index
    %c0_46 = arith.constant 0 : index
    %23 = vector.load %arg2[%c1_44, %c0_45, %c0_46] : memref<3x3x4xbf16, #tpu.memory_space<vmem>>, vector<1x3x4xbf16>
    %24 = vector.shape_cast %23 : vector<1x3x4xbf16> to vector<3x4xbf16>
    %cst_47 = arith.constant dense<0.000000e+00> : vector<512x4xf32>
    %25 = tpu.matmul %22, %24, %cst_47 {dimension_numbers = #tpu.dot_dimension_numbers<[1], [0], [0], [1], [0, 0, 1, 1], [], []>} : vector<512x3xbf16>, vector<3x4xbf16>, vector<512x4xf32> -> vector<512x4xf32>
    %26 = arith.addf %19, %25 : vector<512x4xf32>
    %c0_48 = arith.constant 0 : index
    %c0_49 = arith.constant 0 : index
    %c2_50 = arith.constant 2 : index
    %c0_51 = arith.constant 0 : index
    %c0_52 = arith.constant 0 : index
    %27 = vector.load %arg9[%c0_48, %c0_49, %c2_50, %c0_51, %c0_52] : memref<2x1x18x16x3xbf16, #tpu.memory_space<vmem>>, vector<2x1x16x16x3xbf16>
    %28 = vector.shape_cast %27 : vector<2x1x16x16x3xbf16> to vector<2x16x16x3xbf16>
    %29 = vector.shape_cast %28 : vector<2x16x16x3xbf16> to vector<512x3xbf16>
    %c2_53 = arith.constant 2 : index
    %c0_54 = arith.constant 0 : index
    %c0_55 = arith.constant 0 : index
    %30 = vector.load %arg2[%c2_53, %c0_54, %c0_55] : memref<3x3x4xbf16, #tpu.memory_space<vmem>>, vector<1x3x4xbf16>
    %31 = vector.shape_cast %30 : vector<1x3x4xbf16> to vector<3x4xbf16>
    %cst_56 = arith.constant dense<0.000000e+00> : vector<512x4xf32>
    %32 = tpu.matmul %29, %31, %cst_56 {dimension_numbers = #tpu.dot_dimension_numbers<[1], [0], [0], [1], [0, 0, 1, 1], [], []>} : vector<512x3xbf16>, vector<3x4xbf16>, vector<512x4xf32> -> vector<512x4xf32>
    %33 = arith.addf %26, %32 : vector<512x4xf32>
    %c0_57 = arith.constant 0 : index
    %c0_58 = arith.constant 0 : index
    %34 = vector.load %arg3[%c0_57, %c0_58] : memref<1x4xf32, #tpu.memory_space<vmem>>, vector<1x4xf32>
    %35 = vector.broadcast %34 : vector<1x4xf32> to vector<512x4xf32>
    %36 = arith.addf %33, %35 : vector<512x4xf32>
    %cst_59 = arith.constant 0.000000e+00 : f32
    %37 = vector.broadcast %cst_59 : f32 to vector<512x4xf32>
    %38 = arith.cmpf ogt, %36, %37 : vector<512x4xf32>
    %cst_60 = arith.constant 0.00999999977 : f32
    %39 = vector.broadcast %cst_60 : f32 to vector<512x4xf32>
    %40 = arith.mulf %39, %36 : vector<512x4xf32>
    %41 = arith.select %38, %36, %40 : vector<512x4xi1>, vector<512x4xf32>
    %cst_61 = arith.constant 0.000000e+00 : f32
    %42 = vector.broadcast %cst_61 : f32 to vector<2x1x18x4xf32>
    %c0_62 = arith.constant 0 : index
    %c0_63 = arith.constant 0 : index
    %c0_64 = arith.constant 0 : index
    %c0_65 = arith.constant 0 : index
    %43 = vector.load %arg10[%c0_62, %c0_63, %c0_64, %c0_65] : memref<2x18x18x4xf32, #tpu.memory_space<vmem>>, vector<2x1x18x4xf32>
    tpu.vector_store %arg10[%c0_62, %c0_63, %c0_64, %c0_65], %42 {strides = array<i32>} : memref<2x18x18x4xf32, #tpu.memory_space<vmem>>, vector<2x1x18x4xf32>,
    %c0_66 = arith.constant 0 : index
    %c17 = arith.constant 17 : index
    %c0_67 = arith.constant 0 : index
    %c0_68 = arith.constant 0 : index
    %44 = vector.load %arg10[%c0_66, %c17, %c0_67, %c0_68] : memref<2x18x18x4xf32, #tpu.memory_space<vmem>>, vector<2x1x18x4xf32>
    tpu.vector_store %arg10[%c0_66, %c17, %c0_67, %c0_68], %42 {strides = array<i32>} : memref<2x18x18x4xf32, #tpu.memory_space<vmem>>, vector<2x1x18x4xf32>,
    %cst_69 = arith.constant 0.000000e+00 : f32
    %45 = vector.broadcast %cst_69 : f32 to vector<2x18x1x4xf32>
    %c0_70 = arith.constant 0 : index
    %c0_71 = arith.constant 0 : index
    %c0_72 = arith.constant 0 : index
    %c0_73 = arith.constant 0 : index
    %46 = vector.load %arg10[%c0_70, %c0_71, %c0_72, %c0_73] : memref<2x18x18x4xf32, #tpu.memory_space<vmem>>, vector<2x18x1x4xf32>
    tpu.vector_store %arg10[%c0_70, %c0_71, %c0_72, %c0_73], %45 {strides = array<i32>} : memref<2x18x18x4xf32, #tpu.memory_space<vmem>>, vector<2x18x1x4xf32>,
    %c0_74 = arith.constant 0 : index
    %c0_75 = arith.constant 0 : index
    %c17_76 = arith.constant 17 : index
    %c0_77 = arith.constant 0 : index
    %47 = vector.load %arg10[%c0_74, %c0_75, %c17_76, %c0_77] : memref<2x18x18x4xf32, #tpu.memory_space<vmem>>, vector<2x18x1x4xf32>
    tpu.vector_store %arg10[%c0_74, %c0_75, %c17_76, %c0_77], %45 {strides = array<i32>} : memref<2x18x18x4xf32, #tpu.memory_space<vmem>>, vector<2x18x1x4xf32>,
    %48 = vector.shape_cast %41 : vector<512x4xf32> to vector<2x16x16x4xf32>
    %c0_78 = arith.constant 0 : index
    %c1_79 = arith.constant 1 : index
    %c1_80 = arith.constant 1 : index
    %c0_81 = arith.constant 0 : index
    %49 = vector.load %arg10[%c0_78, %c1_79, %c1_80, %c0_81] : memref<2x18x18x4xf32, #tpu.memory_space<vmem>>, vector<2x16x16x4xf32>
    tpu.vector_store %arg10[%c0_78, %c1_79, %c1_80, %c0_81], %48 {strides = array<i32>} : memref<2x18x18x4xf32, #tpu.memory_space<vmem>>, vector<2x16x16x4xf32>,
    %c0_82 = arith.constant 0 : index
    %c0_83 = arith.constant 0 : index
    %c0_84 = arith.constant 0 : index
    %c1_85 = arith.constant 1 : index
    %c1_86 = arith.constant 1 : index
    %c0_87 = arith.constant 0 : index
    %50 = vector.load %arg1[%c0_82, %c0_83, %c0_84, %c1_85, %c1_86, %c0_87] : memref<2x1x1x18x18x1xf32, #tpu.memory_space<vmem>>, vector<2x1x1x16x16x1xf32>
    %51 = vector.shape_cast %50 : vector<2x1x1x16x16x1xf32> to vector<2x16x16x1xf32>
    %52 = vector.shape_cast %51 : vector<2x16x16x1xf32> to vector<512x1xf32>
    %53 = arith.truncf %52 : vector<512x1xf32> to vector<512x1xbf16>
    %c0_88 = arith.constant 0 : index
    %c0_89 = arith.constant 0 : index
    %54 = vector.load %arg6[%c0_88, %c0_89] : memref<1x4xbf16, #tpu.memory_space<vmem>>, vector<1x4xbf16>
    %cst_90 = arith.constant dense<0.000000e+00> : vector<512x4xf32>
    %55 = tpu.matmul %53, %54, %cst_90 {dimension_numbers = #tpu.dot_dimension_numbers<[1], [0], [0], [1], [0, 0, 1, 1], [], []>} : vector<512x1xbf16>, vector<1x4xbf16>, vector<512x4xf32> -> vector<512x4xf32>
    %c0_91 = arith.constant 0 : index
    %c0_92 = arith.constant 0 : index
    %56 = vector.load %arg7[%c0_91, %c0_92] : memref<1x4xf32, #tpu.memory_space<vmem>>, vector<1x4xf32>
    %57 = vector.broadcast %56 : vector<1x4xf32> to vector<512x4xf32>
    %58 = arith.addf %55, %57 : vector<512x4xf32>
    %c0_93 = arith.constant 0 : index
    %c0_94 = arith.constant 0 : index
    %c0_95 = arith.constant 0 : index
    %c0_96 = arith.constant 0 : index
    %59 = vector.load %arg10[%c0_93, %c0_94, %c0_95, %c0_96] : memref<2x18x18x4xf32, #tpu.memory_space<vmem>>, vector<2x18x16x4xf32>
    %60 = arith.truncf %59 : vector<2x18x16x4xf32> to vector<2x18x16x4xbf16>
    %c0_97 = arith.constant 0 : index
    %c0_98 = arith.constant 0 : index
    %c0_99 = arith.constant 0 : index
    %c0_100 = arith.constant 0 : index
    %61 = vector.load %arg11[%c0_97, %c0_98, %c0_99, %c0_100] : memref<2x18x16x12xbf16, #tpu.memory_space<vmem>>, vector<2x18x16x4xbf16>
    tpu.vector_store %arg11[%c0_97, %c0_98, %c0_99, %c0_100], %60 {strides = array<i32>} : memref<2x18x16x12xbf16, #tpu.memory_space<vmem>>, vector<2x18x16x4xbf16>,
    %c0_101 = arith.constant 0 : index
    %c0_102 = arith.constant 0 : index
    %c1_103 = arith.constant 1 : index
    %c0_104 = arith.constant 0 : index
    %62 = vector.load %arg10[%c0_101, %c0_102, %c1_103, %c0_104] : memref<2x18x18x4xf32, #tpu.memory_space<vmem>>, vector<2x18x16x4xf32>
    %63 = arith.truncf %62 : vector<2x18x16x4xf32> to vector<2x18x16x4xbf16>
    %c0_105 = arith.constant 0 : index
    %c0_106 = arith.constant 0 : index
    %c0_107 = arith.constant 0 : index
    %c4 = arith.constant 4 : index
    %64 = vector.load %arg11[%c0_105, %c0_106, %c0_107, %c4] : memref<2x18x16x12xbf16, #tpu.memory_space<vmem>>, vector<2x18x16x4xbf16>
    tpu.vector_store %arg11[%c0_105, %c0_106, %c0_107, %c4], %63 {strides = array<i32>} : memref<2x18x16x12xbf16, #tpu.memory_space<vmem>>, vector<2x18x16x4xbf16>,
    %c0_108 = arith.constant 0 : index
    %c0_109 = arith.constant 0 : index
    %c2_110 = arith.constant 2 : index
    %c0_111 = arith.constant 0 : index
    %65 = vector.load %arg10[%c0_108, %c0_109, %c2_110, %c0_111] : memref<2x18x18x4xf32, #tpu.memory_space<vmem>>, vector<2x18x16x4xf32>
    %66 = arith.truncf %65 : vector<2x18x16x4xf32> to vector<2x18x16x4xbf16>
    %c0_112 = arith.constant 0 : index
    %c0_113 = arith.constant 0 : index
    %c0_114 = arith.constant 0 : index
    %c8 = arith.constant 8 : index
    %67 = vector.load %arg11[%c0_112, %c0_113, %c0_114, %c8] : memref<2x18x16x12xbf16, #tpu.memory_space<vmem>>, vector<2x18x16x4xbf16>
    tpu.vector_store %arg11[%c0_112, %c0_113, %c0_114, %c8], %66 {strides = array<i32>} : memref<2x18x16x12xbf16, #tpu.memory_space<vmem>>, vector<2x18x16x4xbf16>,
    %cst_115 = arith.constant 0.000000e+00 : f32
    %68 = vector.broadcast %cst_115 : f32 to vector<512x4xf32>
    %c0_116 = arith.constant 0 : index
    %c0_117 = arith.constant 0 : index
    %c0_118 = arith.constant 0 : index
    %c0_119 = arith.constant 0 : index
    %69 = vector.load %arg11[%c0_116, %c0_117, %c0_118, %c0_119] : memref<2x18x16x12xbf16, #tpu.memory_space<vmem>>, vector<2x16x16x12xbf16>
    %70 = vector.shape_cast %69 : vector<2x16x16x12xbf16> to vector<512x12xbf16>
    %c0_120 = arith.constant 0 : index
    %c0_121 = arith.constant 0 : index
    %c0_122 = arith.constant 0 : index
    %71 = vector.load %arg4[%c0_120, %c0_121, %c0_122] : memref<3x12x4xbf16, #tpu.memory_space<vmem>>, vector<1x12x4xbf16>
    %72 = vector.shape_cast %71 : vector<1x12x4xbf16> to vector<12x4xbf16>
    %cst_123 = arith.constant dense<0.000000e+00> : vector<512x4xf32>
    %73 = tpu.matmul %70, %72, %cst_123 {dimension_numbers = #tpu.dot_dimension_numbers<[1], [0], [0], [1], [0, 0, 1, 1], [], []>} : vector<512x12xbf16>, vector<12x4xbf16>, vector<512x4xf32> -> vector<512x4xf32>
    %74 = arith.addf %68, %73 : vector<512x4xf32>
    %c0_124 = arith.constant 0 : index
    %c1_125 = arith.constant 1 : index
    %c0_126 = arith.constant 0 : index
    %c0_127 = arith.constant 0 : index
    %75 = vector.load %arg11[%c0_124, %c1_125, %c0_126, %c0_127] : memref<2x18x16x12xbf16, #tpu.memory_space<vmem>>, vector<2x16x16x12xbf16>
    %76 = vector.shape_cast %75 : vector<2x16x16x12xbf16> to vector<512x12xbf16>
    %c1_128 = arith.constant 1 : index
    %c0_129 = arith.constant 0 : index
    %c0_130 = arith.constant 0 : index
    %77 = vector.load %arg4[%c1_128, %c0_129, %c0_130] : memref<3x12x4xbf16, #tpu.memory_space<vmem>>, vector<1x12x4xbf16>
    %78 = vector.shape_cast %77 : vector<1x12x4xbf16> to vector<12x4xbf16>
    %cst_131 = arith.constant dense<0.000000e+00> : vector<512x4xf32>
    %79 = tpu.matmul %76, %78, %cst_131 {dimension_numbers = #tpu.dot_dimension_numbers<[1], [0], [0], [1], [0, 0, 1, 1], [], []>} : vector<512x12xbf16>, vector<12x4xbf16>, vector<512x4xf32> -> vector<512x4xf32>
    %80 = arith.addf %74, %79 : vector<512x4xf32>
    %c0_132 = arith.constant 0 : index
    %c2_133 = arith.constant 2 : index
    %c0_134 = arith.constant 0 : index
    %c0_135 = arith.constant 0 : index
    %81 = vector.load %arg11[%c0_132, %c2_133, %c0_134, %c0_135] : memref<2x18x16x12xbf16, #tpu.memory_space<vmem>>, vector<2x16x16x12xbf16>
    %82 = vector.shape_cast %81 : vector<2x16x16x12xbf16> to vector<512x12xbf16>
    %c2_136 = arith.constant 2 : index
    %c0_137 = arith.constant 0 : index
    %c0_138 = arith.constant 0 : index
    %83 = vector.load %arg4[%c2_136, %c0_137, %c0_138] : memref<3x12x4xbf16, #tpu.memory_space<vmem>>, vector<1x12x4xbf16>
    %84 = vector.shape_cast %83 : vector<1x12x4xbf16> to vector<12x4xbf16>
    %cst_139 = arith.constant dense<0.000000e+00> : vector<512x4xf32>
    %85 = tpu.matmul %82, %84, %cst_139 {dimension_numbers = #tpu.dot_dimension_numbers<[1], [0], [0], [1], [0, 0, 1, 1], [], []>} : vector<512x12xbf16>, vector<12x4xbf16>, vector<512x4xf32> -> vector<512x4xf32>
    %86 = arith.addf %80, %85 : vector<512x4xf32>
    %c0_140 = arith.constant 0 : index
    %c0_141 = arith.constant 0 : index
    %87 = vector.load %arg5[%c0_140, %c0_141] : memref<1x4xf32, #tpu.memory_space<vmem>>, vector<1x4xf32>
    %88 = vector.broadcast %87 : vector<1x4xf32> to vector<512x4xf32>
    %89 = arith.addf %86, %88 : vector<512x4xf32>
    %90 = arith.addf %89, %58 : vector<512x4xf32>
    %cst_142 = arith.constant 0.000000e+00 : f32
    %91 = vector.broadcast %cst_142 : f32 to vector<512x4xf32>
    %92 = arith.cmpf ogt, %90, %91 : vector<512x4xf32>
    %cst_143 = arith.constant 0.00999999977 : f32
    %93 = vector.broadcast %cst_143 : f32 to vector<512x4xf32>
    %94 = arith.mulf %93, %90 : vector<512x4xf32>
    %95 = arith.select %92, %90, %94 : vector<512x4xi1>, vector<512x4xf32>
    %96 = vector.shape_cast %95 : vector<512x4xf32> to vector<2x16x16x4xf32>
    %c0_144 = arith.constant 0 : index
    %c0_145 = arith.constant 0 : index
    %c0_146 = arith.constant 0 : index
    %c0_147 = arith.constant 0 : index
    %97 = vector.load %arg8[%c0_144, %c0_145, %c0_146, %c0_147] : memref<2x16x16x4xf32, #tpu.memory_space<vmem>>, vector<2x16x16x4xf32>
    tpu.vector_store %arg8[%c0_144, %c0_145, %c0_146, %c0_147], %96 {strides = array<i32>} : memref<2x16x16x4xf32, #tpu.memory_space<vmem>>, vector<2x16x16x4xf32>,
    return
  }
  func.func @transform_0(%arg0: i32) -> (i32, i32, i32, i32, i32, i32) {
    %c0_i32 = arith.constant 0 : i32
    %c0_i32_0 = arith.constant 0 : i32
    %c0_i32_1 = arith.constant 0 : i32
    %c0_i32_2 = arith.constant 0 : i32
    %c0_i32_3 = arith.constant 0 : i32
    %c0_i32_4 = arith.constant 0 : i32
    return %arg0, %c0_i32, %c0_i32_0, %c0_i32_1, %c0_i32_2, %c0_i32_3 : i32, i32, i32, i32, i32, i32
  }
  func.func @transform_1(%arg0: i32) -> (i32, i32, i32) {
    %c0_i32 = arith.constant 0 : i32
    %c0_i32_0 = arith.constant 0 : i32
    %c0_i32_1 = arith.constant 0 : i32
    %c0_i32_2 = arith.constant 0 : i32
    return %c0_i32, %c0_i32_0, %c0_i32_1 : i32, i32, i32
  }
  func.func @transform_2(%arg0: i32) -> (i32, i32) {
    %c0_i32 = arith.constant 0 : i32
    %c0_i32_0 = arith.constant 0 : i32
    %c0_i32_1 = arith.constant 0 : i32
    return %c0_i32, %c0_i32_0 : i32, i32
  }
  func.func @transform_3(%arg0: i32) -> (i32, i32, i32) {
    %c0_i32 = arith.constant 0 : i32
    %c0_i32_0 = arith.constant 0 : i32
    %c0_i32_1 = arith.constant 0 : i32
    %c0_i32_2 = arith.constant 0 : i32
    return %c0_i32, %c0_i32_0, %c0_i32_1 : i32, i32, i32
  }
  func.func @transform_4(%arg0: i32) -> (i32, i32) {
    %c0_i32 = arith.constant 0 : i32
    %c0_i32_0 = arith.constant 0 : i32
    %c0_i32_1 = arith.constant 0 : i32
    return %c0_i32, %c0_i32_0 : i32, i32
  }
  func.func @transform_5(%arg0: i32) -> (i32, i32) {
    %c0_i32 = arith.constant 0 : i32
    %c0_i32_0 = arith.constant 0 : i32
    %c0_i32_1 = arith.constant 0 : i32
    return %c0_i32, %c0_i32_0 : i32, i32
  }
  func.func @transform_6(%arg0: i32) -> (i32, i32) {
    %c0_i32 = arith.constant 0 : i32
    %c0_i32_0 = arith.constant 0 : i32
    %c0_i32_1 = arith.constant 0 : i32
    return %c0_i32, %c0_i32_0 : i32, i32
  }
  func.func @transform_7(%arg0: i32) -> (i32, i32, i32, i32) {
    %c0_i32 = arith.constant 0 : i32
    %c0_i32_0 = arith.constant 0 : i32
    %c0_i32_1 = arith.constant 0 : i32
    %c0_i32_2 = arith.constant 0 : i32
    return %arg0, %c0_i32, %c0_i32_0, %c0_i32_1 : i32, i32, i32, i32
  }
}

</mosaic_0001>

<llo_original>
// kernel: tpu_custom_call.1
$region0: #{tpu_custom_call.1}
  #allocation0 [shape = 'u32[]', space=smem, size = 0x4, offset = 0x4, fixed_abs, tag = 'smem constant byte address 0x4 - core index']
  #allocation1 [shape = 'u32[144,128]{1,0:T(1,128)}', space=vmem, size = 0x12000, scoped, tag = 'internal scratch']
  #allocation2 [shape = 'bf16[2,1,18,16,3]{4,3,2,1,0:T(16,128)(2,1)}', space=vmem, size = 0x24000, scoped, tag = 'scratch operand']
  #allocation3 [shape = 'f32[2,18,18,4]{3,2,1,0:T(8,128)}', space=vmem, size = 0x6c000, scoped, tag = 'scratch operand']
  #allocation4 [shape = 'bf16[2,18,16,12]{3,2,1,0:T(16,128)(2,1)}', space=vmem, size = 0x24000, scoped, tag = 'scratch operand']
  %s0 = inlined_call_operand.vmem [shape: f32[16,1,1,18,18,1], index: 0, kind: input, shape index: {}]
  %s1 = inlined_call_operand.vmem [shape: bf16[3,3,4], index: 1, kind: input, shape index: {}]
  %s2 = inlined_call_operand.vmem [shape: f32[1,4], index: 2, kind: input, shape index: {}]
  %s3 = inlined_call_operand.vmem [shape: bf16[3,12,4], index: 3, kind: input, shape index: {}]
  %s4 = inlined_call_operand.vmem [shape: f32[1,4], index: 4, kind: input, shape index: {}]
  %s5 = inlined_call_operand.vmem [shape: bf16[1,4], index: 5, kind: input, shape index: {}]
  %s6 = inlined_call_operand.vmem [shape: f32[1,4], index: 6, kind: input, shape index: {}]
  %s7 = inlined_call_operand.vmem [shape: f32[16,16,16,4], index: 7, kind: output, shape index: {}]
  %s8 = sld [smem:[#allocation0]]
  $region61: #{tpu_custom_call.1} parent=0
    _
  %s10 = ssub.s32 1, %s8
  %s11 = scalar_select 0, %s10, %s8
  loop: start=0, step=1, limit=10
  $region2: #{tpu_custom_call.1} parent=0 // loop_pre_header
    _
  $region3: #{tpu_custom_call.1} parent=0 // loop_header
    %s13 = sphi 0, %s17
    %p14 = scmp.ge.s32.totalorder %s13, 10
    %s23 = sphi 0, %s25
    %s26 = sphi 0, %s23
    %s27 = sphi 0, %s26
    %s43 = sphi 0, %s27
    %s47 = sphi 0, %s47
    %s49 = sphi 0, %s47
    %s50 = sphi 0, %s49
    %s64 = sphi 0, %s50
    %s68 = sphi 0, %s68
    %s70 = sphi 0, %s68
    %s71 = sphi 0, %s70
    %s85 = sphi 0, %s71
    %s89 = sphi 0, %s89
    %s91 = sphi 0, %s89
    %s92 = sphi 0, %s91
    %s106 = sphi 0, %s92
    %s110 = sphi 0, %s110
    %s112 = sphi 0, %s110
    %s113 = sphi 0, %s112
    %s127 = sphi 0, %s113
    %s131 = sphi 0, %s131
    %s133 = sphi 0, %s131
    %s134 = sphi 0, %s133
    %s148 = sphi 0, %s134
    %s152 = sphi 0, %s152
    %s154 = sphi 0, %s152
    %s155 = sphi 0, %s154
    %s169 = sphi 0, %s155
    %s175 = sphi 0, %s177
    %s178 = sphi 0, %s175
    %s179 = sphi 0, %s178
    %s195 = sphi 0, %s179
  $region4: #{tpu_custom_call.1} parent=0 // loop_header_branch
    %16 = sbr.rel (%p14) target = $region8
  $region5: #{tpu_custom_call.1} parent=0 // loop_body
    %s18 = ssub.s32 %s13, 1
    %s19 = ssub.s32 %s13, 2
    %s20 = sadd.s32 %s13, 1
    %s21 = ssub.s32 %s13, %s20
    %p22 = scmp.eq.s32.totalorder %s21, 0
    %s24 = sadd.s32 %s23, 1
    %s25 = scalar_select %p22, %s23, %s24
    %p28 = pneg %p22
    %p29 = scmp.eq.s32.totalorder %s13, 7
    %p30 = por %p28, %p29
    %p31 = scmp.ne.s32.totalorder %s23, %s26
    %p32 = scmp.eq.s32.totalorder %s13, 0
    %p33 = por %p31, %p32
    %p34 = scmp.ne.s32.totalorder %s23, %s26
    %p35 = scmp.eq.s32.totalorder %s18, 7
    %p36 = por %p34, %p35
    %p37 = scmp.ne.s32.totalorder %s26, %s27
    %p38 = scmp.eq.s32.totalorder %s18, 0
    %p39 = por %p37, %p38
    %p40 = scmp.ne.s32.totalorder %s26, %s27
    %p41 = scmp.eq.s32.totalorder %s19, 7
    %p42 = por %p40, %p41
    %p44 = scmp.ne.s32.totalorder %s27, %s43
    %p45 = scmp.eq.s32.totalorder %s19, 0
    %p46 = por %p44, %p45
    %s48 = sadd.s32 %s47, 1
    %p51 = scmp.eq.s32.totalorder %s13, 7
    %p52 = scmp.ne.s32.totalorder %s47, %s49
    %p53 = scmp.eq.s32.totalorder %s13, 0
    %p54 = por %p52, %p53
    %p55 = scmp.ne.s32.totalorder %s47, %s49
    %p56 = scmp.eq.s32.totalorder %s18, 7
    %p57 = por %p55, %p56
    %p58 = scmp.ne.s32.totalorder %s49, %s50
    %p59 = scmp.eq.s32.totalorder %s18, 0
    %p60 = por %p58, %p59
    %p61 = scmp.ne.s32.totalorder %s49, %s50
    %p62 = scmp.eq.s32.totalorder %s19, 7
    %p63 = por %p61, %p62
    %p65 = scmp.ne.s32.totalorder %s50, %s64
    %p66 = scmp.eq.s32.totalorder %s19, 0
    %p67 = por %p65, %p66
    %s69 = sadd.s32 %s68, 1
    %p72 = scmp.eq.s32.totalorder %s13, 7
    %p73 = scmp.ne.s32.totalorder %s68, %s70
    %p74 = scmp.eq.s32.totalorder %s13, 0
    %p75 = por %p73, %p74
    %p76 = scmp.ne.s32.totalorder %s68, %s70
    %p77 = scmp.eq.s32.totalorder %s18, 7
    %p78 = por %p76, %p77
    %p79 = scmp.ne.s32.totalorder %s70, %s71
    %p80 = scmp.eq.s32.totalorder %s18, 0
    %p81 = por %p79, %p80
    %p82 = scmp.ne.s32.totalorder %s70, %s71
    %p83 = scmp.eq.s32.totalorder %s19, 7
    %p84 = por %p82, %p83
    %p86 = scmp.ne.s32.totalorder %s71, %s85
    %p87 = scmp.eq.s32.totalorder %s19, 0
    %p88 = por %p86, %p87
    %s90 = sadd.s32 %s89, 1
    %p93 = scmp.eq.s32.totalorder %s13, 7
    %p94 = scmp.ne.s32.totalorder %s89, %s91
    %p95 = scmp.eq.s32.totalorder %s13, 0
    %p96 = por %p94, %p95
    %p97 = scmp.ne.s32.totalorder %s89, %s91
    %p98 = scmp.eq.s32.totalorder %s18, 7
    %p99 = por %p97, %p98
    %p100 = scmp.ne.s32.totalorder %s91, %s92
    %p101 = scmp.eq.s32.totalorder %s18, 0
    %p102 = por %p100, %p101
    %p103 = scmp.ne.s32.totalorder %s91, %s92
    %p104 = scmp.eq.s32.totalorder %s19, 7
    %p105 = por %p103, %p104
    %p107 = scmp.ne.s32.totalorder %s92, %s106
    %p108 = scmp.eq.s32.totalorder %s19, 0
    %p109 = por %p107, %p108
    %s111 = sadd.s32 %s110, 1
    %p114 = scmp.eq.s32.totalorder %s13, 7
    %p115 = scmp.ne.s32.totalorder %s110, %s112
    %p116 = scmp.eq.s32.totalorder %s13, 0
    %p117 = por %p115, %p116
    %p118 = scmp.ne.s32.totalorder %s110, %s112
    %p119 = scmp.eq.s32.totalorder %s18, 7
    %p120 = por %p118, %p119
    %p121 = scmp.ne.s32.totalorder %s112, %s113
    %p122 = scmp.eq.s32.totalorder %s18, 0
    %p123 = por %p121, %p122
    %p124 = scmp.ne.s32.totalorder %s112, %s113
    %p125 = scmp.eq.s32.totalorder %s19, 7
    %p126 = por %p124, %p125
    %p128 = scmp.ne.s32.totalorder %s113, %s127
    %p129 = scmp.eq.s32.totalorder %s19, 0
    %p130 = por %p128, %p129
    %s132 = sadd.s32 %s131, 1
    %p135 = scmp.eq.s32.totalorder %s13, 7
    %p136 = scmp.ne.s32.totalorder %s131, %s133
    %p137 = scmp.eq.s32.totalorder %s13, 0
    %p138 = por %p136, %p137
    %p139 = scmp.ne.s32.totalorder %s131, %s133
    %p140 = scmp.eq.s32.totalorder %s18, 7
    %p141 = por %p139, %p140
    %p142 = scmp.ne.s32.totalorder %s133, %s134
    %p143 = scmp.eq.s32.totalorder %s18, 0
    %p144 = por %p142, %p143
    %p145 = scmp.ne.s32.totalorder %s133, %s134
    %p146 = scmp.eq.s32.totalorder %s19, 7
    %p147 = por %p145, %p146
    %p149 = scmp.ne.s32.totalorder %s134, %s148
    %p150 = scmp.eq.s32.totalorder %s19, 0
    %p151 = por %p149, %p150
    %s153 = sadd.s32 %s152, 1
    %p156 = scmp.eq.s32.totalorder %s13, 7
    %p157 = scmp.ne.s32.totalorder %s152, %s154
    %p158 = scmp.eq.s32.totalorder %s13, 0
    %p159 = por %p157, %p158
    %p160 = scmp.ne.s32.totalorder %s152, %s154
    %p161 = scmp.eq.s32.totalorder %s18, 7
    %p162 = por %p160, %p161
    %p163 = scmp.ne.s32.totalorder %s154, %s155
    %p164 = scmp.eq.s32.totalorder %s18, 0
    %p165 = por %p163, %p164
    %p166 = scmp.ne.s32.totalorder %s154, %s155
    %p167 = scmp.eq.s32.totalorder %s19, 7
    %p168 = por %p166, %p167
    %p170 = scmp.ne.s32.totalorder %s155, %s169
    %p171 = scmp.eq.s32.totalorder %s19, 0
    %p172 = por %p170, %p171
    %s173 = ssub.s32 %s13, %s20
    %p174 = scmp.eq.s32.totalorder %s173, 0
    %s176 = sadd.s32 %s175, 1
    %s177 = scalar_select %p174, %s175, %s176
    %p180 = pneg %p174
    %p181 = scmp.eq.s32.totalorder %s13, 7
    %p182 = por %p180, %p181
    %p183 = scmp.ne.s32.totalorder %s175, %s178
    %p184 = scmp.eq.s32.totalorder %s13, 0
    %p185 = por %p183, %p184
    %p186 = scmp.ne.s32.totalorder %s175, %s178
    %p187 = scmp.eq.s32.totalorder %s18, 7
    %p188 = por %p186, %p187
    %p189 = scmp.ne.s32.totalorder %s178, %s179
    %p190 = scmp.eq.s32.totalorder %s18, 0
    %p191 = por %p189, %p190
    %p192 = scmp.ne.s32.totalorder %s178, %s179
    %p193 = scmp.eq.s32.totalorder %s19, 7
    %p194 = por %p192, %p193
    %p196 = scmp.ne.s32.totalorder %s179, %s195
    %p197 = scmp.eq.s32.totalorder %s19, 0
    %p198 = por %p196, %p197
    %p199 = scmp.le.s32.totalorder 1, %s13
    %p200 = scmp.lt.s32.totalorder %s13, 9
    %p201 = pnand %p199, %p200
    %p202 = pneg %p201
    // Predicated region
    $region9: #{tpu_custom_call.1} parent=5 // pred_check
      _
    $region10: #{tpu_custom_call.1} parent=5 // pred_check_branch
      %204 = sbr.rel (%p201) target = $region12
    $region11: #{tpu_custom_call.1} parent=5 // pred_region
      %s205 = ssub.s32 %s13, 1
      // Predicated region
      $region13: #{tpu_custom_call.1} parent=11 // pred_check
        %p206 = pneg %p60
      $region14: #{tpu_custom_call.1} parent=11 // pred_check_branch
        %208 = sbr.rel (%p206) target = $region16
      $region15: #{tpu_custom_call.1} parent=11 // pred_region
        _
      $region16: #{tpu_custom_call.1} parent=11 // pred_fallthru
        _
      // Predicated region
      $region17: #{tpu_custom_call.1} parent=11 // pred_check
        %p209 = pneg %p81
      $region18: #{tpu_custom_call.1} parent=11 // pred_check_branch
        %211 = sbr.rel (%p209) target = $region20
      $region19: #{tpu_custom_call.1} parent=11 // pred_region
        _
      $region20: #{tpu_custom_call.1} parent=11 // pred_fallthru
        _
      // Predicated region
      $region21: #{tpu_custom_call.1} parent=11 // pred_check
        %p212 = pneg %p102
      $region22: #{tpu_custom_call.1} parent=11 // pred_check_branch
        %214 = sbr.rel (%p212) target = $region24
      $region23: #{tpu_custom_call.1} parent=11 // pred_region
        _
      $region24: #{tpu_custom_call.1} parent=11 // pred_fallthru
        _
      // Predicated region
      $region25: #{tpu_custom_call.1} parent=11 // pred_check
        %p215 = pneg %p123
      $region26: #{tpu_custom_call.1} parent=11 // pred_check_branch
        %217 = sbr.rel (%p215) target = $region28
      $region27: #{tpu_custom_call.1} parent=11 // pred_region
        _
      $region28: #{tpu_custom_call.1} parent=11 // pred_fallthru
        _
      // Predicated region
      $region29: #{tpu_custom_call.1} parent=11 // pred_check
        %p218 = pneg %p144
      $region30: #{tpu_custom_call.1} parent=11 // pred_check_branch
        %220 = sbr.rel (%p218) target = $region32
      $region31: #{tpu_custom_call.1} parent=11 // pred_region
        _
      $region32: #{tpu_custom_call.1} parent=11 // pred_fallthru
        _
      // Predicated region
      $region33: #{tpu_custom_call.1} parent=11 // pred_check
        %p221 = pneg %p165
      $region34: #{tpu_custom_call.1} parent=11 // pred_check_branch
        %223 = sbr.rel (%p221) target = $region36
      $region35: #{tpu_custom_call.1} parent=11 // pred_region
        _
      $region36: #{tpu_custom_call.1} parent=11 // pred_fallthru
        _
    $region12: #{tpu_custom_call.1} parent=5 // pred_fallthru
      _
    %p224 = scmp.lt.s32.totalorder %s13, 8
    // Predicated region
    $region37: #{tpu_custom_call.1} parent=5 // pred_check
      %p225 = pneg %p224
    $region38: #{tpu_custom_call.1} parent=5 // pred_check_branch
      %227 = sbr.rel (%p225) target = $region40
    $region39: #{tpu_custom_call.1} parent=5 // pred_region
      // Predicated region
      $region41: #{tpu_custom_call.1} parent=39 // pred_check
        %p228 = pneg %p33
      $region42: #{tpu_custom_call.1} parent=39 // pred_check_branch
        %230 = sbr.rel (%p228) target = $region44
      $region43: #{tpu_custom_call.1} parent=39 // pred_region
        %s231 = smul.u32 2, %s13
        %p232 = scmp.lt.s32.totalorder %s231, 15
        %s233 = scalar_select %p232, %s231, 15
        %s234 = smul.addr %s233, 54
        %s235 = smul.addr %s234, 8
        %s236 = scalar_lea.vmem %s0, %s235
        %s237 = smul.u32 2, %s13
      $region44: #{tpu_custom_call.1} parent=39 // pred_fallthru
        _
    $region40: #{tpu_custom_call.1} parent=5 // pred_fallthru
      _
    %p238 = scmp.le.s32.totalorder 1, %s13
    %p239 = scmp.lt.s32.totalorder %s13, 9
    %p240 = pnand %p238, %p239
    %p241 = pneg %p240
    // Predicated region
    $region45: #{tpu_custom_call.1} parent=5 // pred_check
      _
    $region46: #{tpu_custom_call.1} parent=5 // pred_check_branch
      %243 = sbr.rel (%p240) target = $region48
    $region47: #{tpu_custom_call.1} parent=5 // pred_region
      %s244 = ssub.s32 %s13, 1
      %s245 = smul.u32 2, %s18
      %p246 = scmp.lt.s32.totalorder %s245, 15
      %s247 = scalar_select %p246, %s245, 15
      %s248 = smul.addr %s247, 54
      %s249 = smul.addr %s248, 8
      %s250 = scalar_lea.vmem %s0, %s249
      %p251 = pneg %p39
      %p252 = pneg %p36
      %p253 = pneg %p60
      %p254 = pneg %p57
      %p255 = pneg %p81
      %p256 = pneg %p78
      %p257 = pneg %p102
      %p258 = pneg %p99
      %p259 = pneg %p123
      %p260 = pneg %p120
      %p261 = pneg %p144
      %p262 = pneg %p141
      %p263 = pneg %p165
      %p264 = pneg %p162
      %p265 = pneg %p191
      %p266 = pneg %p188
      %s267 = smul.u32 2, %s18
      %p268 = scmp.lt.s32.totalorder %s267, 15
      %s269 = scalar_select %p268, %s267, 15
      %s270 = smul.addr %s269, 32
      %s271 = smul.addr %s270, 8
      %s272 = scalar_lea.vmem %s7, %s271
      %s273 = smul.u32 2, %s18
      %p274 = scmp.lt.s32.totalorder %s273, 15
      %s275 = scalar_select %p274, %s273, 15
      %s276 = smul.addr %s275, 54
      %s277 = smul.addr %s276, 8
      %s278 = scalar_lea.vmem %s0, %s277
      %s279 = smul.u32 2, %s18
      %s280 = smul.u32 2, %s18
      %p281 = scmp.lt.s32.totalorder %s280, 15
      %s282 = scalar_select %p281, %s280, 15
      %s283 = smul.addr %s282, 32
      %s284 = smul.addr %s283, 8
      %s285 = scalar_lea.vmem %s7, %s284
      %s286 = smul.u32 2, %s18
      %v288 = vld [vmem:[%s278] sm:$0xff]
      %v289 = vld [vmem:[%s278 + $0x8] sm:$0xff]
      %v290 = vld [vmem:[%s278 + $0x18] sm:$0xff]
      %v291 = vld [vmem:[%s278 + $0x20] sm:$0xff]
      %v292 = vld [vmem:[%s278 + $0x30] sm:$0xff]
      %v293 = vld [vmem:[%s278 + $0x38] sm:$0xff]
      %v294 = vld [vmem:[%s278 + $0x48] sm:$0xff]
      %v295 = vld [vmem:[%s278 + $0x50] sm:$0xff]
      %v296 = vld [vmem:[%s278 + $0x60] sm:$0xff]
      %v297 = vld [vmem:[%s278 + $0x68] sm:$0xff]
      %v298 = vld [vmem:[%s278 + $0x78] sm:$0xff]
      %v299 = vld [vmem:[%s278 + $0x80] sm:$0xff]
      %v300 = vld [vmem:[%s278 + $0x90] sm:$0xff]
      %v301 = vld [vmem:[%s278 + $0x98] sm:$0xff]
      %v302 = vld [vmem:[%s278 + $0xa8] sm:$0xff]
      %v303 = vld [vmem:[%s278 + $0xb0] sm:$0xff]
      %v304 = vld [vmem:[%s278 + $0xc0] sm:$0xff]
      %v305 = vld [vmem:[%s278 + $0xc8] sm:$0xff]
      %v306 = vld [vmem:[%s278 + $0xd8] sm:$0xff]
      %v307 = vld [vmem:[%s278 + $0xe0] sm:$0xff]
      %v308 = vld [vmem:[%s278 + $0xf0] sm:$0xff]
      %v309 = vld [vmem:[%s278 + $0xf8] sm:$0xff]
      %v310 = vld [vmem:[%s278 + $0x108] sm:$0xff]
      %v311 = vld [vmem:[%s278 + $0x110] sm:$0xff]
      %v312 = vld [vmem:[%s278 + $0x120] sm:$0xff]
      %v313 = vld [vmem:[%s278 + $0x128] sm:$0xff]
      %v314 = vld [vmem:[%s278 + $0x138] sm:$0xff]
      %v315 = vld [vmem:[%s278 + $0x140] sm:$0xff]
      %v316 = vld [vmem:[%s278 + $0x150] sm:$0xff]
      %v317 = vld [vmem:[%s278 + $0x158] sm:$0xff]
      %v318 = vld [vmem:[%s278 + $0x168] sm:$0xff]
      %v319 = vld [vmem:[%s278 + $0x170] sm:$0xff]
      %v320 = vld [vmem:[%s278 + $0x180] sm:$0xff]
      %v321 = vld [vmem:[%s278 + $0x188] sm:$0xff]
      %v322 = vld [vmem:[%s278 + $0x198] sm:$0xff]
      %v323 = vld [vmem:[%s278 + $0x1a0] sm:$0xff]
      %v324 = vld [vmem:[%s278 + $0x1b0] sm:$0xff]
      %v325 = vld [vmem:[%s278 + $0x1b8] sm:$0xff]
      %v326 = vld [vmem:[%s278 + $0x1c8] sm:$0xff]
      %v327 = vld [vmem:[%s278 + $0x1d0] sm:$0xff]
      %v328 = vld [vmem:[%s278 + $0x1e0] sm:$0xff]
      %v329 = vld [vmem:[%s278 + $0x1e8] sm:$0xff]
      %v330 = vld [vmem:[%s278 + $0x1f8] sm:$0xff]
      %v331 = vld [vmem:[%s278 + $0x200] sm:$0xff]
      %v332 = vld [vmem:[%s278 + $0x210] sm:$0xff]
      %v333 = vld [vmem:[%s278 + $0x218] sm:$0xff]
      %v334 = vld [vmem:[%s278 + $0x228] sm:$0xff]
      %v335 = vld [vmem:[%s278 + $0x230] sm:$0xff]
      %v336 = vld [vmem:[%s278 + $0x240] sm:$0xff]
      %v337 = vld [vmem:[%s278 + $0x248] sm:$0xff]
      %v338 = vld [vmem:[%s278 + $0x258] sm:$0xff]
      %v339 = vld [vmem:[%s278 + $0x260] sm:$0xff]
      %v340 = vld [vmem:[%s278 + $0x270] sm:$0xff]
      %v341 = vld [vmem:[%s278 + $0x278] sm:$0xff]
      %v342 = vld [vmem:[%s278 + $0x288] sm:$0xff]
      %v343 = vld [vmem:[%s278 + $0x290] sm:$0xff]
      %v344 = vld [vmem:[%s278 + $0x2a0] sm:$0xff]
      %v345 = vld [vmem:[%s278 + $0x2a8] sm:$0xff]
      %v346 = vld [vmem:[%s278 + $0x2b8] sm:$0xff]
      %v347 = vld [vmem:[%s278 + $0x2c0] sm:$0xff]
      %v348 = vld [vmem:[%s278 + $0x2d0] sm:$0xff]
      %v349 = vld [vmem:[%s278 + $0x2d8] sm:$0xff]
      %v350 = vld [vmem:[%s278 + $0x2e8] sm:$0xff]
      %v351 = vld [vmem:[%s278 + $0x2f0] sm:$0xff]
      %v352 = vld [vmem:[%s278 + $0x300] sm:$0xff]
      %v353 = vld [vmem:[%s278 + $0x308] sm:$0xff]
      %v354 = vld [vmem:[%s278 + $0x318] sm:$0xff]
      %v355 = vld [vmem:[%s278 + $0x320] sm:$0xff]
      %v356 = vld [vmem:[%s278 + $0x330] sm:$0xff]
      %v357 = vld [vmem:[%s278 + $0x338] sm:$0xff]
      %v358 = vld [vmem:[%s278 + $0x348] sm:$0xff]
      %v359 = vld [vmem:[%s278 + $0x350] sm:$0xff]
      %v360 = vpack.c.bf16 %v289, %v288
      %v361 = vpack.c.bf16 %v291, %v290
      %v362 = vpack.c.bf16 %v293, %v292
      %v363 = vpack.c.bf16 %v295, %v294
      %v364 = vpack.c.bf16 %v297, %v296
      %v365 = vpack.c.bf16 %v299, %v298
      %v366 = vpack.c.bf16 %v301, %v300
      %v367 = vpack.c.bf16 %v303, %v302
      %v368 = vpack.c.bf16 %v305, %v304
      %v369 = vpack.c.bf16 %v307, %v306
      %v370 = vpack.c.bf16 %v309, %v308
      %v371 = vpack.c.bf16 %v311, %v310
      %v372 = vpack.c.bf16 %v313, %v312
      %v373 = vpack.c.bf16 %v315, %v314
      %v374 = vpack.c.bf16 %v317, %v316
      %v375 = vpack.c.bf16 %v319, %v318
      %v376 = vpack.c.bf16 %v321, %v320
      %v377 = vpack.c.bf16 %v323, %v322
      %v378 = vpack.c.bf16 %v325, %v324
      %v379 = vpack.c.bf16 %v327, %v326
      %v380 = vpack.c.bf16 %v329, %v328
      %v381 = vpack.c.bf16 %v331, %v330
      %v382 = vpack.c.bf16 %v333, %v332
      %v383 = vpack.c.bf16 %v335, %v334
      %v384 = vpack.c.bf16 %v337, %v336
      %v385 = vpack.c.bf16 %v339, %v338
      %v386 = vpack.c.bf16 %v341, %v340
      %v387 = vpack.c.bf16 %v343, %v342
      %v388 = vpack.c.bf16 %v345, %v344
      %v389 = vpack.c.bf16 %v347, %v346
      %v390 = vpack.c.bf16 %v349, %v348
      %v391 = vpack.c.bf16 %v351, %v350
      %v392 = vpack.c.bf16 %v353, %v352
      %v393 = vpack.c.bf16 %v355, %v354
      %v394 = vpack.c.bf16 %v357, %v356
      %v395 = vpack.c.bf16 %v359, %v358
      %vm396 = vcmask 7168
      %397 = vst.msk [vmem:[#allocation2] sm:$0xff] %vm396, %v360
      %398 = vst.msk [vmem:[#allocation2 + $0x8] sm:$0xff] %vm396, %v361
      %399 = vst.msk [vmem:[#allocation2 + $0x10] sm:$0xff] %vm396, %v362
      %400 = vst.msk [vmem:[#allocation2 + $0x18] sm:$0xff] %vm396, %v363
      %401 = vst.msk [vmem:[#allocation2 + $0x20] sm:$0xff] %vm396, %v364
      %402 = vst.msk [vmem:[#allocation2 + $0x28] sm:$0xff] %vm396, %v365
      %403 = vst.msk [vmem:[#allocation2 + $0x30] sm:$0xff] %vm396, %v366
      %404 = vst.msk [vmem:[#allocation2 + $0x38] sm:$0xff] %vm396, %v367
      %405 = vst.msk [vmem:[#allocation2 + $0x40] sm:$0xff] %vm396, %v368
      %406 = vst.msk [vmem:[#allocation2 + $0x48] sm:$0xff] %vm396, %v369
      %407 = vst.msk [vmem:[#allocation2 + $0x50] sm:$0xff] %vm396, %v370
      %408 = vst.msk [vmem:[#allocation2 + $0x58] sm:$0xff] %vm396, %v371
      %409 = vst.msk [vmem:[#allocation2 + $0x60] sm:$0xff] %vm396, %v372
      %410 = vst.msk [vmem:[#allocation2 + $0x68] sm:$0xff] %vm396, %v373
      %411 = vst.msk [vmem:[#allocation2 + $0x70] sm:$0xff] %vm396, %v374
      %412 = vst.msk [vmem:[#allocation2 + $0x78] sm:$0xff] %vm396, %v375
      %413 = vst.msk [vmem:[#allocation2 + $0x80] sm:$0xff] %vm396, %v376
      %414 = vst.msk [vmem:[#allocation2 + $0x88] sm:$0xff] %vm396, %v377
      %415 = vst.msk [vmem:[#allocation2 + $0x90] sm:$0xff] %vm396, %v378
      %416 = vst.msk [vmem:[#allocation2 + $0x98] sm:$0xff] %vm396, %v379
      %417 = vst.msk [vmem:[#allocation2 + $0xa0] sm:$0xff] %vm396, %v380
      %418 = vst.msk [vmem:[#allocation2 + $0xa8] sm:$0xff] %vm396, %v381
      %419 = vst.msk [vmem:[#allocation2 + $0xb0] sm:$0xff] %vm396, %v382
      %420 = vst.msk [vmem:[#allocation2 + $0xb8] sm:$0xff] %vm396, %v383
      %421 = vst.msk [vmem:[#allocation2 + $0xc0] sm:$0xff] %vm396, %v384
      %422 = vst.msk [vmem:[#allocation2 + $0xc8] sm:$0xff] %vm396, %v385
      %423 = vst.msk [vmem:[#allocation2 + $0xd0] sm:$0xff] %vm396, %v386
      %424 = vst.msk [vmem:[#allocation2 + $0xd8] sm:$0xff] %vm396, %v387
      %425 = vst.msk [vmem:[#allocation2 + $0xe0] sm:$0xff] %vm396, %v388
      %426 = vst.msk [vmem:[#allocation2 + $0xe8] sm:$0xff] %vm396, %v389
      %427 = vst.msk [vmem:[#allocation2 + $0xf0] sm:$0xff] %vm396, %v390
      %428 = vst.msk [vmem:[#allocation2 + $0xf8] sm:$0xff] %vm396, %v391
      %429 = vst.msk [vmem:[#allocation2 + $0x100] sm:$0xff] %vm396, %v392
      %430 = vst.msk [vmem:[#allocation2 + $0x108] sm:$0xff] %vm396, %v393
      %431 = vst.msk [vmem:[#allocation2 + $0x110] sm:$0xff] %vm396, %v394
      %432 = vst.msk [vmem:[#allocation2 + $0x118] sm:$0xff] %vm396, %v395
      %v433 = vld [vmem:[%s278 + $0x1] sm:$0xff]
      %v434 = vld [vmem:[%s278 + $0x9] sm:$0xff]
      %v435 = vld [vmem:[%s278 + $0x19] sm:$0xff]
      %v436 = vld [vmem:[%s278 + $0x21] sm:$0xff]
      %v437 = vld [vmem:[%s278 + $0x31] sm:$0xff]
      %v438 = vld [vmem:[%s278 + $0x39] sm:$0xff]
      %v439 = vld [vmem:[%s278 + $0x49] sm:$0xff]
      %v440 = vld [vmem:[%s278 + $0x51] sm:$0xff]
      %v441 = vld [vmem:[%s278 + $0x61] sm:$0xff]
      %v442 = vld [vmem:[%s278 + $0x69] sm:$0xff]
      %v443 = vld [vmem:[%s278 + $0x79] sm:$0xff]
      %v444 = vld [vmem:[%s278 + $0x81] sm:$0xff]
      %v445 = vld [vmem:[%s278 + $0x91] sm:$0xff]
      %v446 = vld [vmem:[%s278 + $0x99] sm:$0xff]
      %v447 = vld [vmem:[%s278 + $0xa9] sm:$0xff]
      %v448 = vld [vmem:[%s278 + $0xb1] sm:$0xff]
      %v449 = vld [vmem:[%s278 + $0xc1] sm:$0xff]
      %v450 = vld [vmem:[%s278 + $0xc9] sm:$0xff]
      %v451 = vld [vmem:[%s278 + $0xd9] sm:$0xff]
      %v452 = vld [vmem:[%s278 + $0xe1] sm:$0xff]
      %v453 = vld [vmem:[%s278 + $0xf1] sm:$0xff]
      %v454 = vld [vmem:[%s278 + $0xf9] sm:$0xff]
      %v455 = vld [vmem:[%s278 + $0x109] sm:$0xff]
      %v456 = vld [vmem:[%s278 + $0x111] sm:$0xff]
      %v457 = vld [vmem:[%s278 + $0x121] sm:$0xff]
      %v458 = vld [vmem:[%s278 + $0x129] sm:$0xff]
      %v459 = vld [vmem:[%s278 + $0x139] sm:$0xff]
      %v460 = vld [vmem:[%s278 + $0x141] sm:$0xff]
      %v461 = vld [vmem:[%s278 + $0x151] sm:$0xff]
      %v462 = vld [vmem:[%s278 + $0x159] sm:$0xff]
      %v463 = vld [vmem:[%s278 + $0x169] sm:$0xff]
      %v464 = vld [vmem:[%s278 + $0x171] sm:$0xff]
      %v465 = vld [vmem:[%s278 + $0x181] sm:$0xff]
      %v466 = vld [vmem:[%s278 + $0x189] sm:$0xff]
      %v467 = vld [vmem:[%s278 + $0x199] sm:$0xff]
      %v468 = vld [vmem:[%s278 + $0x1a1] sm:$0xff]
      %v469 = vld [vmem:[%s278 + $0x1b1] sm:$0xff]
      %v470 = vld [vmem:[%s278 + $0x1b9] sm:$0xff]
      %v471 = vld [vmem:[%s278 + $0x1c9] sm:$0xff]
      %v472 = vld [vmem:[%s278 + $0x1d1] sm:$0xff]
      %v473 = vld [vmem:[%s278 + $0x1e1] sm:$0xff]
      %v474 = vld [vmem:[%s278 + $0x1e9] sm:$0xff]
      %v475 = vld [vmem:[%s278 + $0x1f9] sm:$0xff]
      %v476 = vld [vmem:[%s278 + $0x201] sm:$0xff]
      %v477 = vld [vmem:[%s278 + $0x211] sm:$0xff]
      %v478 = vld [vmem:[%s278 + $0x219] sm:$0xff]
      %v479 = vld [vmem:[%s278 + $0x229] sm:$0xff]
      %v480 = vld [vmem:[%s278 + $0x231] sm:$0xff]
      %v481 = vld [vmem:[%s278 + $0x241] sm:$0xff]
      %v482 = vld [vmem:[%s278 + $0x249] sm:$0xff]
      %v483 = vld [vmem:[%s278 + $0x259] sm:$0xff]
      %v484 = vld [vmem:[%s278 + $0x261] sm:$0xff]
      %v485 = vld [vmem:[%s278 + $0x271] sm:$0xff]
      %v486 = vld [vmem:[%s278 + $0x279] sm:$0xff]
      %v487 = vld [vmem:[%s278 + $0x289] sm:$0xff]
      %v488 = vld [vmem:[%s278 + $0x291] sm:$0xff]
      %v489 = vld [vmem:[%s278 + $0x2a1] sm:$0xff]
      %v490 = vld [vmem:[%s278 + $0x2a9] sm:$0xff]
      %v491 = vld [vmem:[%s278 + $0x2b9] sm:$0xff]
      %v492 = vld [vmem:[%s278 + $0x2c1] sm:$0xff]
      %v493 = vld [vmem:[%s278 + $0x2d1] sm:$0xff]
      %v494 = vld [vmem:[%s278 + $0x2d9] sm:$0xff]
      %v495 = vld [vmem:[%s278 + $0x2e9] sm:$0xff]
      %v496 = vld [vmem:[%s278 + $0x2f1] sm:$0xff]
      %v497 = vld [vmem:[%s278 + $0x301] sm:$0xff]
      %v498 = vld [vmem:[%s278 + $0x309] sm:$0xff]
      %v499 = vld [vmem:[%s278 + $0x319] sm:$0xff]
      %v500 = vld [vmem:[%s278 + $0x321] sm:$0xff]
      %v501 = vld [vmem:[%s278 + $0x331] sm:$0xff]
      %v502 = vld [vmem:[%s278 + $0x339] sm:$0xff]
      %v503 = vld [vmem:[%s278 + $0x349] sm:$0xff]
      %v504 = vld [vmem:[%s278 + $0x351] sm:$0xff]
      %v505 = vpack.c.bf16 %v434, %v433
      %v506 = vpack.c.bf16 %v436, %v435
      %v507 = vpack.c.bf16 %v438, %v437
      %v508 = vpack.c.bf16 %v440, %v439
      %v509 = vpack.c.bf16 %v442, %v441
      %v510 = vpack.c.bf16 %v444, %v443
      %v511 = vpack.c.bf16 %v446, %v445
      %v512 = vpack.c.bf16 %v448, %v447
      %v513 = vpack.c.bf16 %v450, %v449
      %v514 = vpack.c.bf16 %v452, %v451
      %v515 = vpack.c.bf16 %v454, %v453
      %v516 = vpack.c.bf16 %v456, %v455
      %v517 = vpack.c.bf16 %v458, %v457
      %v518 = vpack.c.bf16 %v460, %v459
      %v519 = vpack.c.bf16 %v462, %v461
      %v520 = vpack.c.bf16 %v464, %v463
      %v521 = vpack.c.bf16 %v466, %v465
      %v522 = vpack.c.bf16 %v468, %v467
      %v523 = vpack.c.bf16 %v470, %v469
      %v524 = vpack.c.bf16 %v472, %v471
      %v525 = vpack.c.bf16 %v474, %v473
      %v526 = vpack.c.bf16 %v476, %v475
      %v527 = vpack.c.bf16 %v478, %v477
      %v528 = vpack.c.bf16 %v480, %v479
      %v529 = vpack.c.bf16 %v482, %v481
      %v530 = vpack.c.bf16 %v484, %v483
      %v531 = vpack.c.bf16 %v486, %v485
      %v532 = vpack.c.bf16 %v488, %v487
      %v533 = vpack.c.bf16 %v490, %v489
      %v534 = vpack.c.bf16 %v492, %v491
      %v535 = vpack.c.bf16 %v494, %v493
      %v536 = vpack.c.bf16 %v496, %v495
      %v537 = vpack.c.bf16 %v498, %v497
      %v538 = vpack.c.bf16 %v500, %v499
      %v539 = vpack.c.bf16 %v502, %v501
      %v540 = vpack.c.bf16 %v504, %v503
      %577 = vrot.lane.b32.xlu0 %v505, 1
      %v578 = vpop.permute.xlu0 %577
      %579 = vrot.lane.b32.xlu0 %v506, 1
      %v580 = vpop.permute.xlu0 %579
      %581 = vrot.lane.b32.xlu0 %v507, 1
      %v582 = vpop.permute.xlu0 %581
      %583 = vrot.lane.b32.xlu0 %v508, 1
      %v584 = vpop.permute.xlu0 %583
      %585 = vrot.lane.b32.xlu0 %v509, 1
      %v586 = vpop.permute.xlu0 %585
      %587 = vrot.lane.b32.xlu0 %v510, 1
      %v588 = vpop.permute.xlu0 %587
      %589 = vrot.lane.b32.xlu0 %v511, 1
      %v590 = vpop.permute.xlu0 %589
      %591 = vrot.lane.b32.xlu0 %v512, 1
      %v592 = vpop.permute.xlu0 %591
      %593 = vrot.lane.b32.xlu0 %v513, 1
      %v594 = vpop.permute.xlu0 %593
      %595 = vrot.lane.b32.xlu0 %v514, 1
      %v596 = vpop.permute.xlu0 %595
      %597 = vrot.lane.b32.xlu0 %v515, 1
      %v598 = vpop.permute.xlu0 %597
      %599 = vrot.lane.b32.xlu0 %v516, 1
      %v600 = vpop.permute.xlu0 %599
      %601 = vrot.lane.b32.xlu0 %v517, 1
      %v602 = vpop.permute.xlu0 %601
      %603 = vrot.lane.b32.xlu0 %v518, 1
      %v604 = vpop.permute.xlu0 %603
      %605 = vrot.lane.b32.xlu0 %v519, 1
      %v606 = vpop.permute.xlu0 %605
      %607 = vrot.lane.b32.xlu0 %v520, 1
      %v608 = vpop.permute.xlu0 %607
      %609 = vrot.lane.b32.xlu0 %v521, 1
      %v610 = vpop.permute.xlu0 %609
      %611 = vrot.lane.b32.xlu0 %v522, 1
      %v612 = vpop.permute.xlu0 %611
      %613 = vrot.lane.b32.xlu0 %v523, 1
      %v614 = vpop.permute.xlu0 %613
      %615 = vrot.lane.b32.xlu0 %v524, 1
      %v616 = vpop.permute.xlu0 %615
      %617 = vrot.lane.b32.xlu0 %v525, 1
      %v618 = vpop.permute.xlu0 %617
      %619 = vrot.lane.b32.xlu0 %v526, 1
      %v620 = vpop.permute.xlu0 %619
      %621 = vrot.lane.b32.xlu0 %v527, 1
      %v622 = vpop.permute.xlu0 %621
      %623 = vrot.lane.b32.xlu0 %v528, 1
      %v624 = vpop.permute.xlu0 %623
      %625 = vrot.lane.b32.xlu0 %v529, 1
      %v626 = vpop.permute.xlu0 %625
      %627 = vrot.lane.b32.xlu0 %v530, 1
      %v628 = vpop.permute.xlu0 %627
      %629 = vrot.lane.b32.xlu0 %v531, 1
      %v630 = vpop.permute.xlu0 %629
      %631 = vrot.lane.b32.xlu0 %v532, 1
      %v632 = vpop.permute.xlu0 %631
      %633 = vrot.lane.b32.xlu0 %v533, 1
      %v634 = vpop.permute.xlu0 %633
      %635 = vrot.lane.b32.xlu0 %v534, 1
      %v636 = vpop.permute.xlu0 %635
      %637 = vrot.lane.b32.xlu0 %v535, 1
      %v638 = vpop.permute.xlu0 %637
      %639 = vrot.lane.b32.xlu0 %v536, 1
      %v640 = vpop.permute.xlu0 %639
      %641 = vrot.lane.b32.xlu0 %v537, 1
      %v642 = vpop.permute.xlu0 %641
      %643 = vrot.lane.b32.xlu0 %v538, 1
      %v644 = vpop.permute.xlu0 %643
      %645 = vrot.lane.b32.xlu0 %v539, 1
      %v646 = vpop.permute.xlu0 %645
      %647 = vrot.lane.b32.xlu0 %v540, 1
      %v648 = vpop.permute.xlu0 %647
      %vm685 = vcmask 15368
      %686 = vst.msk [vmem:[#allocation2] sm:$0xff] %vm685, %v578
      %687 = vst.msk [vmem:[#allocation2 + $0x8] sm:$0xff] %vm685, %v580
      %688 = vst.msk [vmem:[#allocation2 + $0x10] sm:$0xff] %vm685, %v582
      %689 = vst.msk [vmem:[#allocation2 + $0x18] sm:$0xff] %vm685, %v584
      %690 = vst.msk [vmem:[#allocation2 + $0x20] sm:$0xff] %vm685, %v586
      %691 = vst.msk [vmem:[#allocation2 + $0x28] sm:$0xff] %vm685, %v588
      %692 = vst.msk [vmem:[#allocation2 + $0x30] sm:$0xff] %vm685, %v590
      %693 = vst.msk [vmem:[#allocation2 + $0x38] sm:$0xff] %vm685, %v592
      %694 = vst.msk [vmem:[#allocation2 + $0x40] sm:$0xff] %vm685, %v594
      %695 = vst.msk [vmem:[#allocation2 + $0x48] sm:$0xff] %vm685, %v596
      %696 = vst.msk [vmem:[#allocation2 + $0x50] sm:$0xff] %vm685, %v598
      %697 = vst.msk [vmem:[#allocation2 + $0x58] sm:$0xff] %vm685, %v600
      %698 = vst.msk [vmem:[#allocation2 + $0x60] sm:$0xff] %vm685, %v602
      %699 = vst.msk [vmem:[#allocation2 + $0x68] sm:$0xff] %vm685, %v604
      %700 = vst.msk [vmem:[#allocation2 + $0x70] sm:$0xff] %vm685, %v606
      %701 = vst.msk [vmem:[#allocation2 + $0x78] sm:$0xff] %vm685, %v608
      %702 = vst.msk [vmem:[#allocation2 + $0x80] sm:$0xff] %vm685, %v610
      %703 = vst.msk [vmem:[#allocation2 + $0x88] sm:$0xff] %vm685, %v612
      %704 = vst.msk [vmem:[#allocation2 + $0x90] sm:$0xff] %vm685, %v614
      %705 = vst.msk [vmem:[#allocation2 + $0x98] sm:$0xff] %vm685, %v616
      %706 = vst.msk [vmem:[#allocation2 + $0xa0] sm:$0xff] %vm685, %v618
      %707 = vst.msk [vmem:[#allocation2 + $0xa8] sm:$0xff] %vm685, %v620
      %708 = vst.msk [vmem:[#allocation2 + $0xb0] sm:$0xff] %vm685, %v622
      %709 = vst.msk [vmem:[#allocation2 + $0xb8] sm:$0xff] %vm685, %v624
      %710 = vst.msk [vmem:[#allocation2 + $0xc0] sm:$0xff] %vm685, %v626
      %711 = vst.msk [vmem:[#allocation2 + $0xc8] sm:$0xff] %vm685, %v628
      %712 = vst.msk [vmem:[#allocation2 + $0xd0] sm:$0xff] %vm685, %v630
      %713 = vst.msk [vmem:[#allocation2 + $0xd8] sm:$0xff] %vm685, %v632
      %714 = vst.msk [vmem:[#allocation2 + $0xe0] sm:$0xff] %vm685, %v634
      %715 = vst.msk [vmem:[#allocation2 + $0xe8] sm:$0xff] %vm685, %v636
      %716 = vst.msk [vmem:[#allocation2 + $0xf0] sm:$0xff] %vm685, %v638
      %717 = vst.msk [vmem:[#allocation2 + $0xf8] sm:$0xff] %vm685, %v640
      %718 = vst.msk [vmem:[#allocation2 + $0x100] sm:$0xff] %vm685, %v642
      %719 = vst.msk [vmem:[#allocation2 + $0x108] sm:$0xff] %vm685, %v644
      %720 = vst.msk [vmem:[#allocation2 + $0x110] sm:$0xff] %vm685, %v646
      %721 = vst.msk [vmem:[#allocation2 + $0x118] sm:$0xff] %vm685, %v648
      %v722 = vld [vmem:[%s278 + $0x2] sm:$0xff]
      %v723 = vld [vmem:[%s278 + $0xa] sm:$0xff]
      %v724 = vld [vmem:[%s278 + $0x1a] sm:$0xff]
      %v725 = vld [vmem:[%s278 + $0x22] sm:$0xff]
      %v726 = vld [vmem:[%s278 + $0x32] sm:$0xff]
      %v727 = vld [vmem:[%s278 + $0x3a] sm:$0xff]
      %v728 = vld [vmem:[%s278 + $0x4a] sm:$0xff]
      %v729 = vld [vmem:[%s278 + $0x52] sm:$0xff]
      %v730 = vld [vmem:[%s278 + $0x62] sm:$0xff]
      %v731 = vld [vmem:[%s278 + $0x6a] sm:$0xff]
      %v732 = vld [vmem:[%s278 + $0x7a] sm:$0xff]
      %v733 = vld [vmem:[%s278 + $0x82] sm:$0xff]
      %v734 = vld [vmem:[%s278 + $0x92] sm:$0xff]
      %v735 = vld [vmem:[%s278 + $0x9a] sm:$0xff]
      %v736 = vld [vmem:[%s278 + $0xaa] sm:$0xff]
      %v737 = vld [vmem:[%s278 + $0xb2] sm:$0xff]
      %v738 = vld [vmem:[%s278 + $0xc2] sm:$0xff]
      %v739 = vld [vmem:[%s278 + $0xca] sm:$0xff]
      %v740 = vld [vmem:[%s278 + $0xda] sm:$0xff]
      %v741 = vld [vmem:[%s278 + $0xe2] sm:$0xff]
      %v742 = vld [vmem:[%s278 + $0xf2] sm:$0xff]
      %v743 = vld [vmem:[%s278 + $0xfa] sm:$0xff]
      %v744 = vld [vmem:[%s278 + $0x10a] sm:$0xff]
      %v745 = vld [vmem:[%s278 + $0x112] sm:$0xff]
      %v746 = vld [vmem:[%s278 + $0x122] sm:$0xff]
      %v747 = vld [vmem:[%s278 + $0x12a] sm:$0xff]
      %v748 = vld [vmem:[%s278 + $0x13a] sm:$0xff]
      %v749 = vld [vmem:[%s278 + $0x142] sm:$0xff]
      %v750 = vld [vmem:[%s278 + $0x152] sm:$0xff]
      %v751 = vld [vmem:[%s278 + $0x15a] sm:$0xff]
      %v752 = vld [vmem:[%s278 + $0x16a] sm:$0xff]
      %v753 = vld [vmem:[%s278 + $0x172] sm:$0xff]
      %v754 = vld [vmem:[%s278 + $0x182] sm:$0xff]
      %v755 = vld [vmem:[%s278 + $0x18a] sm:$0xff]
      %v756 = vld [vmem:[%s278 + $0x19a] sm:$0xff]
      %v757 = vld [vmem:[%s278 + $0x1a2] sm:$0xff]
      %v758 = vld [vmem:[%s278 + $0x1b2] sm:$0xff]
      %v759 = vld [vmem:[%s278 + $0x1ba] sm:$0xff]
      %v760 = vld [vmem:[%s278 + $0x1ca] sm:$0xff]
      %v761 = vld [vmem:[%s278 + $0x1d2] sm:$0xff]
      %v762 = vld [vmem:[%s278 + $0x1e2] sm:$0xff]
      %v763 = vld [vmem:[%s278 + $0x1ea] sm:$0xff]
      %v764 = vld [vmem:[%s278 + $0x1fa] sm:$0xff]
      %v765 = vld [vmem:[%s278 + $0x202] sm:$0xff]
      %v766 = vld [vmem:[%s278 + $0x212] sm:$0xff]
      %v767 = vld [vmem:[%s278 + $0x21a] sm:$0xff]
      %v768 = vld [vmem:[%s278 + $0x22a] sm:$0xff]
      %v769 = vld [vmem:[%s278 + $0x232] sm:$0xff]
      %v770 = vld [vmem:[%s278 + $0x242] sm:$0xff]
      %v771 = vld [vmem:[%s278 + $0x24a] sm:$0xff]
      %v772 = vld [vmem:[%s278 + $0x25a] sm:$0xff]
      %v773 = vld [vmem:[%s278 + $0x262] sm:$0xff]
      %v774 = vld [vmem:[%s278 + $0x272] sm:$0xff]
      %v775 = vld [vmem:[%s278 + $0x27a] sm:$0xff]
      %v776 = vld [vmem:[%s278 + $0x28a] sm:$0xff]
      %v777 = vld [vmem:[%s278 + $0x292] sm:$0xff]
      %v778 = vld [vmem:[%s278 + $0x2a2] sm:$0xff]
      %v779 = vld [vmem:[%s278 + $0x2aa] sm:$0xff]
      %v780 = vld [vmem:[%s278 + $0x2ba] sm:$0xff]
      %v781 = vld [vmem:[%s278 + $0x2c2] sm:$0xff]
      %v782 = vld [vmem:[%s278 + $0x2d2] sm:$0xff]
      %v783 = vld [vmem:[%s278 + $0x2da] sm:$0xff]
      %v784 = vld [vmem:[%s278 + $0x2ea] sm:$0xff]
      %v785 = vld [vmem:[%s278 + $0x2f2] sm:$0xff]
      %v786 = vld [vmem:[%s278 + $0x302] sm:$0xff]
      %v787 = vld [vmem:[%s278 + $0x30a] sm:$0xff]
      %v788 = vld [vmem:[%s278 + $0x31a] sm:$0xff]
      %v789 = vld [vmem:[%s278 + $0x322] sm:$0xff]
      %v790 = vld [vmem:[%s278 + $0x332] sm:$0xff]
      %v791 = vld [vmem:[%s278 + $0x33a] sm:$0xff]
      %v792 = vld [vmem:[%s278 + $0x34a] sm:$0xff]
      %v793 = vld [vmem:[%s278 + $0x352] sm:$0xff]
      %v794 = vpack.c.bf16 %v723, %v722
      %v795 = vpack.c.bf16 %v725, %v724
      %v796 = vpack.c.bf16 %v727, %v726
      %v797 = vpack.c.bf16 %v729, %v728
      %v798 = vpack.c.bf16 %v731, %v730
      %v799 = vpack.c.bf16 %v733, %v732
      %v800 = vpack.c.bf16 %v735, %v734
      %v801 = vpack.c.bf16 %v737, %v736
      %v802 = vpack.c.bf16 %v739, %v738
      %v803 = vpack.c.bf16 %v741, %v740
      %v804 = vpack.c.bf16 %v743, %v742
      %v805 = vpack.c.bf16 %v745, %v744
      %v806 = vpack.c.bf16 %v747, %v746
      %v807 = vpack.c.bf16 %v749, %v748
      %v808 = vpack.c.bf16 %v751, %v750
      %v809 = vpack.c.bf16 %v753, %v752
      %v810 = vpack.c.bf16 %v755, %v754
      %v811 = vpack.c.bf16 %v757, %v756
      %v812 = vpack.c.bf16 %v759, %v758
      %v813 = vpack.c.bf16 %v761, %v760
      %v814 = vpack.c.bf16 %v763, %v762
      %v815 = vpack.c.bf16 %v765, %v764
      %v816 = vpack.c.bf16 %v767, %v766
      %v817 = vpack.c.bf16 %v769, %v768
      %v818 = vpack.c.bf16 %v771, %v770
      %v819 = vpack.c.bf16 %v773, %v772
      %v820 = vpack.c.bf16 %v775, %v774
      %v821 = vpack.c.bf16 %v777, %v776
      %v822 = vpack.c.bf16 %v779, %v778
      %v823 = vpack.c.bf16 %v781, %v780
      %v824 = vpack.c.bf16 %v783, %v782
      %v825 = vpack.c.bf16 %v785, %v784
      %v826 = vpack.c.bf16 %v787, %v786
      %v827 = vpack.c.bf16 %v789, %v788
      %v828 = vpack.c.bf16 %v791, %v790
      %v829 = vpack.c.bf16 %v793, %v792
      %866 = vrot.lane.b32.xlu0 %v794, 2
      %v867 = vpop.permute.xlu0 %866
      %868 = vrot.lane.b32.xlu0 %v795, 2
      %v869 = vpop.permute.xlu0 %868
      %870 = vrot.lane.b32.xlu0 %v796, 2
      %v871 = vpop.permute.xlu0 %870
      %872 = vrot.lane.b32.xlu0 %v797, 2
      %v873 = vpop.permute.xlu0 %872
      %874 = vrot.lane.b32.xlu0 %v798, 2
      %v875 = vpop.permute.xlu0 %874
      %876 = vrot.lane.b32.xlu0 %v799, 2
      %v877 = vpop.permute.xlu0 %876
      %878 = vrot.lane.b32.xlu0 %v800, 2
      %v879 = vpop.permute.xlu0 %878
      %880 = vrot.lane.b32.xlu0 %v801, 2
      %v881 = vpop.permute.xlu0 %880
      %882 = vrot.lane.b32.xlu0 %v802, 2
      %v883 = vpop.permute.xlu0 %882
      %884 = vrot.lane.b32.xlu0 %v803, 2
      %v885 = vpop.permute.xlu0 %884
      %886 = vrot.lane.b32.xlu0 %v804, 2
      %v887 = vpop.permute.xlu0 %886
      %888 = vrot.lane.b32.xlu0 %v805, 2
      %v889 = vpop.permute.xlu0 %888
      %890 = vrot.lane.b32.xlu0 %v806, 2
      %v891 = vpop.permute.xlu0 %890
      %892 = vrot.lane.b32.xlu0 %v807, 2
      %v893 = vpop.permute.xlu0 %892
      %894 = vrot.lane.b32.xlu0 %v808, 2
      %v895 = vpop.permute.xlu0 %894
      %896 = vrot.lane.b32.xlu0 %v809, 2
      %v897 = vpop.permute.xlu0 %896
      %898 = vrot.lane.b32.xlu0 %v810, 2
      %v899 = vpop.permute.xlu0 %898
      %900 = vrot.lane.b32.xlu0 %v811, 2
      %v901 = vpop.permute.xlu0 %900
      %902 = vrot.lane.b32.xlu0 %v812, 2
      %v903 = vpop.permute.xlu0 %902
      %904 = vrot.lane.b32.xlu0 %v813, 2
      %v905 = vpop.permute.xlu0 %904
      %906 = vrot.lane.b32.xlu0 %v814, 2
      %v907 = vpop.permute.xlu0 %906
      %908 = vrot.lane.b32.xlu0 %v815, 2
      %v909 = vpop.permute.xlu0 %908
      %910 = vrot.lane.b32.xlu0 %v816, 2
      %v911 = vpop.permute.xlu0 %910
      %912 = vrot.lane.b32.xlu0 %v817, 2
      %v913 = vpop.permute.xlu0 %912
      %914 = vrot.lane.b32.xlu0 %v818, 2
      %v915 = vpop.permute.xlu0 %914
      %916 = vrot.lane.b32.xlu0 %v819, 2
      %v917 = vpop.permute.xlu0 %916
      %918 = vrot.lane.b32.xlu0 %v820, 2
      %v919 = vpop.permute.xlu0 %918
      %920 = vrot.lane.b32.xlu0 %v821, 2
      %v921 = vpop.permute.xlu0 %920
      %922 = vrot.lane.b32.xlu0 %v822, 2
      %v923 = vpop.permute.xlu0 %922
      %924 = vrot.lane.b32.xlu0 %v823, 2
      %v925 = vpop.permute.xlu0 %924
      %926 = vrot.lane.b32.xlu0 %v824, 2
      %v927 = vpop.permute.xlu0 %926
      %928 = vrot.lane.b32.xlu0 %v825, 2
      %v929 = vpop.permute.xlu0 %928
      %930 = vrot.lane.b32.xlu0 %v826, 2
      %v931 = vpop.permute.xlu0 %930
      %932 = vrot.lane.b32.xlu0 %v827, 2
      %v933 = vpop.permute.xlu0 %932
      %934 = vrot.lane.b32.xlu0 %v828, 2
      %v935 = vpop.permute.xlu0 %934
      %936 = vrot.lane.b32.xlu0 %v829, 2
      %v937 = vpop.permute.xlu0 %936
      %vm974 = vcmask 23568
      %975 = vst.msk [vmem:[#allocation2] sm:$0xff] %vm974, %v867
      %976 = vst.msk [vmem:[#allocation2 + $0x8] sm:$0xff] %vm974, %v869
      %977 = vst.msk [vmem:[#allocation2 + $0x10] sm:$0xff] %vm974, %v871
      %978 = vst.msk [vmem:[#allocation2 + $0x18] sm:$0xff] %vm974, %v873
      %979 = vst.msk [vmem:[#allocation2 + $0x20] sm:$0xff] %vm974, %v875
      %980 = vst.msk [vmem:[#allocation2 + $0x28] sm:$0xff] %vm974, %v877
      %981 = vst.msk [vmem:[#allocation2 + $0x30] sm:$0xff] %vm974, %v879
      %982 = vst.msk [vmem:[#allocation2 + $0x38] sm:$0xff] %vm974, %v881
      %983 = vst.msk [vmem:[#allocation2 + $0x40] sm:$0xff] %vm974, %v883
      %984 = vst.msk [vmem:[#allocation2 + $0x48] sm:$0xff] %vm974, %v885
      %985 = vst.msk [vmem:[#allocation2 + $0x50] sm:$0xff] %vm974, %v887
      %986 = vst.msk [vmem:[#allocation2 + $0x58] sm:$0xff] %vm974, %v889
      %987 = vst.msk [vmem:[#allocation2 + $0x60] sm:$0xff] %vm974, %v891
      %988 = vst.msk [vmem:[#allocation2 + $0x68] sm:$0xff] %vm974, %v893
      %989 = vst.msk [vmem:[#allocation2 + $0x70] sm:$0xff] %vm974, %v895
      %990 = vst.msk [vmem:[#allocation2 + $0x78] sm:$0xff] %vm974, %v897
      %991 = vst.msk [vmem:[#allocation2 + $0x80] sm:$0xff] %vm974, %v899
      %992 = vst.msk [vmem:[#allocation2 + $0x88] sm:$0xff] %vm974, %v901
      %993 = vst.msk [vmem:[#allocation2 + $0x90] sm:$0xff] %vm974, %v903
      %994 = vst.msk [vmem:[#allocation2 + $0x98] sm:$0xff] %vm974, %v905
      %995 = vst.msk [vmem:[#allocation2 + $0xa0] sm:$0xff] %vm974, %v907
      %996 = vst.msk [vmem:[#allocation2 + $0xa8] sm:$0xff] %vm974, %v909
      %997 = vst.msk [vmem:[#allocation2 + $0xb0] sm:$0xff] %vm974, %v911
      %998 = vst.msk [vmem:[#allocation2 + $0xb8] sm:$0xff] %vm974, %v913
      %999 = vst.msk [vmem:[#allocation2 + $0xc0] sm:$0xff] %vm974, %v915
      %1000 = vst.msk [vmem:[#allocation2 + $0xc8] sm:$0xff] %vm974, %v917
      %1001 = vst.msk [vmem:[#allocation2 + $0xd0] sm:$0xff] %vm974, %v919
      %1002 = vst.msk [vmem:[#allocation2 + $0xd8] sm:$0xff] %vm974, %v921
      %1003 = vst.msk [vmem:[#allocation2 + $0xe0] sm:$0xff] %vm974, %v923
      %1004 = vst.msk [vmem:[#allocation2 + $0xe8] sm:$0xff] %vm974, %v925
      %1005 = vst.msk [vmem:[#allocation2 + $0xf0] sm:$0xff] %vm974, %v927
      %1006 = vst.msk [vmem:[#allocation2 + $0xf8] sm:$0xff] %vm974, %v929
      %1007 = vst.msk [vmem:[#allocation2 + $0x100] sm:$0xff] %vm974, %v931
      %1008 = vst.msk [vmem:[#allocation2 + $0x108] sm:$0xff] %vm974, %v933
      %1009 = vst.msk [vmem:[#allocation2 + $0x110] sm:$0xff] %vm974, %v935
      %1010 = vst.msk [vmem:[#allocation2 + $0x118] sm:$0xff] %vm974, %v937
      %v1011 = vld [vmem:[#allocation2] sm:$0xff]
      %v1012 = vld [vmem:[#allocation2 + $0x8] sm:$0xff]
      %v1013 = vld [vmem:[#allocation2 + $0x10] sm:$0xff]
      %v1014 = vld [vmem:[#allocation2 + $0x18] sm:$0xff]
      %v1015 = vld [vmem:[#allocation2 + $0x20] sm:$0xff]
      %v1016 = vld [vmem:[#allocation2 + $0x28] sm:$0xff]
      %v1017 = vld [vmem:[#allocation2 + $0x30] sm:$0xff]
      %v1018 = vld [vmem:[#allocation2 + $0x38] sm:$0xff]
      %v1019 = vld [vmem:[#allocation2 + $0x40] sm:$0xff]
      %v1020 = vld [vmem:[#allocation2 + $0x48] sm:$0xff]
      %v1021 = vld [vmem:[#allocation2 + $0x50] sm:$0xff]
      %v1022 = vld [vmem:[#allocation2 + $0x58] sm:$0xff]
      %v1023 = vld [vmem:[#allocation2 + $0x60] sm:$0xff]
      %v1024 = vld [vmem:[#allocation2 + $0x68] sm:$0xff]
      %v1025 = vld [vmem:[#allocation2 + $0x70] sm:$0xff]
      %v1026 = vld [vmem:[#allocation2 + $0x78] sm:$0xff]
      %v1027 = vld [vmem:[#allocation2 + $0x90] sm:$0xff]
      %v1028 = vld [vmem:[#allocation2 + $0x98] sm:$0xff]
      %v1029 = vld [vmem:[#allocation2 + $0xa0] sm:$0xff]
      %v1030 = vld [vmem:[#allocation2 + $0xa8] sm:$0xff]
      %v1031 = vld [vmem:[#allocation2 + $0xb0] sm:$0xff]
      %v1032 = vld [vmem:[#allocation2 + $0xb8] sm:$0xff]
      %v1033 = vld [vmem:[#allocation2 + $0xc0] sm:$0xff]
      %v1034 = vld [vmem:[#allocation2 + $0xc8] sm:$0xff]
      %v1035 = vld [vmem:[#allocation2 + $0xd0] sm:$0xff]
      %v1036 = vld [vmem:[#allocation2 + $0xd8] sm:$0xff]
      %v1037 = vld [vmem:[#allocation2 + $0xe0] sm:$0xff]
      %v1038 = vld [vmem:[#allocation2 + $0xe8] sm:$0xff]
      %v1039 = vld [vmem:[#allocation2 + $0xf0] sm:$0xff]
      %v1040 = vld [vmem:[#allocation2 + $0xf8] sm:$0xff]
      %v1041 = vld [vmem:[#allocation2 + $0x100] sm:$0xff]
      %v1042 = vld [vmem:[#allocation2 + $0x108] sm:$0xff]
      %v1043 = vld [vmem:[%s1] sm:$0x3]
      %s1044 = scalar_lea.vmem [#allocation2], 8
      %v1045 = vld [vmem:[%s1044] sm:$0xff]
      %v1046 = vld [vmem:[%s1044 + $0x8] sm:$0xff]
      %v1047 = vld [vmem:[%s1044 + $0x10] sm:$0xff]
      %v1048 = vld [vmem:[%s1044 + $0x18] sm:$0xff]
      %v1049 = vld [vmem:[%s1044 + $0x20] sm:$0xff]
      %v1050 = vld [vmem:[%s1044 + $0x28] sm:$0xff]
      %v1051 = vld [vmem:[%s1044 + $0x30] sm:$0xff]
      %v1052 = vld [vmem:[%s1044 + $0x38] sm:$0xff]
      %v1053 = vld [vmem:[%s1044 + $0x40] sm:$0xff]
      %v1054 = vld [vmem:[%s1044 + $0x48] sm:$0xff]
      %v1055 = vld [vmem:[%s1044 + $0x50] sm:$0xff]
      %v1056 = vld [vmem:[%s1044 + $0x58] sm:$0xff]
      %v1057 = vld [vmem:[%s1044 + $0x60] sm:$0xff]
      %v1058 = vld [vmem:[%s1044 + $0x68] sm:$0xff]
      %v1059 = vld [vmem:[%s1044 + $0x70] sm:$0xff]
      %v1060 = vld [vmem:[%s1044 + $0x78] sm:$0xff]
      %v1061 = vld [vmem:[%s1044 + $0x90] sm:$0xff]
      %v1062 = vld [vmem:[%s1044 + $0x98] sm:$0xff]
      %v1063 = vld [vmem:[%s1044 + $0xa0] sm:$0xff]
      %v1064 = vld [vmem:[%s1044 + $0xa8] sm:$0xff]
      %v1065 = vld [vmem:[%s1044 + $0xb0] sm:$0xff]
      %v1066 = vld [vmem:[%s1044 + $0xb8] sm:$0xff]
      %v1067 = vld [vmem:[%s1044 + $0xc0] sm:$0xff]
      %v1068 = vld [vmem:[%s1044 + $0xc8] sm:$0xff]
      %v1069 = vld [vmem:[%s1044 + $0xd0] sm:$0xff]
      %v1070 = vld [vmem:[%s1044 + $0xd8] sm:$0xff]
      %v1071 = vld [vmem:[%s1044 + $0xe0] sm:$0xff]
      %v1072 = vld [vmem:[%s1044 + $0xe8] sm:$0xff]
      %v1073 = vld [vmem:[%s1044 + $0xf0] sm:$0xff]
      %v1074 = vld [vmem:[%s1044 + $0xf8] sm:$0xff]
      %v1075 = vld [vmem:[%s1044 + $0x100] sm:$0xff]
      %v1076 = vld [vmem:[%s1044 + $0x108] sm:$0xff]
      %s1077 = scalar_lea.vmem %s1, 2
      %v1078 = vld [vmem:[%s1077] sm:$0x3]
      %vm1079 = vcmask 23552
      %v1081 = vsel %vm1079, %v1045, 0
      %v1084 = vsel %vm1079, %v1046, 0
      %v1087 = vsel %vm1079, %v1047, 0
      %v1090 = vsel %vm1079, %v1048, 0
      %v1093 = vsel %vm1079, %v1049, 0
      %v1096 = vsel %vm1079, %v1050, 0
      %v1099 = vsel %vm1079, %v1051, 0
      %v1102 = vsel %vm1079, %v1052, 0
      %v1105 = vsel %vm1079, %v1053, 0
      %v1108 = vsel %vm1079, %v1054, 0
      %v1111 = vsel %vm1079, %v1055, 0
      %v1114 = vsel %vm1079, %v1056, 0
      %v1117 = vsel %vm1079, %v1057, 0
      %v1120 = vsel %vm1079, %v1058, 0
      %v1123 = vsel %vm1079, %v1059, 0
      %v1126 = vsel %vm1079, %v1060, 0
      %v1129 = vsel %vm1079, %v1061, 0
      %v1132 = vsel %vm1079, %v1062, 0
      %v1135 = vsel %vm1079, %v1063, 0
      %v1138 = vsel %vm1079, %v1064, 0
      %v1141 = vsel %vm1079, %v1065, 0
      %v1144 = vsel %vm1079, %v1066, 0
      %v1147 = vsel %vm1079, %v1067, 0
      %v1150 = vsel %vm1079, %v1068, 0
      %v1153 = vsel %vm1079, %v1069, 0
      %v1156 = vsel %vm1079, %v1070, 0
      %v1159 = vsel %vm1079, %v1071, 0
      %v1162 = vsel %vm1079, %v1072, 0
      %v1165 = vsel %vm1079, %v1073, 0
      %v1168 = vsel %vm1079, %v1074, 0
      %v1171 = vsel %vm1079, %v1075, 0
      %v1174 = vsel %vm1079, %v1076, 0
      %vm1176 = vcmask 1040384
      %vm1177 = vcmask 1041408
      %v1178 = vsel %vm1176, 4294967295, 65535
      %v1179 = vsel %vm1177, %v1178, 0
      %v1181 = vand.u32 %v1078, %v1179
      %1183 = vmatprep.subr.bf16.mxu0 0
      %1184 = vmatpush1.bf16.msra.mxu0 %v1181
      %1185 = vmatprep.subr.bf16.mxu0 0
      %1186 = vmatpush1.bf16.msra.mxu0 0
      %1187 = vmatprep.subr.bf16.mxu0 0
      %1188 = vmatpush1.bf16.msra.mxu0 0
      %1189 = vmatprep.subr.bf16.mxu0 0
      %1190 = vmatpush1.bf16.msra.mxu0 0
      %1191 = vmatprep.subr.bf16.mxu0 0
      %1192 = vmatpush1.bf16.msra.mxu0 0
      %1193 = vmatprep.subr.bf16.mxu0 0
      %1194 = vmatpush1.bf16.msra.mxu0 0
      %1195 = vmatprep.subr.bf16.mxu0 0
      %1196 = vmatpush1.bf16.msra.mxu0 0
      %1197 = vmatprep.subr.bf16.mxu0 0
      %1198 = vmatpush1.bf16.msra.mxu0 0
      %1199 = vmatprep.subr.bf16.mxu0 0
      %1200 = vmatpush1.bf16.msra.mxu0 0
      %1201 = vmatprep.subr.bf16.mxu0 0
      %1202 = vmatpush1.bf16.msra.mxu0 0
      %1203 = vmatprep.subr.bf16.mxu0 0
      %1204 = vmatpush1.bf16.msra.mxu0 0
      %1205 = vmatprep.subr.bf16.mxu0 0
      %1206 = vmatpush1.bf16.msra.mxu0 0
      %1207 = vmatprep.subr.bf16.mxu0 0
      %1208 = vmatpush1.bf16.msra.mxu0 0
      %1209 = vmatprep.subr.bf16.mxu0 0
      %1210 = vmatpush1.bf16.msra.mxu0 0
      %1211 = vmatprep.subr.bf16.mxu0 0
      %1212 = vmatpush1.bf16.msra.mxu0 0
      %1213 = vmatprep.subr.bf16.mxu0 0
      %1214 = vmatpush1.bf16.msra.mxu0 0
      %1215 = vmatprep.mubr.bf16.mxu0 0
      %1216 = vmatmul.mubr.bf16.gmra.mrb[0].mxu0 %v1081
      %v1217 = vpop.f32.mrb[0].mxu0
      %v1218 = vadd.f32 0.0, %v1217
      %v1219 = vpop.f32.mrb[0].mxu0
      %v1220 = vpop.f32.mrb[0].mxu0
      %v1221 = vadd.f32 0.0, %v1220
      %v1222 = vpop.f32.mrb[0].mxu0
      %1223 = vmatprep.mubr.bf16.mxu0 0
      %1224 = vmatmul.mubr.bf16.gmra.mrb[0].mxu0 %v1084
      %v1225 = vpop.f32.mrb[0].mxu0
      %v1226 = vadd.f32 0.0, %v1225
      %v1227 = vpop.f32.mrb[0].mxu0
      %v1228 = vpop.f32.mrb[0].mxu0
      %v1229 = vadd.f32 0.0, %v1228
      %v1230 = vpop.f32.mrb[0].mxu0
      %1231 = vmatprep.mubr.bf16.mxu0 0
      %1232 = vmatmul.mubr.bf16.gmra.mrb[0].mxu0 %v1087
      %v1233 = vpop.f32.mrb[0].mxu0
      %v1234 = vadd.f32 0.0, %v1233
      %v1235 = vpop.f32.mrb[0].mxu0
      %v1236 = vpop.f32.mrb[0].mxu0
      %v1237 = vadd.f32 0.0, %v1236
      %v1238 = vpop.f32.mrb[0].mxu0
      %1239 = vmatprep.mubr.bf16.mxu0 0
      %1240 = vmatmul.mubr.bf16.gmra.mrb[0].mxu0 %v1090
      %v1241 = vpop.f32.mrb[0].mxu0
      %v1242 = vadd.f32 0.0, %v1241
      %v1243 = vpop.f32.mrb[0].mxu0
      %v1244 = vpop.f32.mrb[0].mxu0
      %v1245 = vadd.f32 0.0, %v1244
      %v1246 = vpop.f32.mrb[0].mxu0
      %1247 = vmatprep.mubr.bf16.mxu0 0
      %1248 = vmatmul.mubr.bf16.gmra.mrb[0].mxu0 %v1093
      %v1249 = vpop.f32.mrb[0].mxu0
      %v1250 = vadd.f32 0.0, %v1249
      %v1251 = vpop.f32.mrb[0].mxu0
      %v1252 = vpop.f32.mrb[0].mxu0
      %v1253 = vadd.f32 0.0, %v1252
      %v1254 = vpop.f32.mrb[0].mxu0
      %1255 = vmatprep.mubr.bf16.mxu0 0
      %1256 = vmatmul.mubr.bf16.gmra.mrb[0].mxu0 %v1096
      %v1257 = vpop.f32.mrb[0].mxu0
      %v1258 = vadd.f32 0.0, %v1257
      %v1259 = vpop.f32.mrb[0].mxu0
      %v1260 = vpop.f32.mrb[0].mxu0
      %v1261 = vadd.f32 0.0, %v1260
      %v1262 = vpop.f32.mrb[0].mxu0
      %1263 = vmatprep.mubr.bf16.mxu0 0
      %1264 = vmatmul.mubr.bf16.gmra.mrb[0].mxu0 %v1099
      %v1265 = vpop.f32.mrb[0].mxu0
      %v1266 = vadd.f32 0.0, %v1265
      %v1267 = vpop.f32.mrb[0].mxu0
      %v1268 = vpop.f32.mrb[0].mxu0
      %v1269 = vadd.f32 0.0, %v1268
      %v1270 = vpop.f32.mrb[0].mxu0
      %1271 = vmatprep.mubr.bf16.mxu0 0
      %1272 = vmatmul.mubr.bf16.gmra.mrb[0].mxu0 %v1102
      %v1273 = vpop.f32.mrb[0].mxu0
      %v1274 = vadd.f32 0.0, %v1273
      %v1275 = vpop.f32.mrb[0].mxu0
      %v1276 = vpop.f32.mrb[0].mxu0
      %v1277 = vadd.f32 0.0, %v1276
      %v1278 = vpop.f32.mrb[0].mxu0
      %1279 = vmatprep.mubr.bf16.mxu0 0
      %1280 = vmatmul.mubr.bf16.gmra.mrb[0].mxu0 %v1105
      %v1281 = vpop.f32.mrb[0].mxu0
      %v1282 = vadd.f32 0.0, %v1281
      %v1283 = vpop.f32.mrb[0].mxu0
      %v1284 = vpop.f32.mrb[0].mxu0
      %v1285 = vadd.f32 0.0, %v1284
      %v1286 = vpop.f32.mrb[0].mxu0
      %1287 = vmatprep.mubr.bf16.mxu0 0
      %1288 = vmatmul.mubr.bf16.gmra.mrb[0].mxu0 %v1108
      %v1289 = vpop.f32.mrb[0].mxu0
      %v1290 = vadd.f32 0.0, %v1289
      %v1291 = vpop.f32.mrb[0].mxu0
      %v1292 = vpop.f32.mrb[0].mxu0
      %v1293 = vadd.f32 0.0, %v1292
      %v1294 = vpop.f32.mrb[0].mxu0
      %1295 = vmatprep.mubr.bf16.mxu0 0
      %1296 = vmatmul.mubr.bf16.gmra.mrb[0].mxu0 %v1111
      %v1297 = vpop.f32.mrb[0].mxu0
      %v1298 = vadd.f32 0.0, %v1297
      %v1299 = vpop.f32.mrb[0].mxu0
      %v1300 = vpop.f32.mrb[0].mxu0
      %v1301 = vadd.f32 0.0, %v1300
      %v1302 = vpop.f32.mrb[0].mxu0
      %1303 = vmatprep.mubr.bf16.mxu0 0
      %1304 = vmatmul.mubr.bf16.gmra.mrb[0].mxu0 %v1114
      %v1305 = vpop.f32.mrb[0].mxu0
      %v1306 = vadd.f32 0.0, %v1305
      %v1307 = vpop.f32.mrb[0].mxu0
      %v1308 = vpop.f32.mrb[0].mxu0
      %v1309 = vadd.f32 0.0, %v1308
      %v1310 = vpop.f32.mrb[0].mxu0
      %1311 = vmatprep.mubr.bf16.mxu0 0
      %1312 = vmatmul.mubr.bf16.gmra.mrb[0].mxu0 %v1117
      %v1313 = vpop.f32.mrb[0].mxu0
      %v1314 = vadd.f32 0.0, %v1313
      %v1315 = vpop.f32.mrb[0].mxu0
      %v1316 = vpop.f32.mrb[0].mxu0
      %v1317 = vadd.f32 0.0, %v1316
      %v1318 = vpop.f32.mrb[0].mxu0
      %1319 = vmatprep.mubr.bf16.mxu0 0
      %1320 = vmatmul.mubr.bf16.gmra.mrb[0].mxu0 %v1120
      %v1321 = vpop.f32.mrb[0].mxu0
      %v1322 = vadd.f32 0.0, %v1321
      %v1323 = vpop.f32.mrb[0].mxu0
      %v1324 = vpop.f32.mrb[0].mxu0
      %v1325 = vadd.f32 0.0, %v1324
      %v1326 = vpop.f32.mrb[0].mxu0
      %1327 = vmatprep.mubr.bf16.mxu0 0
      %1328 = vmatmul.mubr.bf16.gmra.mrb[0].mxu0 %v1123
      %v1329 = vpop.f32.mrb[0].mxu0
      %v1330 = vadd.f32 0.0, %v1329
      %v1331 = vpop.f32.mrb[0].mxu0
      %v1332 = vpop.f32.mrb[0].mxu0
      %v1333 = vadd.f32 0.0, %v1332
      %v1334 = vpop.f32.mrb[0].mxu0
      %1335 = vmatprep.mubr.bf16.mxu0 0
      %1336 = vmatmul.mubr.bf16.gmra.mrb[0].mxu0 %v1126
      %v1337 = vpop.f32.mrb[0].mxu0
      %v1338 = vadd.f32 0.0, %v1337
      %v1339 = vpop.f32.mrb[0].mxu0
      %v1340 = vpop.f32.mrb[0].mxu0
      %v1341 = vadd.f32 0.0, %v1340
      %v1342 = vpop.f32.mrb[0].mxu0
      %1343 = vmatprep.mubr.bf16.mxu0 0
      %1344 = vmatmul.mubr.bf16.gmra.mrb[0].mxu0 %v1129
      %v1345 = vpop.f32.mrb[0].mxu0
      %v1346 = vadd.f32 0.0, %v1345
      %v1347 = vpop.f32.mrb[0].mxu0
      %v1348 = vpop.f32.mrb[0].mxu0
      %v1349 = vadd.f32 0.0, %v1348
      %v1350 = vpop.f32.mrb[0].mxu0
      %1351 = vmatprep.mubr.bf16.mxu0 0
      %1352 = vmatmul.mubr.bf16.gmra.mrb[0].mxu0 %v1132
      %v1353 = vpop.f32.mrb[0].mxu0
      %v1354 = vadd.f32 0.0, %v1353
      %v1355 = vpop.f32.mrb[0].mxu0
      %v1356 = vpop.f32.mrb[0].mxu0
      %v1357 = vadd.f32 0.0, %v1356
      %v1358 = vpop.f32.mrb[0].mxu0
      %1359 = vmatprep.mubr.bf16.mxu0 0
      %1360 = vmatmul.mubr.bf16.gmra.mrb[0].mxu0 %v1135
      %v1361 = vpop.f32.mrb[0].mxu0
      %v1362 = vadd.f32 0.0, %v1361
      %v1363 = vpop.f32.mrb[0].mxu0
      %v1364 = vpop.f32.mrb[0].mxu0
      %v1365 = vadd.f32 0.0, %v1364
      %v1366 = vpop.f32.mrb[0].mxu0
      %1367 = vmatprep.mubr.bf16.mxu0 0
      %1368 = vmatmul.mubr.bf16.gmra.mrb[0].mxu0 %v1138
      %v1369 = vpop.f32.mrb[0].mxu0
      %v1370 = vadd.f32 0.0, %v1369
      %v1371 = vpop.f32.mrb[0].mxu0
      %v1372 = vpop.f32.mrb[0].mxu0
      %v1373 = vadd.f32 0.0, %v1372
      %v1374 = vpop.f32.mrb[0].mxu0
      %1375 = vmatprep.mubr.bf16.mxu0 0
      %1376 = vmatmul.mubr.bf16.gmra.mrb[0].mxu0 %v1141
      %v1377 = vpop.f32.mrb[0].mxu0
      %v1378 = vadd.f32 0.0, %v1377
      %v1379 = vpop.f32.mrb[0].mxu0
      %v1380 = vpop.f32.mrb[0].mxu0
      %v1381 = vadd.f32 0.0, %v1380
      %v1382 = vpop.f32.mrb[0].mxu0
      %1383 = vmatprep.mubr.bf16.mxu0 0
      %1384 = vmatmul.mubr.bf16.gmra.mrb[0].mxu0 %v1144
      %v1385 = vpop.f32.mrb[0].mxu0
      %v1386 = vadd.f32 0.0, %v1385
      %v1387 = vpop.f32.mrb[0].mxu0
      %v1388 = vpop.f32.mrb[0].mxu0
      %v1389 = vadd.f32 0.0, %v1388
      %v1390 = vpop.f32.mrb[0].mxu0
      %1391 = vmatprep.mubr.bf16.mxu0 0
      %1392 = vmatmul.mubr.bf16.gmra.mrb[0].mxu0 %v1147
      %v1393 = vpop.f32.mrb[0].mxu0
      %v1394 = vadd.f32 0.0, %v1393
      %v1395 = vpop.f32.mrb[0].mxu0
      %v1396 = vpop.f32.mrb[0].mxu0
      %v1397 = vadd.f32 0.0, %v1396
      %v1398 = vpop.f32.mrb[0].mxu0
      %1399 = vmatprep.mubr.bf16.mxu0 0
      %1400 = vmatmul.mubr.bf16.gmra.mrb[0].mxu0 %v1150
      %v1401 = vpop.f32.mrb[0].mxu0
      %v1402 = vadd.f32 0.0, %v1401
      %v1403 = vpop.f32.mrb[0].mxu0
      %v1404 = vpop.f32.mrb[0].mxu0
      %v1405 = vadd.f32 0.0, %v1404
      %v1406 = vpop.f32.mrb[0].mxu0
      %1407 = vmatprep.mubr.bf16.mxu0 0
      %1408 = vmatmul.mubr.bf16.gmra.mrb[0].mxu0 %v1153
      %v1409 = vpop.f32.mrb[0].mxu0
      %v1410 = vadd.f32 0.0, %v1409
      %v1411 = vpop.f32.mrb[0].mxu0
      %v1412 = vpop.f32.mrb[0].mxu0
      %v1413 = vadd.f32 0.0, %v1412
      %v1414 = vpop.f32.mrb[0].mxu0
      %1415 = vmatprep.mubr.bf16.mxu0 0
      %1416 = vmatmul.mubr.bf16.gmra.mrb[0].mxu0 %v1156
      %v1417 = vpop.f32.mrb[0].mxu0
      %v1418 = vadd.f32 0.0, %v1417
      %v1419 = vpop.f32.mrb[0].mxu0
      %v1420 = vpop.f32.mrb[0].mxu0
      %v1421 = vadd.f32 0.0, %v1420
      %v1422 = vpop.f32.mrb[0].mxu0
      %1423 = vmatprep.mubr.bf16.mxu0 0
      %1424 = vmatmul.mubr.bf16.gmra.mrb[0].mxu0 %v1159
      %v1425 = vpop.f32.mrb[0].mxu0
      %v1426 = vadd.f32 0.0, %v1425
      %v1427 = vpop.f32.mrb[0].mxu0
      %v1428 = vpop.f32.mrb[0].mxu0
      %v1429 = vadd.f32 0.0, %v1428
      %v1430 = vpop.f32.mrb[0].mxu0
      %1431 = vmatprep.mubr.bf16.mxu0 0
      %1432 = vmatmul.mubr.bf16.gmra.mrb[0].mxu0 %v1162
      %v1433 = vpop.f32.mrb[0].mxu0
      %v1434 = vadd.f32 0.0, %v1433
      %v1435 = vpop.f32.mrb[0].mxu0
      %v1436 = vpop.f32.mrb[0].mxu0
      %v1437 = vadd.f32 0.0, %v1436
      %v1438 = vpop.f32.mrb[0].mxu0
      %1439 = vmatprep.mubr.bf16.mxu0 0
      %1440 = vmatmul.mubr.bf16.gmra.mrb[0].mxu0 %v1165
      %v1441 = vpop.f32.mrb[0].mxu0
      %v1442 = vadd.f32 0.0, %v1441
      %v1443 = vpop.f32.mrb[0].mxu0
      %v1444 = vpop.f32.mrb[0].mxu0
      %v1445 = vadd.f32 0.0, %v1444
      %v1446 = vpop.f32.mrb[0].mxu0
      %1447 = vmatprep.mubr.bf16.mxu0 0
      %1448 = vmatmul.mubr.bf16.gmra.mrb[0].mxu0 %v1168
      %v1449 = vpop.f32.mrb[0].mxu0
      %v1450 = vadd.f32 0.0, %v1449
      %v1451 = vpop.f32.mrb[0].mxu0
      %v1452 = vpop.f32.mrb[0].mxu0
      %v1453 = vadd.f32 0.0, %v1452
      %v1454 = vpop.f32.mrb[0].mxu0
      %1455 = vmatprep.mubr.bf16.mxu0 0
      %1456 = vmatmul.mubr.bf16.gmra.mrb[0].mxu0 %v1171
      %v1457 = vpop.f32.mrb[0].mxu0
      %v1458 = vadd.f32 0.0, %v1457
      %v1459 = vpop.f32.mrb[0].mxu0
      %v1460 = vpop.f32.mrb[0].mxu0
      %v1461 = vadd.f32 0.0, %v1460
      %v1462 = vpop.f32.mrb[0].mxu0
      %1463 = vmatprep.mubr.bf16.mxu0 0
      %1464 = vmatmul.mubr.bf16.gmra.mrb[0].mxu0 %v1174
      %v1465 = vpop.f32.mrb[0].mxu0
      %v1466 = vadd.f32 0.0, %v1465
      %v1467 = vpop.f32.mrb[0].mxu0
      %v1468 = vpop.f32.mrb[0].mxu0
      %v1469 = vadd.f32 0.0, %v1468
      %v1470 = vpop.f32.mrb[0].mxu0
      %1471 = vdwg.mxu0
      %v1473 = vsel %vm1079, %v1011, 0
      %v1476 = vsel %vm1079, %v1012, 0
      %v1479 = vsel %vm1079, %v1013, 0
      %v1482 = vsel %vm1079, %v1014, 0
      %v1485 = vsel %vm1079, %v1015, 0
      %v1488 = vsel %vm1079, %v1016, 0
      %v1491 = vsel %vm1079, %v1017, 0
      %v1494 = vsel %vm1079, %v1018, 0
      %v1497 = vsel %vm1079, %v1019, 0
      %v1500 = vsel %vm1079, %v1020, 0
      %v1503 = vsel %vm1079, %v1021, 0
      %v1506 = vsel %vm1079, %v1022, 0
      %v1509 = vsel %vm1079, %v1023, 0
      %v1512 = vsel %vm1079, %v1024, 0
      %v1515 = vsel %vm1079, %v1025, 0
      %v1518 = vsel %vm1079, %v1026, 0
      %v1521 = vsel %vm1079, %v1027, 0
      %v1524 = vsel %vm1079, %v1028, 0
      %v1527 = vsel %vm1079, %v1029, 0
      %v1530 = vsel %vm1079, %v1030, 0
      %v1533 = vsel %vm1079, %v1031, 0
      %v1536 = vsel %vm1079, %v1032, 0
      %v1539 = vsel %vm1079, %v1033, 0
      %v1542 = vsel %vm1079, %v1034, 0
      %v1545 = vsel %vm1079, %v1035, 0
      %v1548 = vsel %vm1079, %v1036, 0
      %v1551 = vsel %vm1079, %v1037, 0
      %v1554 = vsel %vm1079, %v1038, 0
      %v1557 = vsel %vm1079, %v1039, 0
      %v1560 = vsel %vm1079, %v1040, 0
      %v1563 = vsel %vm1079, %v1041, 0
      %v1566 = vsel %vm1079, %v1042, 0
      %v1569 = vand.u32 %v1043, %v1179
      %1571 = vmatprep.subr.bf16.mxu0 0
      %1572 = vmatpush1.bf16.msra.mxu0 %v1569
      %1573 = vmatprep.subr.bf16.mxu0 0
      %1574 = vmatpush1.bf16.msra.mxu0 0
      %1575 = vmatprep.subr.bf16.mxu0 0
      %1576 = vmatpush1.bf16.msra.mxu0 0
      %1577 = vmatprep.subr.bf16.mxu0 0
      %1578 = vmatpush1.bf16.msra.mxu0 0
      %1579 = vmatprep.subr.bf16.mxu0 0
      %1580 = vmatpush1.bf16.msra.mxu0 0
      %1581 = vmatprep.subr.bf16.mxu0 0
      %1582 = vmatpush1.bf16.msra.mxu0 0
      %1583 = vmatprep.subr.bf16.mxu0 0
      %1584 = vmatpush1.bf16.msra.mxu0 0
      %1585 = vmatprep.subr.bf16.mxu0 0
      %1586 = vmatpush1.bf16.msra.mxu0 0
      %1587 = vmatprep.subr.bf16.mxu0 0
      %1588 = vmatpush1.bf16.msra.mxu0 0
      %1589 = vmatprep.subr.bf16.mxu0 0
      %1590 = vmatpush1.bf16.msra.mxu0 0
      %1591 = vmatprep.subr.bf16.mxu0 0
      %1592 = vmatpush1.bf16.msra.mxu0 0
      %1593 = vmatprep.subr.bf16.mxu0 0
      %1594 = vmatpush1.bf16.msra.mxu0 0
      %1595 = vmatprep.subr.bf16.mxu0 0
      %1596 = vmatpush1.bf16.msra.mxu0 0
      %1597 = vmatprep.subr.bf16.mxu0 0
      %1598 = vmatpush1.bf16.msra.mxu0 0
      %1599 = vmatprep.subr.bf16.mxu0 0
      %1600 = vmatpush1.bf16.msra.mxu0 0
      %1601 = vmatprep.subr.bf16.mxu0 0
      %1602 = vmatpush1.bf16.msra.mxu0 0
      %1603 = vmatprep.mubr.bf16.mxu0 0
      %1604 = vmatmul.mubr.bf16.gmra.mrb[0].mxu0 %v1473
      %v1605 = vpop.f32.mrb[0].mxu0
      %v1606 = vadd.f32 %v1218, %v1605
      %v1607 = vpop.f32.mrb[0].mxu0
      %v1608 = vpop.f32.mrb[0].mxu0
      %v1609 = vadd.f32 %v1221, %v1608
      %v1610 = vpop.f32.mrb[0].mxu0
      %1611 = vmatprep.mubr.bf16.mxu0 0
      %1612 = vmatmul.mubr.bf16.gmra.mrb[0].mxu0 %v1476
      %v1613 = vpop.f32.mrb[0].mxu0
      %v1614 = vadd.f32 %v1226, %v1613
      %v1615 = vpop.f32.mrb[0].mxu0
      %v1616 = vpop.f32.mrb[0].mxu0
      %v1617 = vadd.f32 %v1229, %v1616
      %v1618 = vpop.f32.mrb[0].mxu0
      %1619 = vmatprep.mubr.bf16.mxu0 0
      %1620 = vmatmul.mubr.bf16.gmra.mrb[0].mxu0 %v1479
      %v1621 = vpop.f32.mrb[0].mxu0
      %v1622 = vadd.f32 %v1234, %v1621
      %v1623 = vpop.f32.mrb[0].mxu0
      %v1624 = vpop.f32.mrb[0].mxu0
      %v1625 = vadd.f32 %v1237, %v1624
      %v1626 = vpop.f32.mrb[0].mxu0
      %1627 = vmatprep.mubr.bf16.mxu0 0
      %1628 = vmatmul.mubr.bf16.gmra.mrb[0].mxu0 %v1482
      %v1629 = vpop.f32.mrb[0].mxu0
      %v1630 = vadd.f32 %v1242, %v1629
      %v1631 = vpop.f32.mrb[0].mxu0
      %v1632 = vpop.f32.mrb[0].mxu0
      %v1633 = vadd.f32 %v1245, %v1632
      %v1634 = vpop.f32.mrb[0].mxu0
      %1635 = vmatprep.mubr.bf16.mxu0 0
      %1636 = vmatmul.mubr.bf16.gmra.mrb[0].mxu0 %v1485
      %v1637 = vpop.f32.mrb[0].mxu0
      %v1638 = vadd.f32 %v1250, %v1637
      %v1639 = vpop.f32.mrb[0].mxu0
      %v1640 = vpop.f32.mrb[0].mxu0
      %v1641 = vadd.f32 %v1253, %v1640
      %v1642 = vpop.f32.mrb[0].mxu0
      %1643 = vmatprep.mubr.bf16.mxu0 0
      %1644 = vmatmul.mubr.bf16.gmra.mrb[0].mxu0 %v1488
      %v1645 = vpop.f32.mrb[0].mxu0
      %v1646 = vadd.f32 %v1258, %v1645
      %v1647 = vpop.f32.mrb[0].mxu0
      %v1648 = vpop.f32.mrb[0].mxu0
      %v1649 = vadd.f32 %v1261, %v1648
      %v1650 = vpop.f32.mrb[0].mxu0
      %1651 = vmatprep.mubr.bf16.mxu0 0
      %1652 = vmatmul.mubr.bf16.gmra.mrb[0].mxu0 %v1491
      %v1653 = vpop.f32.mrb[0].mxu0
      %v1654 = vadd.f32 %v1266, %v1653
      %v1655 = vpop.f32.mrb[0].mxu0
      %v1656 = vpop.f32.mrb[0].mxu0
      %v1657 = vadd.f32 %v1269, %v1656
      %v1658 = vpop.f32.mrb[0].mxu0
      %1659 = vmatprep.mubr.bf16.mxu0 0
      %1660 = vmatmul.mubr.bf16.gmra.mrb[0].mxu0 %v1494
      %v1661 = vpop.f32.mrb[0].mxu0
      %v1662 = vadd.f32 %v1274, %v1661
      %v1663 = vpop.f32.mrb[0].mxu0
      %v1664 = vpop.f32.mrb[0].mxu0
      %v1665 = vadd.f32 %v1277, %v1664
      %v1666 = vpop.f32.mrb[0].mxu0
      %1667 = vmatprep.mubr.bf16.mxu0 0
      %1668 = vmatmul.mubr.bf16.gmra.mrb[0].mxu0 %v1497
      %v1669 = vpop.f32.mrb[0].mxu0
      %v1670 = vadd.f32 %v1282, %v1669
      %v1671 = vpop.f32.mrb[0].mxu0
      %v1672 = vpop.f32.mrb[0].mxu0
      %v1673 = vadd.f32 %v1285, %v1672
      %v1674 = vpop.f32.mrb[0].mxu0
      %1675 = vmatprep.mubr.bf16.mxu0 0
      %1676 = vmatmul.mubr.bf16.gmra.mrb[0].mxu0 %v1500
      %v1677 = vpop.f32.mrb[0].mxu0
      %v1678 = vadd.f32 %v1290, %v1677
      %v1679 = vpop.f32.mrb[0].mxu0
      %v1680 = vpop.f32.mrb[0].mxu0
      %v1681 = vadd.f32 %v1293, %v1680
      %v1682 = vpop.f32.mrb[0].mxu0
      %1683 = vmatprep.mubr.bf16.mxu0 0
      %1684 = vmatmul.mubr.bf16.gmra.mrb[0].mxu0 %v1503
      %v1685 = vpop.f32.mrb[0].mxu0
      %v1686 = vadd.f32 %v1298, %v1685
      %v1687 = vpop.f32.mrb[0].mxu0
      %v1688 = vpop.f32.mrb[0].mxu0
      %v1689 = vadd.f32 %v1301, %v1688
      %v1690 = vpop.f32.mrb[0].mxu0
      %1691 = vmatprep.mubr.bf16.mxu0 0
      %1692 = vmatmul.mubr.bf16.gmra.mrb[0].mxu0 %v1506
      %v1693 = vpop.f32.mrb[0].mxu0
      %v1694 = vadd.f32 %v1306, %v1693
      %v1695 = vpop.f32.mrb[0].mxu0
      %v1696 = vpop.f32.mrb[0].mxu0
      %v1697 = vadd.f32 %v1309, %v1696
      %v1698 = vpop.f32.mrb[0].mxu0
      %1699 = vmatprep.mubr.bf16.mxu0 0
      %1700 = vmatmul.mubr.bf16.gmra.mrb[0].mxu0 %v1509
      %v1701 = vpop.f32.mrb[0].mxu0
      %v1702 = vadd.f32 %v1314, %v1701
      %v1703 = vpop.f32.mrb[0].mxu0
      %v1704 = vpop.f32.mrb[0].mxu0
      %v1705 = vadd.f32 %v1317, %v1704
      %v1706 = vpop.f32.mrb[0].mxu0
      %1707 = vmatprep.mubr.bf16.mxu0 0
      %1708 = vmatmul.mubr.bf16.gmra.mrb[0].mxu0 %v1512
      %v1709 = vpop.f32.mrb[0].mxu0
      %v1710 = vadd.f32 %v1322, %v1709
      %v1711 = vpop.f32.mrb[0].mxu0
      %v1712 = vpop.f32.mrb[0].mxu0
      %v1713 = vadd.f32 %v1325, %v1712
      %v1714 = vpop.f32.mrb[0].mxu0
      %1715 = vmatprep.mubr.bf16.mxu0 0
      %1716 = vmatmul.mubr.bf16.gmra.mrb[0].mxu0 %v1515
      %v1717 = vpop.f32.mrb[0].mxu0
      %v1718 = vadd.f32 %v1330, %v1717
      %v1719 = vpop.f32.mrb[0].mxu0
      %v1720 = vpop.f32.mrb[0].mxu0
      %v1721 = vadd.f32 %v1333, %v1720
      %v1722 = vpop.f32.mrb[0].mxu0
      %1723 = vmatprep.mubr.bf16.mxu0 0
      %1724 = vmatmul.mubr.bf16.gmra.mrb[0].mxu0 %v1518
      %v1725 = vpop.f32.mrb[0].mxu0
      %v1726 = vadd.f32 %v1338, %v1725
      %v1727 = vpop.f32.mrb[0].mxu0
      %v1728 = vpop.f32.mrb[0].mxu0
      %v1729 = vadd.f32 %v1341, %v1728
      %v1730 = vpop.f32.mrb[0].mxu0
      %1731 = vmatprep.mubr.bf16.mxu0 0
      %1732 = vmatmul.mubr.bf16.gmra.mrb[0].mxu0 %v1521
      %v1733 = vpop.f32.mrb[0].mxu0
      %v1734 = vadd.f32 %v1346, %v1733
      %v1735 = vpop.f32.mrb[0].mxu0
      %v1736 = vpop.f32.mrb[0].mxu0
      %v1737 = vadd.f32 %v1349, %v1736
      %v1738 = vpop.f32.mrb[0].mxu0
      %1739 = vmatprep.mubr.bf16.mxu0 0
      %1740 = vmatmul.mubr.bf16.gmra.mrb[0].mxu0 %v1524
      %v1741 = vpop.f32.mrb[0].mxu0
      %v1742 = vadd.f32 %v1354, %v1741
      %v1743 = vpop.f32.mrb[0].mxu0
      %v1744 = vpop.f32.mrb[0].mxu0
      %v1745 = vadd.f32 %v1357, %v1744
      %v1746 = vpop.f32.mrb[0].mxu0
      %1747 = vmatprep.mubr.bf16.mxu0 0
      %1748 = vmatmul.mubr.bf16.gmra.mrb[0].mxu0 %v1527
      %v1749 = vpop.f32.mrb[0].mxu0
      %v1750 = vadd.f32 %v1362, %v1749
      %v1751 = vpop.f32.mrb[0].mxu0
      %v1752 = vpop.f32.mrb[0].mxu0
      %v1753 = vadd.f32 %v1365, %v1752
      %v1754 = vpop.f32.mrb[0].mxu0
      %1755 = vmatprep.mubr.bf16.mxu0 0
      %1756 = vmatmul.mubr.bf16.gmra.mrb[0].mxu0 %v1530
      %v1757 = vpop.f32.mrb[0].mxu0
      %v1758 = vadd.f32 %v1370, %v1757
      %v1759 = vpop.f32.mrb[0].mxu0
      %v1760 = vpop.f32.mrb[0].mxu0
      %v1761 = vadd.f32 %v1373, %v1760
      %v1762 = vpop.f32.mrb[0].mxu0
      %1763 = vmatprep.mubr.bf16.mxu0 0
      %1764 = vmatmul.mubr.bf16.gmra.mrb[0].mxu0 %v1533
      %v1765 = vpop.f32.mrb[0].mxu0
      %v1766 = vadd.f32 %v1378, %v1765
      %v1767 = vpop.f32.mrb[0].mxu0
      %v1768 = vpop.f32.mrb[0].mxu0
      %v1769 = vadd.f32 %v1381, %v1768
      %v1770 = vpop.f32.mrb[0].mxu0
      %1771 = vmatprep.mubr.bf16.mxu0 0
      %1772 = vmatmul.mubr.bf16.gmra.mrb[0].mxu0 %v1536
      %v1773 = vpop.f32.mrb[0].mxu0
      %v1774 = vadd.f32 %v1386, %v1773
      %v1775 = vpop.f32.mrb[0].mxu0
      %v1776 = vpop.f32.mrb[0].mxu0
      %v1777 = vadd.f32 %v1389, %v1776
      %v1778 = vpop.f32.mrb[0].mxu0
      %1779 = vmatprep.mubr.bf16.mxu0 0
      %1780 = vmatmul.mubr.bf16.gmra.mrb[0].mxu0 %v1539
      %v1781 = vpop.f32.mrb[0].mxu0
      %v1782 = vadd.f32 %v1394, %v1781
      %v1783 = vpop.f32.mrb[0].mxu0
      %v1784 = vpop.f32.mrb[0].mxu0
      %v1785 = vadd.f32 %v1397, %v1784
      %v1786 = vpop.f32.mrb[0].mxu0
      %1787 = vmatprep.mubr.bf16.mxu0 0
      %1788 = vmatmul.mubr.bf16.gmra.mrb[0].mxu0 %v1542
      %v1789 = vpop.f32.mrb[0].mxu0
      %v1790 = vadd.f32 %v1402, %v1789
      %v1791 = vpop.f32.mrb[0].mxu0
      %v1792 = vpop.f32.mrb[0].mxu0
      %v1793 = vadd.f32 %v1405, %v1792
      %v1794 = vpop.f32.mrb[0].mxu0
      %1795 = vmatprep.mubr.bf16.mxu0 0
      %1796 = vmatmul.mubr.bf16.gmra.mrb[0].mxu0 %v1545
      %v1797 = vpop.f32.mrb[0].mxu0
      %v1798 = vadd.f32 %v1410, %v1797
      %v1799 = vpop.f32.mrb[0].mxu0
      %v1800 = vpop.f32.mrb[0].mxu0
      %v1801 = vadd.f32 %v1413, %v1800
      %v1802 = vpop.f32.mrb[0].mxu0
      %1803 = vmatprep.mubr.bf16.mxu0 0
      %1804 = vmatmul.mubr.bf16.gmra.mrb[0].mxu0 %v1548
      %v1805 = vpop.f32.mrb[0].mxu0
      %v1806 = vadd.f32 %v1418, %v1805
      %v1807 = vpop.f32.mrb[0].mxu0
      %v1808 = vpop.f32.mrb[0].mxu0
      %v1809 = vadd.f32 %v1421, %v1808
      %v1810 = vpop.f32.mrb[0].mxu0
      %1811 = vmatprep.mubr.bf16.mxu0 0
      %1812 = vmatmul.mubr.bf16.gmra.mrb[0].mxu0 %v1551
      %v1813 = vpop.f32.mrb[0].mxu0
      %v1814 = vadd.f32 %v1426, %v1813
      %v1815 = vpop.f32.mrb[0].mxu0
      %v1816 = vpop.f32.mrb[0].mxu0
      %v1817 = vadd.f32 %v1429, %v1816
      %v1818 = vpop.f32.mrb[0].mxu0
      %1819 = vmatprep.mubr.bf16.mxu0 0
      %1820 = vmatmul.mubr.bf16.gmra.mrb[0].mxu0 %v1554
      %v1821 = vpop.f32.mrb[0].mxu0
      %v1822 = vadd.f32 %v1434, %v1821
      %v1823 = vpop.f32.mrb[0].mxu0
      %v1824 = vpop.f32.mrb[0].mxu0
      %v1825 = vadd.f32 %v1437, %v1824
      %v1826 = vpop.f32.mrb[0].mxu0
      %1827 = vmatprep.mubr.bf16.mxu0 0
      %1828 = vmatmul.mubr.bf16.gmra.mrb[0].mxu0 %v1557
      %v1829 = vpop.f32.mrb[0].mxu0
      %v1830 = vadd.f32 %v1442, %v1829
      %v1831 = vpop.f32.mrb[0].mxu0
      %v1832 = vpop.f32.mrb[0].mxu0
      %v1833 = vadd.f32 %v1445, %v1832
      %v1834 = vpop.f32.mrb[0].mxu0
      %1835 = vmatprep.mubr.bf16.mxu0 0
      %1836 = vmatmul.mubr.bf16.gmra.mrb[0].mxu0 %v1560
      %v1837 = vpop.f32.mrb[0].mxu0
      %v1838 = vadd.f32 %v1450, %v1837
      %v1839 = vpop.f32.mrb[0].mxu0
      %v1840 = vpop.f32.mrb[0].mxu0
      %v1841 = vadd.f32 %v1453, %v1840
      %v1842 = vpop.f32.mrb[0].mxu0
      %1843 = vmatprep.mubr.bf16.mxu0 0
      %1844 = vmatmul.mubr.bf16.gmra.mrb[0].mxu0 %v1563
      %v1845 = vpop.f32.mrb[0].mxu0
      %v1846 = vadd.f32 %v1458, %v1845
      %v1847 = vpop.f32.mrb[0].mxu0
      %v1848 = vpop.f32.mrb[0].mxu0
      %v1849 = vadd.f32 %v1461, %v1848
      %v1850 = vpop.f32.mrb[0].mxu0
      %1851 = vmatprep.mubr.bf16.mxu0 0
      %1852 = vmatmul.mubr.bf16.gmra.mrb[0].mxu0 %v1566
      %v1853 = vpop.f32.mrb[0].mxu0
      %v1854 = vadd.f32 %v1466, %v1853
      %v1855 = vpop.f32.mrb[0].mxu0
      %v1856 = vpop.f32.mrb[0].mxu0
      %v1857 = vadd.f32 %v1469, %v1856
      %v1858 = vpop.f32.mrb[0].mxu0
      %1859 = vdwg.mxu0
      %s1860 = scalar_lea.vmem [#allocation2], 16
      %v1861 = vld [vmem:[%s1860] sm:$0xff]
      %v1862 = vld [vmem:[%s1860 + $0x8] sm:$0xff]
      %v1863 = vld [vmem:[%s1860 + $0x10] sm:$0xff]
      %v1864 = vld [vmem:[%s1860 + $0x18] sm:$0xff]
      %v1865 = vld [vmem:[%s1860 + $0x20] sm:$0xff]
      %v1866 = vld [vmem:[%s1860 + $0x28] sm:$0xff]
      %v1867 = vld [vmem:[%s1860 + $0x30] sm:$0xff]
      %v1868 = vld [vmem:[%s1860 + $0x38] sm:$0xff]
      %v1869 = vld [vmem:[%s1860 + $0x40] sm:$0xff]
      %v1870 = vld [vmem:[%s1860 + $0x48] sm:$0xff]
      %v1871 = vld [vmem:[%s1860 + $0x50] sm:$0xff]
      %v1872 = vld [vmem:[%s1860 + $0x58] sm:$0xff]
      %v1873 = vld [vmem:[%s1860 + $0x60] sm:$0xff]
      %v1874 = vld [vmem:[%s1860 + $0x68] sm:$0xff]
      %v1875 = vld [vmem:[%s1860 + $0x70] sm:$0xff]
      %v1876 = vld [vmem:[%s1860 + $0x78] sm:$0xff]
      %v1877 = vld [vmem:[%s1860 + $0x90] sm:$0xff]
      %v1878 = vld [vmem:[%s1860 + $0x98] sm:$0xff]
      %v1879 = vld [vmem:[%s1860 + $0xa0] sm:$0xff]
      %v1880 = vld [vmem:[%s1860 + $0xa8] sm:$0xff]
      %v1881 = vld [vmem:[%s1860 + $0xb0] sm:$0xff]
      %v1882 = vld [vmem:[%s1860 + $0xb8] sm:$0xff]
      %v1883 = vld [vmem:[%s1860 + $0xc0] sm:$0xff]
      %v1884 = vld [vmem:[%s1860 + $0xc8] sm:$0xff]
      %v1885 = vld [vmem:[%s1860 + $0xd0] sm:$0xff]
      %v1886 = vld [vmem:[%s1860 + $0xd8] sm:$0xff]
      %v1887 = vld [vmem:[%s1860 + $0xe0] sm:$0xff]
      %v1888 = vld [vmem:[%s1860 + $0xe8] sm:$0xff]
      %v1889 = vld [vmem:[%s1860 + $0xf0] sm:$0xff]
      %v1890 = vld [vmem:[%s1860 + $0xf8] sm:$0xff]
      %v1891 = vld [vmem:[%s1860 + $0x100] sm:$0xff]
      %v1892 = vld [vmem:[%s1860 + $0x108] sm:$0xff]
      %s1893 = scalar_lea.vmem %s1, 4
      %v1894 = vld [vmem:[%s1893] sm:$0x3]
      %v1896 = vsel %vm1079, %v1861, 0
      %v1899 = vsel %vm1079, %v1862, 0
      %v1902 = vsel %vm1079, %v1863, 0
      %v1905 = vsel %vm1079, %v1864, 0
      %v1908 = vsel %vm1079, %v1865, 0
      %v1911 = vsel %vm1079, %v1866, 0
      %v1914 = vsel %vm1079, %v1867, 0
      %v1917 = vsel %vm1079, %v1868, 0
      %v1920 = vsel %vm1079, %v1869, 0
      %v1923 = vsel %vm1079, %v1870, 0
      %v1926 = vsel %vm1079, %v1871, 0
      %v1929 = vsel %vm1079, %v1872, 0
      %v1932 = vsel %vm1079, %v1873, 0
      %v1935 = vsel %vm1079, %v1874, 0
      %v1938 = vsel %vm1079, %v1875, 0
      %v1941 = vsel %vm1079, %v1876, 0
      %v1944 = vsel %vm1079, %v1877, 0
      %v1947 = vsel %vm1079, %v1878, 0
      %v1950 = vsel %vm1079, %v1879, 0
      %v1953 = vsel %vm1079, %v1880, 0
      %v1956 = vsel %vm1079, %v1881, 0
      %v1959 = vsel %vm1079, %v1882, 0
      %v1962 = vsel %vm1079, %v1883, 0
      %v1965 = vsel %vm1079, %v1884, 0
      %v1968 = vsel %vm1079, %v1885, 0
      %v1971 = vsel %vm1079, %v1886, 0
      %v1974 = vsel %vm1079, %v1887, 0
      %v1977 = vsel %vm1079, %v1888, 0
      %v1980 = vsel %vm1079, %v1889, 0
      %v1983 = vsel %vm1079, %v1890, 0
      %v1986 = vsel %vm1079, %v1891, 0
      %v1989 = vsel %vm1079, %v1892, 0
      %v1992 = vand.u32 %v1894, %v1179
      %1994 = vmatprep.subr.bf16.mxu0 0
      %1995 = vmatpush1.bf16.msra.mxu0 %v1992
      %1996 = vmatprep.subr.bf16.mxu0 0
      %1997 = vmatpush1.bf16.msra.mxu0 0
      %1998 = vmatprep.subr.bf16.mxu0 0
      %1999 = vmatpush1.bf16.msra.mxu0 0
      %2000 = vmatprep.subr.bf16.mxu0 0
      %2001 = vmatpush1.bf16.msra.mxu0 0
      %2002 = vmatprep.subr.bf16.mxu0 0
      %2003 = vmatpush1.bf16.msra.mxu0 0
      %2004 = vmatprep.subr.bf16.mxu0 0
      %2005 = vmatpush1.bf16.msra.mxu0 0
      %2006 = vmatprep.subr.bf16.mxu0 0
      %2007 = vmatpush1.bf16.msra.mxu0 0
      %2008 = vmatprep.subr.bf16.mxu0 0
      %2009 = vmatpush1.bf16.msra.mxu0 0
      %2010 = vmatprep.subr.bf16.mxu0 0
      %2011 = vmatpush1.bf16.msra.mxu0 0
      %2012 = vmatprep.subr.bf16.mxu0 0
      %2013 = vmatpush1.bf16.msra.mxu0 0
      %2014 = vmatprep.subr.bf16.mxu0 0
      %2015 = vmatpush1.bf16.msra.mxu0 0
      %2016 = vmatprep.subr.bf16.mxu0 0
      %2017 = vmatpush1.bf16.msra.mxu0 0
      %2018 = vmatprep.subr.bf16.mxu0 0
      %2019 = vmatpush1.bf16.msra.mxu0 0
      %2020 = vmatprep.subr.bf16.mxu0 0
      %2021 = vmatpush1.bf16.msra.mxu0 0
      %2022 = vmatprep.subr.bf16.mxu0 0
      %2023 = vmatpush1.bf16.msra.mxu0 0
      %2024 = vmatprep.subr.bf16.mxu0 0
      %2025 = vmatpush1.bf16.msra.mxu0 0
      %2026 = vmatprep.mubr.bf16.mxu0 0
      %2027 = vmatmul.mubr.bf16.gmra.mrb[0].mxu0 %v1896
      %v2028 = vpop.f32.mrb[0].mxu0
      %v2029 = vadd.f32 0.0, %v2028
      %v2030 = vpop.f32.mrb[0].mxu0
      %v2031 = vpop.f32.mrb[0].mxu0
      %v2032 = vadd.f32 0.0, %v2031
      %v2033 = vpop.f32.mrb[0].mxu0
      %2034 = vmatprep.mubr.bf16.mxu0 0
      %2035 = vmatmul.mubr.bf16.gmra.mrb[0].mxu0 %v1899
      %v2036 = vpop.f32.mrb[0].mxu0
      %v2037 = vadd.f32 0.0, %v2036
      %v2038 = vpop.f32.mrb[0].mxu0
      %v2039 = vpop.f32.mrb[0].mxu0
      %v2040 = vadd.f32 0.0, %v2039
      %v2041 = vpop.f32.mrb[0].mxu0
      %2042 = vmatprep.mubr.bf16.mxu0 0
      %2043 = vmatmul.mubr.bf16.gmra.mrb[0].mxu0 %v1902
      %v2044 = vpop.f32.mrb[0].mxu0
      %v2045 = vadd.f32 0.0, %v2044
      %v2046 = vpop.f32.mrb[0].mxu0
      %v2047 = vpop.f32.mrb[0].mxu0
      %v2048 = vadd.f32 0.0, %v2047
      %v2049 = vpop.f32.mrb[0].mxu0
      %2050 = vmatprep.mubr.bf16.mxu0 0
      %2051 = vmatmul.mubr.bf16.gmra.mrb[0].mxu0 %v1905
      %v2052 = vpop.f32.mrb[0].mxu0
      %v2053 = vadd.f32 0.0, %v2052
      %v2054 = vpop.f32.mrb[0].mxu0
      %v2055 = vpop.f32.mrb[0].mxu0
      %v2056 = vadd.f32 0.0, %v2055
      %v2057 = vpop.f32.mrb[0].mxu0
      %2058 = vmatprep.mubr.bf16.mxu0 0
      %2059 = vmatmul.mubr.bf16.gmra.mrb[0].mxu0 %v1908
      %v2060 = vpop.f32.mrb[0].mxu0
      %v2061 = vadd.f32 0.0, %v2060
      %v2062 = vpop.f32.mrb[0].mxu0
      %v2063 = vpop.f32.mrb[0].mxu0
      %v2064 = vadd.f32 0.0, %v2063
      %v2065 = vpop.f32.mrb[0].mxu0
      %2066 = vmatprep.mubr.bf16.mxu0 0
      %2067 = vmatmul.mubr.bf16.gmra.mrb[0].mxu0 %v1911
      %v2068 = vpop.f32.mrb[0].mxu0
      %v2069 = vadd.f32 0.0, %v2068
      %v2070 = vpop.f32.mrb[0].mxu0
      %v2071 = vpop.f32.mrb[0].mxu0
      %v2072 = vadd.f32 0.0, %v2071
      %v2073 = vpop.f32.mrb[0].mxu0
      %2074 = vmatprep.mubr.bf16.mxu0 0
      %2075 = vmatmul.mubr.bf16.gmra.mrb[0].mxu0 %v1914
      %v2076 = vpop.f32.mrb[0].mxu0
      %v2077 = vadd.f32 0.0, %v2076
      %v2078 = vpop.f32.mrb[0].mxu0
      %v2079 = vpop.f32.mrb[0].mxu0
      %v2080 = vadd.f32 0.0, %v2079
      %v2081 = vpop.f32.mrb[0].mxu0
      %2082 = vmatprep.mubr.bf16.mxu0 0
      %2083 = vmatmul.mubr.bf16.gmra.mrb[0].mxu0 %v1917
      %v2084 = vpop.f32.mrb[0].mxu0
      %v2085 = vadd.f32 0.0, %v2084
      %v2086 = vpop.f32.mrb[0].mxu0
      %v2087 = vpop.f32.mrb[0].mxu0
      %v2088 = vadd.f32 0.0, %v2087
      %v2089 = vpop.f32.mrb[0].mxu0
      %2090 = vmatprep.mubr.bf16.mxu0 0
      %2091 = vmatmul.mubr.bf16.gmra.mrb[0].mxu0 %v1920
      %v2092 = vpop.f32.mrb[0].mxu0
      %v2093 = vadd.f32 0.0, %v2092
      %v2094 = vpop.f32.mrb[0].mxu0
      %v2095 = vpop.f32.mrb[0].mxu0
      %v2096 = vadd.f32 0.0, %v2095
      %v2097 = vpop.f32.mrb[0].mxu0
      %2098 = vmatprep.mubr.bf16.mxu0 0
      %2099 = vmatmul.mubr.bf16.gmra.mrb[0].mxu0 %v1923
      %v2100 = vpop.f32.mrb[0].mxu0
      %v2101 = vadd.f32 0.0, %v2100
      %v2102 = vpop.f32.mrb[0].mxu0
      %v2103 = vpop.f32.mrb[0].mxu0
      %v2104 = vadd.f32 0.0, %v2103
      %v2105 = vpop.f32.mrb[0].mxu0
      %2106 = vmatprep.mubr.bf16.mxu0 0
      %2107 = vmatmul.mubr.bf16.gmra.mrb[0].mxu0 %v1926
      %v2108 = vpop.f32.mrb[0].mxu0
      %v2109 = vadd.f32 0.0, %v2108
      %v2110 = vpop.f32.mrb[0].mxu0
      %v2111 = vpop.f32.mrb[0].mxu0
      %v2112 = vadd.f32 0.0, %v2111
      %v2113 = vpop.f32.mrb[0].mxu0
      %2114 = vmatprep.mubr.bf16.mxu0 0
      %2115 = vmatmul.mubr.bf16.gmra.mrb[0].mxu0 %v1929
      %v2116 = vpop.f32.mrb[0].mxu0
      %v2117 = vadd.f32 0.0, %v2116
      %v2118 = vpop.f32.mrb[0].mxu0
      %v2119 = vpop.f32.mrb[0].mxu0
      %v2120 = vadd.f32 0.0, %v2119
      %v2121 = vpop.f32.mrb[0].mxu0
      %2122 = vmatprep.mubr.bf16.mxu0 0
      %2123 = vmatmul.mubr.bf16.gmra.mrb[0].mxu0 %v1932
      %v2124 = vpop.f32.mrb[0].mxu0
      %v2125 = vadd.f32 0.0, %v2124
      %v2126 = vpop.f32.mrb[0].mxu0
      %v2127 = vpop.f32.mrb[0].mxu0
      %v2128 = vadd.f32 0.0, %v2127
      %v2129 = vpop.f32.mrb[0].mxu0
      %2130 = vmatprep.mubr.bf16.mxu0 0
      %2131 = vmatmul.mubr.bf16.gmra.mrb[0].mxu0 %v1935
      %v2132 = vpop.f32.mrb[0].mxu0
      %v2133 = vadd.f32 0.0, %v2132
      %v2134 = vpop.f32.mrb[0].mxu0
      %v2135 = vpop.f32.mrb[0].mxu0
      %v2136 = vadd.f32 0.0, %v2135
      %v2137 = vpop.f32.mrb[0].mxu0
      %2138 = vmatprep.mubr.bf16.mxu0 0
      %2139 = vmatmul.mubr.bf16.gmra.mrb[0].mxu0 %v1938
      %v2140 = vpop.f32.mrb[0].mxu0
      %v2141 = vadd.f32 0.0, %v2140
      %v2142 = vpop.f32.mrb[0].mxu0
      %v2143 = vpop.f32.mrb[0].mxu0
      %v2144 = vadd.f32 0.0, %v2143
      %v2145 = vpop.f32.mrb[0].mxu0
      %2146 = vmatprep.mubr.bf16.mxu0 0
      %2147 = vmatmul.mubr.bf16.gmra.mrb[0].mxu0 %v1941
      %v2148 = vpop.f32.mrb[0].mxu0
      %v2149 = vadd.f32 0.0, %v2148
      %v2150 = vpop.f32.mrb[0].mxu0
      %v2151 = vpop.f32.mrb[0].mxu0
      %v2152 = vadd.f32 0.0, %v2151
      %v2153 = vpop.f32.mrb[0].mxu0
      %2154 = vmatprep.mubr.bf16.mxu0 0
      %2155 = vmatmul.mubr.bf16.gmra.mrb[0].mxu0 %v1944
      %v2156 = vpop.f32.mrb[0].mxu0
      %v2157 = vadd.f32 0.0, %v2156
      %v2158 = vpop.f32.mrb[0].mxu0
      %v2159 = vpop.f32.mrb[0].mxu0
      %v2160 = vadd.f32 0.0, %v2159
      %v2161 = vpop.f32.mrb[0].mxu0
      %2162 = vmatprep.mubr.bf16.mxu0 0
      %2163 = vmatmul.mubr.bf16.gmra.mrb[0].mxu0 %v1947
      %v2164 = vpop.f32.mrb[0].mxu0
      %v2165 = vadd.f32 0.0, %v2164
      %v2166 = vpop.f32.mrb[0].mxu0
      %v2167 = vpop.f32.mrb[0].mxu0
      %v2168 = vadd.f32 0.0, %v2167
      %v2169 = vpop.f32.mrb[0].mxu0
      %2170 = vmatprep.mubr.bf16.mxu0 0
      %2171 = vmatmul.mubr.bf16.gmra.mrb[0].mxu0 %v1950
      %v2172 = vpop.f32.mrb[0].mxu0
      %v2173 = vadd.f32 0.0, %v2172
      %v2174 = vpop.f32.mrb[0].mxu0
      %v2175 = vpop.f32.mrb[0].mxu0
      %v2176 = vadd.f32 0.0, %v2175
      %v2177 = vpop.f32.mrb[0].mxu0
      %2178 = vmatprep.mubr.bf16.mxu0 0
      %2179 = vmatmul.mubr.bf16.gmra.mrb[0].mxu0 %v1953
      %v2180 = vpop.f32.mrb[0].mxu0
      %v2181 = vadd.f32 0.0, %v2180
      %v2182 = vpop.f32.mrb[0].mxu0
      %v2183 = vpop.f32.mrb[0].mxu0
      %v2184 = vadd.f32 0.0, %v2183
      %v2185 = vpop.f32.mrb[0].mxu0
      %2186 = vmatprep.mubr.bf16.mxu0 0
      %2187 = vmatmul.mubr.bf16.gmra.mrb[0].mxu0 %v1956
      %v2188 = vpop.f32.mrb[0].mxu0
      %v2189 = vadd.f32 0.0, %v2188
      %v2190 = vpop.f32.mrb[0].mxu0
      %v2191 = vpop.f32.mrb[0].mxu0
      %v2192 = vadd.f32 0.0, %v2191
      %v2193 = vpop.f32.mrb[0].mxu0
      %2194 = vmatprep.mubr.bf16.mxu0 0
      %2195 = vmatmul.mubr.bf16.gmra.mrb[0].mxu0 %v1959
      %v2196 = vpop.f32.mrb[0].mxu0
      %v2197 = vadd.f32 0.0, %v2196
      %v2198 = vpop.f32.mrb[0].mxu0
      %v2199 = vpop.f32.mrb[0].mxu0
      %v2200 = vadd.f32 0.0, %v2199
      %v2201 = vpop.f32.mrb[0].mxu0
      %2202 = vmatprep.mubr.bf16.mxu0 0
      %2203 = vmatmul.mubr.bf16.gmra.mrb[0].mxu0 %v1962
      %v2204 = vpop.f32.mrb[0].mxu0
      %v2205 = vadd.f32 0.0, %v2204
      %v2206 = vpop.f32.mrb[0].mxu0
      %v2207 = vpop.f32.mrb[0].mxu0
      %v2208 = vadd.f32 0.0, %v2207
      %v2209 = vpop.f32.mrb[0].mxu0
      %2210 = vmatprep.mubr.bf16.mxu0 0
      %2211 = vmatmul.mubr.bf16.gmra.mrb[0].mxu0 %v1965
      %v2212 = vpop.f32.mrb[0].mxu0
      %v2213 = vadd.f32 0.0, %v2212
      %v2214 = vpop.f32.mrb[0].mxu0
      %v2215 = vpop.f32.mrb[0].mxu0
      %v2216 = vadd.f32 0.0, %v2215
      %v2217 = vpop.f32.mrb[0].mxu0
      %2218 = vmatprep.mubr.bf16.mxu0 0
      %2219 = vmatmul.mubr.bf16.gmra.mrb[0].mxu0 %v1968
      %v2220 = vpop.f32.mrb[0].mxu0
      %v2221 = vadd.f32 0.0, %v2220
      %v2222 = vpop.f32.mrb[0].mxu0
      %v2223 = vpop.f32.mrb[0].mxu0
      %v2224 = vadd.f32 0.0, %v2223
      %v2225 = vpop.f32.mrb[0].mxu0
      %2226 = vmatprep.mubr.bf16.mxu0 0
      %2227 = vmatmul.mubr.bf16.gmra.mrb[0].mxu0 %v1971
      %v2228 = vpop.f32.mrb[0].mxu0
      %v2229 = vadd.f32 0.0, %v2228
      %v2230 = vpop.f32.mrb[0].mxu0
      %v2231 = vpop.f32.mrb[0].mxu0
      %v2232 = vadd.f32 0.0, %v2231
      %v2233 = vpop.f32.mrb[0].mxu0
      %2234 = vmatprep.mubr.bf16.mxu0 0
      %2235 = vmatmul.mubr.bf16.gmra.mrb[0].mxu0 %v1974
      %v2236 = vpop.f32.mrb[0].mxu0
      %v2237 = vadd.f32 0.0, %v2236
      %v2238 = vpop.f32.mrb[0].mxu0
      %v2239 = vpop.f32.mrb[0].mxu0
      %v2240 = vadd.f32 0.0, %v2239
      %v2241 = vpop.f32.mrb[0].mxu0
      %2242 = vmatprep.mubr.bf16.mxu0 0
      %2243 = vmatmul.mubr.bf16.gmra.mrb[0].mxu0 %v1977
      %v2244 = vpop.f32.mrb[0].mxu0
      %v2245 = vadd.f32 0.0, %v2244
      %v2246 = vpop.f32.mrb[0].mxu0
      %v2247 = vpop.f32.mrb[0].mxu0
      %v2248 = vadd.f32 0.0, %v2247
      %v2249 = vpop.f32.mrb[0].mxu0
      %2250 = vmatprep.mubr.bf16.mxu0 0
      %2251 = vmatmul.mubr.bf16.gmra.mrb[0].mxu0 %v1980
      %v2252 = vpop.f32.mrb[0].mxu0
      %v2253 = vadd.f32 0.0, %v2252
      %v2254 = vpop.f32.mrb[0].mxu0
      %v2255 = vpop.f32.mrb[0].mxu0
      %v2256 = vadd.f32 0.0, %v2255
      %v2257 = vpop.f32.mrb[0].mxu0
      %2258 = vmatprep.mubr.bf16.mxu0 0
      %2259 = vmatmul.mubr.bf16.gmra.mrb[0].mxu0 %v1983
      %v2260 = vpop.f32.mrb[0].mxu0
      %v2261 = vadd.f32 0.0, %v2260
      %v2262 = vpop.f32.mrb[0].mxu0
      %v2263 = vpop.f32.mrb[0].mxu0
      %v2264 = vadd.f32 0.0, %v2263
      %v2265 = vpop.f32.mrb[0].mxu0
      %2266 = vmatprep.mubr.bf16.mxu0 0
      %2267 = vmatmul.mubr.bf16.gmra.mrb[0].mxu0 %v1986
      %v2268 = vpop.f32.mrb[0].mxu0
      %v2269 = vadd.f32 0.0, %v2268
      %v2270 = vpop.f32.mrb[0].mxu0
      %v2271 = vpop.f32.mrb[0].mxu0
      %v2272 = vadd.f32 0.0, %v2271
      %v2273 = vpop.f32.mrb[0].mxu0
      %2274 = vmatprep.mubr.bf16.mxu0 0
      %2275 = vmatmul.mubr.bf16.gmra.mrb[0].mxu0 %v1989
      %v2276 = vpop.f32.mrb[0].mxu0
      %v2277 = vadd.f32 0.0, %v2276
      %v2278 = vpop.f32.mrb[0].mxu0
      %v2279 = vpop.f32.mrb[0].mxu0
      %v2280 = vadd.f32 0.0, %v2279
      %v2281 = vpop.f32.mrb[0].mxu0
      %2282 = vdwg.mxu0
      %v2283 = vadd.f32 %v1606, %v2029
      %v2284 = vadd.f32 %v1609, %v2032
      %v2285 = vadd.f32 %v1614, %v2037
      %v2286 = vadd.f32 %v1617, %v2040
      %v2287 = vadd.f32 %v1622, %v2045
      %v2288 = vadd.f32 %v1625, %v2048
      %v2289 = vadd.f32 %v1630, %v2053
      %v2290 = vadd.f32 %v1633, %v2056
      %v2291 = vadd.f32 %v1638, %v2061
      %v2292 = vadd.f32 %v1641, %v2064
      %v2293 = vadd.f32 %v1646, %v2069
      %v2294 = vadd.f32 %v1649, %v2072
      %v2295 = vadd.f32 %v1654, %v2077
      %v2296 = vadd.f32 %v1657, %v2080
      %v2297 = vadd.f32 %v1662, %v2085
      %v2298 = vadd.f32 %v1665, %v2088
      %v2299 = vadd.f32 %v1670, %v2093
      %v2300 = vadd.f32 %v1673, %v2096
      %v2301 = vadd.f32 %v1678, %v2101
      %v2302 = vadd.f32 %v1681, %v2104
      %v2303 = vadd.f32 %v1686, %v2109
      %v2304 = vadd.f32 %v1689, %v2112
      %v2305 = vadd.f32 %v1694, %v2117
      %v2306 = vadd.f32 %v1697, %v2120
      %v2307 = vadd.f32 %v1702, %v2125
      %v2308 = vadd.f32 %v1705, %v2128
      %v2309 = vadd.f32 %v1710, %v2133
      %v2310 = vadd.f32 %v1713, %v2136
      %v2311 = vadd.f32 %v1718, %v2141
      %v2312 = vadd.f32 %v1721, %v2144
      %v2313 = vadd.f32 %v1726, %v2149
      %v2314 = vadd.f32 %v1729, %v2152
      %v2315 = vadd.f32 %v1734, %v2157
      %v2316 = vadd.f32 %v1737, %v2160
      %v2317 = vadd.f32 %v1742, %v2165
      %v2318 = vadd.f32 %v1745, %v2168
      %v2319 = vadd.f32 %v1750, %v2173
      %v2320 = vadd.f32 %v1753, %v2176
      %v2321 = vadd.f32 %v1758, %v2181
      %v2322 = vadd.f32 %v1761, %v2184
      %v2323 = vadd.f32 %v1766, %v2189
      %v2324 = vadd.f32 %v1769, %v2192
      %v2325 = vadd.f32 %v1774, %v2197
      %v2326 = vadd.f32 %v1777, %v2200
      %v2327 = vadd.f32 %v1782, %v2205
      %v2328 = vadd.f32 %v1785, %v2208
      %v2329 = vadd.f32 %v1790, %v2213
      %v2330 = vadd.f32 %v1793, %v2216
      %v2331 = vadd.f32 %v1798, %v2221
      %v2332 = vadd.f32 %v1801, %v2224
      %v2333 = vadd.f32 %v1806, %v2229
      %v2334 = vadd.f32 %v1809, %v2232
      %v2335 = vadd.f32 %v1814, %v2237
      %v2336 = vadd.f32 %v1817, %v2240
      %v2337 = vadd.f32 %v1822, %v2245
      %v2338 = vadd.f32 %v1825, %v2248
      %v2339 = vadd.f32 %v1830, %v2253
      %v2340 = vadd.f32 %v1833, %v2256
      %v2341 = vadd.f32 %v1838, %v2261
      %v2342 = vadd.f32 %v1841, %v2264
      %v2343 = vadd.f32 %v1846, %v2269
      %v2344 = vadd.f32 %v1849, %v2272
      %v2345 = vadd.f32 %v1854, %v2277
      %v2346 = vadd.f32 %v1857, %v2280
      %v2347 = vld [vmem:[%s2] sm:$0x1]
      %v2349 = vlaneseq
      %v2350 = vshrl.u32 %v2349, 7
      %v2351 = vsub.s32 0, %v2350
      %v2352 = vrot.slane %v2347, %v2351
      %v2354 = vadd.f32 %v2283, %v2352
      %v2355 = vadd.f32 %v2284, %v2352
      %v2356 = vadd.f32 %v2285, %v2352
      %v2357 = vadd.f32 %v2286, %v2352
      %v2358 = vadd.f32 %v2287, %v2352
      %v2359 = vadd.f32 %v2288, %v2352
      %v2360 = vadd.f32 %v2289, %v2352
      %v2361 = vadd.f32 %v2290, %v2352
      %v2362 = vadd.f32 %v2291, %v2352
      %v2363 = vadd.f32 %v2292, %v2352
      %v2364 = vadd.f32 %v2293, %v2352
      %v2365 = vadd.f32 %v2294, %v2352
      %v2366 = vadd.f32 %v2295, %v2352
      %v2367 = vadd.f32 %v2296, %v2352
      %v2368 = vadd.f32 %v2297, %v2352
      %v2369 = vadd.f32 %v2298, %v2352
      %v2370 = vadd.f32 %v2299, %v2352
      %v2371 = vadd.f32 %v2300, %v2352
      %v2372 = vadd.f32 %v2301, %v2352
      %v2373 = vadd.f32 %v2302, %v2352
      %v2374 = vadd.f32 %v2303, %v2352
      %v2375 = vadd.f32 %v2304, %v2352
      %v2376 = vadd.f32 %v2305, %v2352
      %v2377 = vadd.f32 %v2306, %v2352
      %v2378 = vadd.f32 %v2307, %v2352
      %v2379 = vadd.f32 %v2308, %v2352
      %v2380 = vadd.f32 %v2309, %v2352
      %v2381 = vadd.f32 %v2310, %v2352
      %v2382 = vadd.f32 %v2311, %v2352
      %v2383 = vadd.f32 %v2312, %v2352
      %v2384 = vadd.f32 %v2313, %v2352
      %v2385 = vadd.f32 %v2314, %v2352
      %v2386 = vadd.f32 %v2315, %v2352
      %v2387 = vadd.f32 %v2316, %v2352
      %v2388 = vadd.f32 %v2317, %v2352
      %v2389 = vadd.f32 %v2318, %v2352
      %v2390 = vadd.f32 %v2319, %v2352
      %v2391 = vadd.f32 %v2320, %v2352
      %v2392 = vadd.f32 %v2321, %v2352
      %v2393 = vadd.f32 %v2322, %v2352
      %v2394 = vadd.f32 %v2323, %v2352
      %v2395 = vadd.f32 %v2324, %v2352
      %v2396 = vadd.f32 %v2325, %v2352
      %v2397 = vadd.f32 %v2326, %v2352
      %v2398 = vadd.f32 %v2327, %v2352
      %v2399 = vadd.f32 %v2328, %v2352
      %v2400 = vadd.f32 %v2329, %v2352
      %v2401 = vadd.f32 %v2330, %v2352
      %v2402 = vadd.f32 %v2331, %v2352
      %v2403 = vadd.f32 %v2332, %v2352
      %v2404 = vadd.f32 %v2333, %v2352
      %v2405 = vadd.f32 %v2334, %v2352
      %v2406 = vadd.f32 %v2335, %v2352
      %v2407 = vadd.f32 %v2336, %v2352
      %v2408 = vadd.f32 %v2337, %v2352
      %v2409 = vadd.f32 %v2338, %v2352
      %v2410 = vadd.f32 %v2339, %v2352
      %v2411 = vadd.f32 %v2340, %v2352
      %v2412 = vadd.f32 %v2341, %v2352
      %v2413 = vadd.f32 %v2342, %v2352
      %v2414 = vadd.f32 %v2343, %v2352
      %v2415 = vadd.f32 %v2344, %v2352
      %v2416 = vadd.f32 %v2345, %v2352
      %v2417 = vadd.f32 %v2346, %v2352
      %vm2418 = vcmp.gt.f32.partialorder %v2354, 0.0
      %vm2419 = vcmp.gt.f32.partialorder %v2355, 0.0
      %vm2420 = vcmp.gt.f32.partialorder %v2356, 0.0
      %vm2421 = vcmp.gt.f32.partialorder %v2357, 0.0
      %vm2422 = vcmp.gt.f32.partialorder %v2358, 0.0
      %vm2423 = vcmp.gt.f32.partialorder %v2359, 0.0
      %vm2424 = vcmp.gt.f32.partialorder %v2360, 0.0
      %vm2425 = vcmp.gt.f32.partialorder %v2361, 0.0
      %vm2426 = vcmp.gt.f32.partialorder %v2362, 0.0
      %vm2427 = vcmp.gt.f32.partialorder %v2363, 0.0
      %vm2428 = vcmp.gt.f32.partialorder %v2364, 0.0
      %vm2429 = vcmp.gt.f32.partialorder %v2365, 0.0
      %vm2430 = vcmp.gt.f32.partialorder %v2366, 0.0
      %vm2431 = vcmp.gt.f32.partialorder %v2367, 0.0
      %vm2432 = vcmp.gt.f32.partialorder %v2368, 0.0
      %vm2433 = vcmp.gt.f32.partialorder %v2369, 0.0
      %vm2434 = vcmp.gt.f32.partialorder %v2370, 0.0
      %vm2435 = vcmp.gt.f32.partialorder %v2371, 0.0
      %vm2436 = vcmp.gt.f32.partialorder %v2372, 0.0
      %vm2437 = vcmp.gt.f32.partialorder %v2373, 0.0
      %vm2438 = vcmp.gt.f32.partialorder %v2374, 0.0
      %vm2439 = vcmp.gt.f32.partialorder %v2375, 0.0
      %vm2440 = vcmp.gt.f32.partialorder %v2376, 0.0
      %vm2441 = vcmp.gt.f32.partialorder %v2377, 0.0
      %vm2442 = vcmp.gt.f32.partialorder %v2378, 0.0
      %vm2443 = vcmp.gt.f32.partialorder %v2379, 0.0
      %vm2444 = vcmp.gt.f32.partialorder %v2380, 0.0
      %vm2445 = vcmp.gt.f32.partialorder %v2381, 0.0
      %vm2446 = vcmp.gt.f32.partialorder %v2382, 0.0
      %vm2447 = vcmp.gt.f32.partialorder %v2383, 0.0
      %vm2448 = vcmp.gt.f32.partialorder %v2384, 0.0
      %vm2449 = vcmp.gt.f32.partialorder %v2385, 0.0
      %vm2450 = vcmp.gt.f32.partialorder %v2386, 0.0
      %vm2451 = vcmp.gt.f32.partialorder %v2387, 0.0
      %vm2452 = vcmp.gt.f32.partialorder %v2388, 0.0
      %vm2453 = vcmp.gt.f32.partialorder %v2389, 0.0
      %vm2454 = vcmp.gt.f32.partialorder %v2390, 0.0
      %vm2455 = vcmp.gt.f32.partialorder %v2391, 0.0
      %vm2456 = vcmp.gt.f32.partialorder %v2392, 0.0
      %vm2457 = vcmp.gt.f32.partialorder %v2393, 0.0
      %vm2458 = vcmp.gt.f32.partialorder %v2394, 0.0
      %vm2459 = vcmp.gt.f32.partialorder %v2395, 0.0
      %vm2460 = vcmp.gt.f32.partialorder %v2396, 0.0
      %vm2461 = vcmp.gt.f32.partialorder %v2397, 0.0
      %vm2462 = vcmp.gt.f32.partialorder %v2398, 0.0
      %vm2463 = vcmp.gt.f32.partialorder %v2399, 0.0
      %vm2464 = vcmp.gt.f32.partialorder %v2400, 0.0
      %vm2465 = vcmp.gt.f32.partialorder %v2401, 0.0
      %vm2466 = vcmp.gt.f32.partialorder %v2402, 0.0
      %vm2467 = vcmp.gt.f32.partialorder %v2403, 0.0
      %vm2468 = vcmp.gt.f32.partialorder %v2404, 0.0
      %vm2469 = vcmp.gt.f32.partialorder %v2405, 0.0
      %vm2470 = vcmp.gt.f32.partialorder %v2406, 0.0
      %vm2471 = vcmp.gt.f32.partialorder %v2407, 0.0
      %vm2472 = vcmp.gt.f32.partialorder %v2408, 0.0
      %vm2473 = vcmp.gt.f32.partialorder %v2409, 0.0
      %vm2474 = vcmp.gt.f32.partialorder %v2410, 0.0
      %vm2475 = vcmp.gt.f32.partialorder %v2411, 0.0
      %vm2476 = vcmp.gt.f32.partialorder %v2412, 0.0
      %vm2477 = vcmp.gt.f32.partialorder %v2413, 0.0
      %vm2478 = vcmp.gt.f32.partialorder %v2414, 0.0
      %vm2479 = vcmp.gt.f32.partialorder %v2415, 0.0
      %vm2480 = vcmp.gt.f32.partialorder %v2416, 0.0
      %vm2481 = vcmp.gt.f32.partialorder %v2417, 0.0
      %v2482 = vmul.f32 %v2354, 0.01
      %v2483 = vmul.f32 %v2355, 0.01
      %v2484 = vmul.f32 %v2356, 0.01
      %v2485 = vmul.f32 %v2357, 0.01
      %v2486 = vmul.f32 %v2358, 0.01
      %v2487 = vmul.f32 %v2359, 0.01
      %v2488 = vmul.f32 %v2360, 0.01
      %v2489 = vmul.f32 %v2361, 0.01
      %v2490 = vmul.f32 %v2362, 0.01
      %v2491 = vmul.f32 %v2363, 0.01
      %v2492 = vmul.f32 %v2364, 0.01
      %v2493 = vmul.f32 %v2365, 0.01
      %v2494 = vmul.f32 %v2366, 0.01
      %v2495 = vmul.f32 %v2367, 0.01
      %v2496 = vmul.f32 %v2368, 0.01
      %v2497 = vmul.f32 %v2369, 0.01
      %v2498 = vmul.f32 %v2370, 0.01
      %v2499 = vmul.f32 %v2371, 0.01
      %v2500 = vmul.f32 %v2372, 0.01
      %v2501 = vmul.f32 %v2373, 0.01
      %v2502 = vmul.f32 %v2374, 0.01
      %v2503 = vmul.f32 %v2375, 0.01
      %v2504 = vmul.f32 %v2376, 0.01
      %v2505 = vmul.f32 %v2377, 0.01
      %v2506 = vmul.f32 %v2378, 0.01
      %v2507 = vmul.f32 %v2379, 0.01
      %v2508 = vmul.f32 %v2380, 0.01
      %v2509 = vmul.f32 %v2381, 0.01
      %v2510 = vmul.f32 %v2382, 0.01
      %v2511 = vmul.f32 %v2383, 0.01
      %v2512 = vmul.f32 %v2384, 0.01
      %v2513 = vmul.f32 %v2385, 0.01
      %v2514 = vmul.f32 %v2386, 0.01
      %v2515 = vmul.f32 %v2387, 0.01
      %v2516 = vmul.f32 %v2388, 0.01
      %v2517 = vmul.f32 %v2389, 0.01
      %v2518 = vmul.f32 %v2390, 0.01
      %v2519 = vmul.f32 %v2391, 0.01
      %v2520 = vmul.f32 %v2392, 0.01
      %v2521 = vmul.f32 %v2393, 0.01
      %v2522 = vmul.f32 %v2394, 0.01
      %v2523 = vmul.f32 %v2395, 0.01
      %v2524 = vmul.f32 %v2396, 0.01
      %v2525 = vmul.f32 %v2397, 0.01
      %v2526 = vmul.f32 %v2398, 0.01
      %v2527 = vmul.f32 %v2399, 0.01
      %v2528 = vmul.f32 %v2400, 0.01
      %v2529 = vmul.f32 %v2401, 0.01
      %v2530 = vmul.f32 %v2402, 0.01
      %v2531 = vmul.f32 %v2403, 0.01
      %v2532 = vmul.f32 %v2404, 0.01
      %v2533 = vmul.f32 %v2405, 0.01
      %v2534 = vmul.f32 %v2406, 0.01
      %v2535 = vmul.f32 %v2407, 0.01
      %v2536 = vmul.f32 %v2408, 0.01
      %v2537 = vmul.f32 %v2409, 0.01
      %v2538 = vmul.f32 %v2410, 0.01
      %v2539 = vmul.f32 %v2411, 0.01
      %v2540 = vmul.f32 %v2412, 0.01
      %v2541 = vmul.f32 %v2413, 0.01
      %v2542 = vmul.f32 %v2414, 0.01
      %v2543 = vmul.f32 %v2415, 0.01
      %v2544 = vmul.f32 %v2416, 0.01
      %v2545 = vmul.f32 %v2417, 0.01
      %v2546 = vsel %vm2418, %v2354, %v2482
      %v2547 = vsel %vm2419, %v2355, %v2483
      %v2548 = vsel %vm2420, %v2356, %v2484
      %v2549 = vsel %vm2421, %v2357, %v2485
      %v2550 = vsel %vm2422, %v2358, %v2486
      %v2551 = vsel %vm2423, %v2359, %v2487
      %v2552 = vsel %vm2424, %v2360, %v2488
      %v2553 = vsel %vm2425, %v2361, %v2489
      %v2554 = vsel %vm2426, %v2362, %v2490
      %v2555 = vsel %vm2427, %v2363, %v2491
      %v2556 = vsel %vm2428, %v2364, %v2492
      %v2557 = vsel %vm2429, %v2365, %v2493
      %v2558 = vsel %vm2430, %v2366, %v2494
      %v2559 = vsel %vm2431, %v2367, %v2495
      %v2560 = vsel %vm2432, %v2368, %v2496
      %v2561 = vsel %vm2433, %v2369, %v2497
      %v2562 = vsel %vm2434, %v2370, %v2498
      %v2563 = vsel %vm2435, %v2371, %v2499
      %v2564 = vsel %vm2436, %v2372, %v2500
      %v2565 = vsel %vm2437, %v2373, %v2501
      %v2566 = vsel %vm2438, %v2374, %v2502
      %v2567 = vsel %vm2439, %v2375, %v2503
      %v2568 = vsel %vm2440, %v2376, %v2504
      %v2569 = vsel %vm2441, %v2377, %v2505
      %v2570 = vsel %vm2442, %v2378, %v2506
      %v2571 = vsel %vm2443, %v2379, %v2507
      %v2572 = vsel %vm2444, %v2380, %v2508
      %v2573 = vsel %vm2445, %v2381, %v2509
      %v2574 = vsel %vm2446, %v2382, %v2510
      %v2575 = vsel %vm2447, %v2383, %v2511
      %v2576 = vsel %vm2448, %v2384, %v2512
      %v2577 = vsel %vm2449, %v2385, %v2513
      %v2578 = vsel %vm2450, %v2386, %v2514
      %v2579 = vsel %vm2451, %v2387, %v2515
      %v2580 = vsel %vm2452, %v2388, %v2516
      %v2581 = vsel %vm2453, %v2389, %v2517
      %v2582 = vsel %vm2454, %v2390, %v2518
      %v2583 = vsel %vm2455, %v2391, %v2519
      %v2584 = vsel %vm2456, %v2392, %v2520
      %v2585 = vsel %vm2457, %v2393, %v2521
      %v2586 = vsel %vm2458, %v2394, %v2522
      %v2587 = vsel %vm2459, %v2395, %v2523
      %v2588 = vsel %vm2460, %v2396, %v2524
      %v2589 = vsel %vm2461, %v2397, %v2525
      %v2590 = vsel %vm2462, %v2398, %v2526
      %v2591 = vsel %vm2463, %v2399, %v2527
      %v2592 = vsel %vm2464, %v2400, %v2528
      %v2593 = vsel %vm2465, %v2401, %v2529
      %v2594 = vsel %vm2466, %v2402, %v2530
      %v2595 = vsel %vm2467, %v2403, %v2531
      %v2596 = vsel %vm2468, %v2404, %v2532
      %v2597 = vsel %vm2469, %v2405, %v2533
      %v2598 = vsel %vm2470, %v2406, %v2534
      %v2599 = vsel %vm2471, %v2407, %v2535
      %v2600 = vsel %vm2472, %v2408, %v2536
      %v2601 = vsel %vm2473, %v2409, %v2537
      %v2602 = vsel %vm2474, %v2410, %v2538
      %v2603 = vsel %vm2475, %v2411, %v2539
      %v2604 = vsel %vm2476, %v2412, %v2540
      %v2605 = vsel %vm2477, %v2413, %v2541
      %v2606 = vsel %vm2478, %v2414, %v2542
      %v2607 = vsel %vm2479, %v2415, %v2543
      %v2608 = vsel %vm2480, %v2416, %v2544
      %v2609 = vsel %vm2481, %v2417, %v2545
      %vm2610 = vcmask 31744
      %2611 = vst.msk [vmem:[#allocation3] sm:$0xff] %vm2610, 0.0
      %2612 = vst.msk [vmem:[#allocation3 + $0x8] sm:$0xff] %vm2610, 0.0
      %vm2613 = vcmask 25600
      %2614 = vst.msk [vmem:[#allocation3 + $0x10] sm:$0x3] %vm2613, 0.0
      %2615 = vst.msk [vmem:[#allocation3 + $0x1b0] sm:$0xff] %vm2610, 0.0
      %2616 = vst.msk [vmem:[#allocation3 + $0x1b8] sm:$0xff] %vm2610, 0.0
      %2617 = vst.msk [vmem:[#allocation3 + $0x1c0] sm:$0x3] %vm2613, 0.0
      %s2618 = scalar_lea.vmem [#allocation3], 408
      %2619 = vst.msk [vmem:[%s2618] sm:$0xff] %vm2610, 0.0
      %2620 = vst.msk [vmem:[%s2618 + $0x8] sm:$0xff] %vm2610, 0.0
      %2621 = vst.msk [vmem:[%s2618 + $0x10] sm:$0x3] %vm2613, 0.0
      %2622 = vst.msk [vmem:[%s2618 + $0x1b0] sm:$0xff] %vm2610, 0.0
      %2623 = vst.msk [vmem:[%s2618 + $0x1b8] sm:$0xff] %vm2610, 0.0
      %2624 = vst.msk [vmem:[%s2618 + $0x1c0] sm:$0x3] %vm2613, 0.0
      %vm2625 = vcmask 24576
      %2626 = vst.msk [vmem:[#allocation3] sm:$0x1] %vm2625, 0.0
      %2627 = vst.msk [vmem:[#allocation3 + $0x18] sm:$0x1] %vm2625, 0.0
      %2628 = vst.msk [vmem:[#allocation3 + $0x30] sm:$0x1] %vm2625, 0.0
      %2629 = vst.msk [vmem:[#allocation3 + $0x48] sm:$0x1] %vm2625, 0.0
      %2630 = vst.msk [vmem:[#allocation3 + $0x60] sm:$0x1] %vm2625, 0.0
      %2631 = vst.msk [vmem:[#allocation3 + $0x78] sm:$0x1] %vm2625, 0.0
      %2632 = vst.msk [vmem:[#allocation3 + $0x90] sm:$0x1] %vm2625, 0.0
      %2633 = vst.msk [vmem:[#allocation3 + $0xa8] sm:$0x1] %vm2625, 0.0
      %2634 = vst.msk [vmem:[#allocation3 + $0xc0] sm:$0x1] %vm2625, 0.0
      %2635 = vst.msk [vmem:[#allocation3 + $0xd8] sm:$0x1] %vm2625, 0.0
      %2636 = vst.msk [vmem:[#allocation3 + $0xf0] sm:$0x1] %vm2625, 0.0
      %2637 = vst.msk [vmem:[#allocation3 + $0x108] sm:$0x1] %vm2625, 0.0
      %2638 = vst.msk [vmem:[#allocation3 + $0x120] sm:$0x1] %vm2625, 0.0
      %2639 = vst.msk [vmem:[#allocation3 + $0x138] sm:$0x1] %vm2625, 0.0
      %2640 = vst.msk [vmem:[#allocation3 + $0x150] sm:$0x1] %vm2625, 0.0
      %2641 = vst.msk [vmem:[#allocation3 + $0x168] sm:$0x1] %vm2625, 0.0
      %2642 = vst.msk [vmem:[#allocation3 + $0x180] sm:$0x1] %vm2625, 0.0
      %2643 = vst.msk [vmem:[#allocation3 + $0x198] sm:$0x1] %vm2625, 0.0
      %2644 = vst.msk [vmem:[#allocation3 + $0x1b0] sm:$0x1] %vm2625, 0.0
      %2645 = vst.msk [vmem:[#allocation3 + $0x1c8] sm:$0x1] %vm2625, 0.0
      %2646 = vst.msk [vmem:[#allocation3 + $0x1e0] sm:$0x1] %vm2625, 0.0
      %2647 = vst.msk [vmem:[#allocation3 + $0x1f8] sm:$0x1] %vm2625, 0.0
      %2648 = vst.msk [vmem:[#allocation3 + $0x210] sm:$0x1] %vm2625, 0.0
      %2649 = vst.msk [vmem:[#allocation3 + $0x228] sm:$0x1] %vm2625, 0.0
      %2650 = vst.msk [vmem:[#allocation3 + $0x240] sm:$0x1] %vm2625, 0.0
      %2651 = vst.msk [vmem:[#allocation3 + $0x258] sm:$0x1] %vm2625, 0.0
      %2652 = vst.msk [vmem:[#allocation3 + $0x270] sm:$0x1] %vm2625, 0.0
      %2653 = vst.msk [vmem:[#allocation3 + $0x288] sm:$0x1] %vm2625, 0.0
      %2654 = vst.msk [vmem:[#allocation3 + $0x2a0] sm:$0x1] %vm2625, 0.0
      %2655 = vst.msk [vmem:[#allocation3 + $0x2b8] sm:$0x1] %vm2625, 0.0
      %2656 = vst.msk [vmem:[#allocation3 + $0x2d0] sm:$0x1] %vm2625, 0.0
      %2657 = vst.msk [vmem:[#allocation3 + $0x2e8] sm:$0x1] %vm2625, 0.0
      %2658 = vst.msk [vmem:[#allocation3 + $0x300] sm:$0x1] %vm2625, 0.0
      %2659 = vst.msk [vmem:[#allocation3 + $0x318] sm:$0x1] %vm2625, 0.0
      %2660 = vst.msk [vmem:[#allocation3 + $0x330] sm:$0x1] %vm2625, 0.0
      %2661 = vst.msk [vmem:[#allocation3 + $0x348] sm:$0x1] %vm2625, 0.0
      %2662 = vst.msk [vmem:[#allocation3 + $0x11] sm:$0x1] %vm2625, 0.0
      %2663 = vst.msk [vmem:[#allocation3 + $0x29] sm:$0x1] %vm2625, 0.0
      %2664 = vst.msk [vmem:[#allocation3 + $0x41] sm:$0x1] %vm2625, 0.0
      %2665 = vst.msk [vmem:[#allocation3 + $0x59] sm:$0x1] %vm2625, 0.0
      %2666 = vst.msk [vmem:[#allocation3 + $0x71] sm:$0x1] %vm2625, 0.0
      %2667 = vst.msk [vmem:[#allocation3 + $0x89] sm:$0x1] %vm2625, 0.0
      %2668 = vst.msk [vmem:[#allocation3 + $0xa1] sm:$0x1] %vm2625, 0.0
      %2669 = vst.msk [vmem:[#allocation3 + $0xb9] sm:$0x1] %vm2625, 0.0
      %2670 = vst.msk [vmem:[#allocation3 + $0xd1] sm:$0x1] %vm2625, 0.0
      %2671 = vst.msk [vmem:[#allocation3 + $0xe9] sm:$0x1] %vm2625, 0.0
      %2672 = vst.msk [vmem:[#allocation3 + $0x101] sm:$0x1] %vm2625, 0.0
      %2673 = vst.msk [vmem:[#allocation3 + $0x119] sm:$0x1] %vm2625, 0.0
      %2674 = vst.msk [vmem:[#allocation3 + $0x131] sm:$0x1] %vm2625, 0.0
      %2675 = vst.msk [vmem:[#allocation3 + $0x149] sm:$0x1] %vm2625, 0.0
      %2676 = vst.msk [vmem:[#allocation3 + $0x161] sm:$0x1] %vm2625, 0.0
      %2677 = vst.msk [vmem:[#allocation3 + $0x179] sm:$0x1] %vm2625, 0.0
      %2678 = vst.msk [vmem:[#allocation3 + $0x191] sm:$0x1] %vm2625, 0.0
      %2679 = vst.msk [vmem:[#allocation3 + $0x1a9] sm:$0x1] %vm2625, 0.0
      %2680 = vst.msk [vmem:[#allocation3 + $0x1c1] sm:$0x1] %vm2625, 0.0
      %2681 = vst.msk [vmem:[#allocation3 + $0x1d9] sm:$0x1] %vm2625, 0.0
      %2682 = vst.msk [vmem:[#allocation3 + $0x1f1] sm:$0x1] %vm2625, 0.0
      %2683 = vst.msk [vmem:[#allocation3 + $0x209] sm:$0x1] %vm2625, 0.0
      %2684 = vst.msk [vmem:[#allocation3 + $0x221] sm:$0x1] %vm2625, 0.0
      %2685 = vst.msk [vmem:[#allocation3 + $0x239] sm:$0x1] %vm2625, 0.0
      %2686 = vst.msk [vmem:[#allocation3 + $0x251] sm:$0x1] %vm2625, 0.0
      %2687 = vst.msk [vmem:[#allocation3 + $0x269] sm:$0x1] %vm2625, 0.0
      %2688 = vst.msk [vmem:[#allocation3 + $0x281] sm:$0x1] %vm2625, 0.0
      %2689 = vst.msk [vmem:[#allocation3 + $0x299] sm:$0x1] %vm2625, 0.0
      %2690 = vst.msk [vmem:[#allocation3 + $0x2b1] sm:$0x1] %vm2625, 0.0
      %2691 = vst.msk [vmem:[#allocation3 + $0x2c9] sm:$0x1] %vm2625, 0.0
      %2692 = vst.msk [vmem:[#allocation3 + $0x2e1] sm:$0x1] %vm2625, 0.0
      %2693 = vst.msk [vmem:[#allocation3 + $0x2f9] sm:$0x1] %vm2625, 0.0
      %2694 = vst.msk [vmem:[#allocation3 + $0x311] sm:$0x1] %vm2625, 0.0
      %2695 = vst.msk [vmem:[#allocation3 + $0x329] sm:$0x1] %vm2625, 0.0
      %2696 = vst.msk [vmem:[#allocation3 + $0x341] sm:$0x1] %vm2625, 0.0
      %2697 = vst.msk [vmem:[#allocation3 + $0x359] sm:$0x1] %vm2625, 0.0
      %s2698 = scalar_lea.vmem [#allocation3], 24
      %2699 = vst.msk [vmem:[%s2698 + $0x1] sm:$0xff] %vm2610, %v2546
      %2700 = vst.msk [vmem:[%s2698 + $0x9] sm:$0xff] %vm2610, %v2547
      %2701 = vst.msk [vmem:[%s2698 + $0x19] sm:$0xff] %vm2610, %v2548
      %2702 = vst.msk [vmem:[%s2698 + $0x21] sm:$0xff] %vm2610, %v2549
      %2703 = vst.msk [vmem:[%s2698 + $0x31] sm:$0xff] %vm2610, %v2550
      %2704 = vst.msk [vmem:[%s2698 + $0x39] sm:$0xff] %vm2610, %v2551
      %2705 = vst.msk [vmem:[%s2698 + $0x49] sm:$0xff] %vm2610, %v2552
      %2706 = vst.msk [vmem:[%s2698 + $0x51] sm:$0xff] %vm2610, %v2553
      %2707 = vst.msk [vmem:[%s2698 + $0x61] sm:$0xff] %vm2610, %v2554
      %2708 = vst.msk [vmem:[%s2698 + $0x69] sm:$0xff] %vm2610, %v2555
      %2709 = vst.msk [vmem:[%s2698 + $0x79] sm:$0xff] %vm2610, %v2556
      %2710 = vst.msk [vmem:[%s2698 + $0x81] sm:$0xff] %vm2610, %v2557
      %2711 = vst.msk [vmem:[%s2698 + $0x91] sm:$0xff] %vm2610, %v2558
      %2712 = vst.msk [vmem:[%s2698 + $0x99] sm:$0xff] %vm2610, %v2559
      %2713 = vst.msk [vmem:[%s2698 + $0xa9] sm:$0xff] %vm2610, %v2560
      %2714 = vst.msk [vmem:[%s2698 + $0xb1] sm:$0xff] %vm2610, %v2561
      %2715 = vst.msk [vmem:[%s2698 + $0xc1] sm:$0xff] %vm2610, %v2562
      %2716 = vst.msk [vmem:[%s2698 + $0xc9] sm:$0xff] %vm2610, %v2563
      %2717 = vst.msk [vmem:[%s2698 + $0xd9] sm:$0xff] %vm2610, %v2564
      %2718 = vst.msk [vmem:[%s2698 + $0xe1] sm:$0xff] %vm2610, %v2565
      %2719 = vst.msk [vmem:[%s2698 + $0xf1] sm:$0xff] %vm2610, %v2566
      %2720 = vst.msk [vmem:[%s2698 + $0xf9] sm:$0xff] %vm2610, %v2567
      %2721 = vst.msk [vmem:[%s2698 + $0x109] sm:$0xff] %vm2610, %v2568
      %2722 = vst.msk [vmem:[%s2698 + $0x111] sm:$0xff] %vm2610, %v2569
      %2723 = vst.msk [vmem:[%s2698 + $0x121] sm:$0xff] %vm2610, %v2570
      %2724 = vst.msk [vmem:[%s2698 + $0x129] sm:$0xff] %vm2610, %v2571
      %2725 = vst.msk [vmem:[%s2698 + $0x139] sm:$0xff] %vm2610, %v2572
      %2726 = vst.msk [vmem:[%s2698 + $0x141] sm:$0xff] %vm2610, %v2573
      %2727 = vst.msk [vmem:[%s2698 + $0x151] sm:$0xff] %vm2610, %v2574
      %2728 = vst.msk [vmem:[%s2698 + $0x159] sm:$0xff] %vm2610, %v2575
      %2729 = vst.msk [vmem:[%s2698 + $0x169] sm:$0xff] %vm2610, %v2576
      %2730 = vst.msk [vmem:[%s2698 + $0x171] sm:$0xff] %vm2610, %v2577
      %2731 = vst.msk [vmem:[%s2698 + $0x1b1] sm:$0xff] %vm2610, %v2578
      %2732 = vst.msk [vmem:[%s2698 + $0x1b9] sm:$0xff] %vm2610, %v2579
      %2733 = vst.msk [vmem:[%s2698 + $0x1c9] sm:$0xff] %vm2610, %v2580
      %2734 = vst.msk [vmem:[%s2698 + $0x1d1] sm:$0xff] %vm2610, %v2581
      %2735 = vst.msk [vmem:[%s2698 + $0x1e1] sm:$0xff] %vm2610, %v2582
      %2736 = vst.msk [vmem:[%s2698 + $0x1e9] sm:$0xff] %vm2610, %v2583
      %2737 = vst.msk [vmem:[%s2698 + $0x1f9] sm:$0xff] %vm2610, %v2584
      %2738 = vst.msk [vmem:[%s2698 + $0x201] sm:$0xff] %vm2610, %v2585
      %2739 = vst.msk [vmem:[%s2698 + $0x211] sm:$0xff] %vm2610, %v2586
      %2740 = vst.msk [vmem:[%s2698 + $0x219] sm:$0xff] %vm2610, %v2587
      %2741 = vst.msk [vmem:[%s2698 + $0x229] sm:$0xff] %vm2610, %v2588
      %2742 = vst.msk [vmem:[%s2698 + $0x231] sm:$0xff] %vm2610, %v2589
      %2743 = vst.msk [vmem:[%s2698 + $0x241] sm:$0xff] %vm2610, %v2590
      %2744 = vst.msk [vmem:[%s2698 + $0x249] sm:$0xff] %vm2610, %v2591
      %2745 = vst.msk [vmem:[%s2698 + $0x259] sm:$0xff] %vm2610, %v2592
      %2746 = vst.msk [vmem:[%s2698 + $0x261] sm:$0xff] %vm2610, %v2593
      %2747 = vst.msk [vmem:[%s2698 + $0x271] sm:$0xff] %vm2610, %v2594
      %2748 = vst.msk [vmem:[%s2698 + $0x279] sm:$0xff] %vm2610, %v2595
      %2749 = vst.msk [vmem:[%s2698 + $0x289] sm:$0xff] %vm2610, %v2596
      %2750 = vst.msk [vmem:[%s2698 + $0x291] sm:$0xff] %vm2610, %v2597
      %2751 = vst.msk [vmem:[%s2698 + $0x2a1] sm:$0xff] %vm2610, %v2598
      %2752 = vst.msk [vmem:[%s2698 + $0x2a9] sm:$0xff] %vm2610, %v2599
      %2753 = vst.msk [vmem:[%s2698 + $0x2b9] sm:$0xff] %vm2610, %v2600
      %2754 = vst.msk [vmem:[%s2698 + $0x2c1] sm:$0xff] %vm2610, %v2601
      %2755 = vst.msk [vmem:[%s2698 + $0x2d1] sm:$0xff] %vm2610, %v2602
      %2756 = vst.msk [vmem:[%s2698 + $0x2d9] sm:$0xff] %vm2610, %v2603
      %2757 = vst.msk [vmem:[%s2698 + $0x2e9] sm:$0xff] %vm2610, %v2604
      %2758 = vst.msk [vmem:[%s2698 + $0x2f1] sm:$0xff] %vm2610, %v2605
      %2759 = vst.msk [vmem:[%s2698 + $0x301] sm:$0xff] %vm2610, %v2606
      %2760 = vst.msk [vmem:[%s2698 + $0x309] sm:$0xff] %vm2610, %v2607
      %2761 = vst.msk [vmem:[%s2698 + $0x319] sm:$0xff] %vm2610, %v2608
      %2762 = vst.msk [vmem:[%s2698 + $0x321] sm:$0xff] %vm2610, %v2609
      %s2763 = scalar_lea.vmem %s278, 24
      %v2764 = vld [vmem:[%s2763 + $0x1] sm:$0xff]
      %v2765 = vld [vmem:[%s2763 + $0x9] sm:$0xff]
      %v2766 = vld [vmem:[%s2763 + $0x19] sm:$0xff]
      %v2767 = vld [vmem:[%s2763 + $0x21] sm:$0xff]
      %v2768 = vld [vmem:[%s2763 + $0x31] sm:$0xff]
      %v2769 = vld [vmem:[%s2763 + $0x39] sm:$0xff]
      %v2770 = vld [vmem:[%s2763 + $0x49] sm:$0xff]
      %v2771 = vld [vmem:[%s2763 + $0x51] sm:$0xff]
      %v2772 = vld [vmem:[%s2763 + $0x61] sm:$0xff]
      %v2773 = vld [vmem:[%s2763 + $0x69] sm:$0xff]
      %v2774 = vld [vmem:[%s2763 + $0x79] sm:$0xff]
      %v2775 = vld [vmem:[%s2763 + $0x81] sm:$0xff]
      %v2776 = vld [vmem:[%s2763 + $0x91] sm:$0xff]
      %v2777 = vld [vmem:[%s2763 + $0x99] sm:$0xff]
      %v2778 = vld [vmem:[%s2763 + $0xa9] sm:$0xff]
      %v2779 = vld [vmem:[%s2763 + $0xb1] sm:$0xff]
      %v2780 = vld [vmem:[%s2763 + $0xc1] sm:$0xff]
      %v2781 = vld [vmem:[%s2763 + $0xc9] sm:$0xff]
      %v2782 = vld [vmem:[%s2763 + $0xd9] sm:$0xff]
      %v2783 = vld [vmem:[%s2763 + $0xe1] sm:$0xff]
      %v2784 = vld [vmem:[%s2763 + $0xf1] sm:$0xff]
      %v2785 = vld [vmem:[%s2763 + $0xf9] sm:$0xff]
      %v2786 = vld [vmem:[%s2763 + $0x109] sm:$0xff]
      %v2787 = vld [vmem:[%s2763 + $0x111] sm:$0xff]
      %v2788 = vld [vmem:[%s2763 + $0x121] sm:$0xff]
      %v2789 = vld [vmem:[%s2763 + $0x129] sm:$0xff]
      %v2790 = vld [vmem:[%s2763 + $0x139] sm:$0xff]
      %v2791 = vld [vmem:[%s2763 + $0x141] sm:$0xff]
      %v2792 = vld [vmem:[%s2763 + $0x151] sm:$0xff]
      %v2793 = vld [vmem:[%s2763 + $0x159] sm:$0xff]
      %v2794 = vld [vmem:[%s2763 + $0x169] sm:$0xff]
      %v2795 = vld [vmem:[%s2763 + $0x171] sm:$0xff]
      %v2796 = vld [vmem:[%s2763 + $0x1b1] sm:$0xff]
      %v2797 = vld [vmem:[%s2763 + $0x1b9] sm:$0xff]
      %v2798 = vld [vmem:[%s2763 + $0x1c9] sm:$0xff]
      %v2799 = vld [vmem:[%s2763 + $0x1d1] sm:$0xff]
      %v2800 = vld [vmem:[%s2763 + $0x1e1] sm:$0xff]
      %v2801 = vld [vmem:[%s2763 + $0x1e9] sm:$0xff]
      %v2802 = vld [vmem:[%s2763 + $0x1f9] sm:$0xff]
      %v2803 = vld [vmem:[%s2763 + $0x201] sm:$0xff]
      %v2804 = vld [vmem:[%s2763 + $0x211] sm:$0xff]
      %v2805 = vld [vmem:[%s2763 + $0x219] sm:$0xff]
      %v2806 = vld [vmem:[%s2763 + $0x229] sm:$0xff]
      %v2807 = vld [vmem:[%s2763 + $0x231] sm:$0xff]
      %v2808 = vld [vmem:[%s2763 + $0x241] sm:$0xff]
      %v2809 = vld [vmem:[%s2763 + $0x249] sm:$0xff]
      %v2810 = vld [vmem:[%s2763 + $0x259] sm:$0xff]
      %v2811 = vld [vmem:[%s2763 + $0x261] sm:$0xff]
      %v2812 = vld [vmem:[%s2763 + $0x271] sm:$0xff]
      %v2813 = vld [vmem:[%s2763 + $0x279] sm:$0xff]
      %v2814 = vld [vmem:[%s2763 + $0x289] sm:$0xff]
      %v2815 = vld [vmem:[%s2763 + $0x291] sm:$0xff]
      %v2816 = vld [vmem:[%s2763 + $0x2a1] sm:$0xff]
      %v2817 = vld [vmem:[%s2763 + $0x2a9] sm:$0xff]
      %v2818 = vld [vmem:[%s2763 + $0x2b9] sm:$0xff]
      %v2819 = vld [vmem:[%s2763 + $0x2c1] sm:$0xff]
      %v2820 = vld [vmem:[%s2763 + $0x2d1] sm:$0xff]
      %v2821 = vld [vmem:[%s2763 + $0x2d9] sm:$0xff]
      %v2822 = vld [vmem:[%s2763 + $0x2e9] sm:$0xff]
      %v2823 = vld [vmem:[%s2763 + $0x2f1] sm:$0xff]
      %v2824 = vld [vmem:[%s2763 + $0x301] sm:$0xff]
      %v2825 = vld [vmem:[%s2763 + $0x309] sm:$0xff]
      %v2826 = vld [vmem:[%s2763 + $0x319] sm:$0xff]
      %v2827 = vld [vmem:[%s2763 + $0x321] sm:$0xff]
      %v2828 = vpack.c.bf16 %v2765, %v2764
      %v2829 = vpack.c.bf16 %v2767, %v2766
      %v2830 = vpack.c.bf16 %v2769, %v2768
      %v2831 = vpack.c.bf16 %v2771, %v2770
      %v2832 = vpack.c.bf16 %v2773, %v2772
      %v2833 = vpack.c.bf16 %v2775, %v2774
      %v2834 = vpack.c.bf16 %v2777, %v2776
      %v2835 = vpack.c.bf16 %v2779, %v2778
      %v2836 = vpack.c.bf16 %v2781, %v2780
      %v2837 = vpack.c.bf16 %v2783, %v2782
      %v2838 = vpack.c.bf16 %v2785, %v2784
      %v2839 = vpack.c.bf16 %v2787, %v2786
      %v2840 = vpack.c.bf16 %v2789, %v2788
      %v2841 = vpack.c.bf16 %v2791, %v2790
      %v2842 = vpack.c.bf16 %v2793, %v2792
      %v2843 = vpack.c.bf16 %v2795, %v2794
      %v2844 = vpack.c.bf16 %v2797, %v2796
      %v2845 = vpack.c.bf16 %v2799, %v2798
      %v2846 = vpack.c.bf16 %v2801, %v2800
      %v2847 = vpack.c.bf16 %v2803, %v2802
      %v2848 = vpack.c.bf16 %v2805, %v2804
      %v2849 = vpack.c.bf16 %v2807, %v2806
      %v2850 = vpack.c.bf16 %v2809, %v2808
      %v2851 = vpack.c.bf16 %v2811, %v2810
      %v2852 = vpack.c.bf16 %v2813, %v2812
      %v2853 = vpack.c.bf16 %v2815, %v2814
      %v2854 = vpack.c.bf16 %v2817, %v2816
      %v2855 = vpack.c.bf16 %v2819, %v2818
      %v2856 = vpack.c.bf16 %v2821, %v2820
      %v2857 = vpack.c.bf16 %v2823, %v2822
      %v2858 = vpack.c.bf16 %v2825, %v2824
      %v2859 = vpack.c.bf16 %v2827, %v2826
      %v2860 = vld [vmem:[%s5] sm:$0x1]
      %v2861 = vld [vmem:[%s6] sm:$0x1]
      %v2863 = vlaneseq
      %v2864 = vshrl.u32 %v2863, 7
      %v2865 = vsub.s32 0, %v2864
      %v2866 = vrot.slane %v2861, %v2865
      %v2869 = vsel %vm396, %v2828, 0
      %v2872 = vsel %vm396, %v2829, 0
      %v2875 = vsel %vm396, %v2830, 0
      %v2878 = vsel %vm396, %v2831, 0
      %v2881 = vsel %vm396, %v2832, 0
      %v2884 = vsel %vm396, %v2833, 0
      %v2887 = vsel %vm396, %v2834, 0
      %v2890 = vsel %vm396, %v2835, 0
      %v2893 = vsel %vm396, %v2836, 0
      %v2896 = vsel %vm396, %v2837, 0
      %v2899 = vsel %vm396, %v2838, 0
      %v2902 = vsel %vm396, %v2839, 0
      %v2905 = vsel %vm396, %v2840, 0
      %v2908 = vsel %vm396, %v2841, 0
      %v2911 = vsel %vm396, %v2842, 0
      %v2914 = vsel %vm396, %v2843, 0
      %v2917 = vsel %vm396, %v2844, 0
      %v2920 = vsel %vm396, %v2845, 0
      %v2923 = vsel %vm396, %v2846, 0
      %v2926 = vsel %vm396, %v2847, 0
      %v2929 = vsel %vm396, %v2848, 0
      %v2932 = vsel %vm396, %v2849, 0
      %v2935 = vsel %vm396, %v2850, 0
      %v2938 = vsel %vm396, %v2851, 0
      %v2941 = vsel %vm396, %v2852, 0
      %v2944 = vsel %vm396, %v2853, 0
      %v2947 = vsel %vm396, %v2854, 0
      %v2950 = vsel %vm396, %v2855, 0
      %v2953 = vsel %vm396, %v2856, 0
      %v2956 = vsel %vm396, %v2857, 0
      %v2959 = vsel %vm396, %v2858, 0
      %v2962 = vsel %vm396, %v2859, 0
      %v2964 = vsel 0, 4294967295, 65535
      %v2965 = vsel %vm1176, %v2964, 0
      %v2967 = vand.u32 %v2860, %v2965
      %2969 = vmatprep.subr.bf16.mxu0 0
      %2970 = vmatpush1.bf16.msra.mxu0 %v2967
      %2971 = vmatprep.subr.bf16.mxu0 0
      %2972 = vmatpush1.bf16.msra.mxu0 0
      %2973 = vmatprep.subr.bf16.mxu0 0
      %2974 = vmatpush1.bf16.msra.mxu0 0
      %2975 = vmatprep.subr.bf16.mxu0 0
      %2976 = vmatpush1.bf16.msra.mxu0 0
      %2977 = vmatprep.subr.bf16.mxu0 0
      %2978 = vmatpush1.bf16.msra.mxu0 0
      %2979 = vmatprep.subr.bf16.mxu0 0
      %2980 = vmatpush1.bf16.msra.mxu0 0
      %2981 = vmatprep.subr.bf16.mxu0 0
      %2982 = vmatpush1.bf16.msra.mxu0 0
      %2983 = vmatprep.subr.bf16.mxu0 0
      %2984 = vmatpush1.bf16.msra.mxu0 0
      %2985 = vmatprep.subr.bf16.mxu0 0
      %2986 = vmatpush1.bf16.msra.mxu0 0
      %2987 = vmatprep.subr.bf16.mxu0 0
      %2988 = vmatpush1.bf16.msra.mxu0 0
      %2989 = vmatprep.subr.bf16.mxu0 0
      %2990 = vmatpush1.bf16.msra.mxu0 0
      %2991 = vmatprep.subr.bf16.mxu0 0
      %2992 = vmatpush1.bf16.msra.mxu0 0
      %2993 = vmatprep.subr.bf16.mxu0 0
      %2994 = vmatpush1.bf16.msra.mxu0 0
      %2995 = vmatprep.subr.bf16.mxu0 0
      %2996 = vmatpush1.bf16.msra.mxu0 0
      %2997 = vmatprep.subr.bf16.mxu0 0
      %2998 = vmatpush1.bf16.msra.mxu0 0
      %2999 = vmatprep.subr.bf16.mxu0 0
      %3000 = vmatpush1.bf16.msra.mxu0 0
      %3001 = vmatprep.mubr.bf16.mxu0 0
      %3002 = vmatmul.mubr.bf16.gmra.mrb[0].mxu0 %v2869
      %v3003 = vpop.f32.mrb[0].mxu0
      %v3004 = vadd.f32 %v2866, %v3003
      %v3005 = vpop.f32.mrb[0].mxu0
      %v3006 = vpop.f32.mrb[0].mxu0
      %v3007 = vadd.f32 %v2866, %v3006
      %v3008 = vpop.f32.mrb[0].mxu0
      %3009 = vmatprep.mubr.bf16.mxu0 0
      %3010 = vmatmul.mubr.bf16.gmra.mrb[0].mxu0 %v2872
      %v3011 = vpop.f32.mrb[0].mxu0
      %v3012 = vadd.f32 %v2866, %v3011
      %v3013 = vpop.f32.mrb[0].mxu0
      %v3014 = vpop.f32.mrb[0].mxu0
      %v3015 = vadd.f32 %v2866, %v3014
      %v3016 = vpop.f32.mrb[0].mxu0
      %3017 = vmatprep.mubr.bf16.mxu0 0
      %3018 = vmatmul.mubr.bf16.gmra.mrb[0].mxu0 %v2875
      %v3019 = vpop.f32.mrb[0].mxu0
      %v3020 = vadd.f32 %v2866, %v3019
      %v3021 = vpop.f32.mrb[0].mxu0
      %v3022 = vpop.f32.mrb[0].mxu0
      %v3023 = vadd.f32 %v2866, %v3022
      %v3024 = vpop.f32.mrb[0].mxu0
      %3025 = vmatprep.mubr.bf16.mxu0 0
      %3026 = vmatmul.mubr.bf16.gmra.mrb[0].mxu0 %v2878
      %v3027 = vpop.f32.mrb[0].mxu0
      %v3028 = vadd.f32 %v2866, %v3027
      %v3029 = vpop.f32.mrb[0].mxu0
      %v3030 = vpop.f32.mrb[0].mxu0
      %v3031 = vadd.f32 %v2866, %v3030
      %v3032 = vpop.f32.mrb[0].mxu0
      %3033 = vmatprep.mubr.bf16.mxu0 0
      %3034 = vmatmul.mubr.bf16.gmra.mrb[0].mxu0 %v2881
      %v3035 = vpop.f32.mrb[0].mxu0
      %v3036 = vadd.f32 %v2866, %v3035
      %v3037 = vpop.f32.mrb[0].mxu0
      %v3038 = vpop.f32.mrb[0].mxu0
      %v3039 = vadd.f32 %v2866, %v3038
      %v3040 = vpop.f32.mrb[0].mxu0
      %3041 = vmatprep.mubr.bf16.mxu0 0
      %3042 = vmatmul.mubr.bf16.gmra.mrb[0].mxu0 %v2884
      %v3043 = vpop.f32.mrb[0].mxu0
      %v3044 = vadd.f32 %v2866, %v3043
      %v3045 = vpop.f32.mrb[0].mxu0
      %v3046 = vpop.f32.mrb[0].mxu0
      %v3047 = vadd.f32 %v2866, %v3046
      %v3048 = vpop.f32.mrb[0].mxu0
      %3049 = vmatprep.mubr.bf16.mxu0 0
      %3050 = vmatmul.mubr.bf16.gmra.mrb[0].mxu0 %v2887
      %v3051 = vpop.f32.mrb[0].mxu0
      %v3052 = vadd.f32 %v2866, %v3051
      %v3053 = vpop.f32.mrb[0].mxu0
      %v3054 = vpop.f32.mrb[0].mxu0
      %v3055 = vadd.f32 %v2866, %v3054
      %v3056 = vpop.f32.mrb[0].mxu0
      %3057 = vmatprep.mubr.bf16.mxu0 0
      %3058 = vmatmul.mubr.bf16.gmra.mrb[0].mxu0 %v2890
      %v3059 = vpop.f32.mrb[0].mxu0
      %v3060 = vadd.f32 %v2866, %v3059
      %v3061 = vpop.f32.mrb[0].mxu0
      %v3062 = vpop.f32.mrb[0].mxu0
      %v3063 = vadd.f32 %v2866, %v3062
      %v3064 = vpop.f32.mrb[0].mxu0
      %3065 = vmatprep.mubr.bf16.mxu0 0
      %3066 = vmatmul.mubr.bf16.gmra.mrb[0].mxu0 %v2893
      %v3067 = vpop.f32.mrb[0].mxu0
      %v3068 = vadd.f32 %v2866, %v3067
      %v3069 = vpop.f32.mrb[0].mxu0
      %v3070 = vpop.f32.mrb[0].mxu0
      %v3071 = vadd.f32 %v2866, %v3070
      %v3072 = vpop.f32.mrb[0].mxu0
      %3073 = vmatprep.mubr.bf16.mxu0 0
      %3074 = vmatmul.mubr.bf16.gmra.mrb[0].mxu0 %v2896
      %v3075 = vpop.f32.mrb[0].mxu0
      %v3076 = vadd.f32 %v2866, %v3075
      %v3077 = vpop.f32.mrb[0].mxu0
      %v3078 = vpop.f32.mrb[0].mxu0
      %v3079 = vadd.f32 %v2866, %v3078
      %v3080 = vpop.f32.mrb[0].mxu0
      %3081 = vmatprep.mubr.bf16.mxu0 0
      %3082 = vmatmul.mubr.bf16.gmra.mrb[0].mxu0 %v2899
      %v3083 = vpop.f32.mrb[0].mxu0
      %v3084 = vadd.f32 %v2866, %v3083
      %v3085 = vpop.f32.mrb[0].mxu0
      %v3086 = vpop.f32.mrb[0].mxu0
      %v3087 = vadd.f32 %v2866, %v3086
      %v3088 = vpop.f32.mrb[0].mxu0
      %3089 = vmatprep.mubr.bf16.mxu0 0
      %3090 = vmatmul.mubr.bf16.gmra.mrb[0].mxu0 %v2902
      %v3091 = vpop.f32.mrb[0].mxu0
      %v3092 = vadd.f32 %v2866, %v3091
      %v3093 = vpop.f32.mrb[0].mxu0
      %v3094 = vpop.f32.mrb[0].mxu0
      %v3095 = vadd.f32 %v2866, %v3094
      %v3096 = vpop.f32.mrb[0].mxu0
      %3097 = vmatprep.mubr.bf16.mxu0 0
      %3098 = vmatmul.mubr.bf16.gmra.mrb[0].mxu0 %v2905
      %v3099 = vpop.f32.mrb[0].mxu0
      %v3100 = vadd.f32 %v2866, %v3099
      %v3101 = vpop.f32.mrb[0].mxu0
      %v3102 = vpop.f32.mrb[0].mxu0
      %v3103 = vadd.f32 %v2866, %v3102
      %v3104 = vpop.f32.mrb[0].mxu0
      %3105 = vmatprep.mubr.bf16.mxu0 0
      %3106 = vmatmul.mubr.bf16.gmra.mrb[0].mxu0 %v2908
      %v3107 = vpop.f32.mrb[0].mxu0
      %v3108 = vadd.f32 %v2866, %v3107
      %v3109 = vpop.f32.mrb[0].mxu0
      %v3110 = vpop.f32.mrb[0].mxu0
      %v3111 = vadd.f32 %v2866, %v3110
      %v3112 = vpop.f32.mrb[0].mxu0
      %3113 = vmatprep.mubr.bf16.mxu0 0
      %3114 = vmatmul.mubr.bf16.gmra.mrb[0].mxu0 %v2911
      %v3115 = vpop.f32.mrb[0].mxu0
      %v3116 = vadd.f32 %v2866, %v3115
      %v3117 = vpop.f32.mrb[0].mxu0
      %v3118 = vpop.f32.mrb[0].mxu0
      %v3119 = vadd.f32 %v2866, %v3118
      %v3120 = vpop.f32.mrb[0].mxu0
      %3121 = vmatprep.mubr.bf16.mxu0 0
      %3122 = vmatmul.mubr.bf16.gmra.mrb[0].mxu0 %v2914
      %v3123 = vpop.f32.mrb[0].mxu0
      %v3124 = vadd.f32 %v2866, %v3123
      %v3125 = vpop.f32.mrb[0].mxu0
      %v3126 = vpop.f32.mrb[0].mxu0
      %v3127 = vadd.f32 %v2866, %v3126
      %v3128 = vpop.f32.mrb[0].mxu0
      %3129 = vmatprep.mubr.bf16.mxu0 0
      %3130 = vmatmul.mubr.bf16.gmra.mrb[0].mxu0 %v2917
      %v3131 = vpop.f32.mrb[0].mxu0
      %v3132 = vadd.f32 %v2866, %v3131
      %v3133 = vpop.f32.mrb[0].mxu0
      %v3134 = vpop.f32.mrb[0].mxu0
      %v3135 = vadd.f32 %v2866, %v3134
      %v3136 = vpop.f32.mrb[0].mxu0
      %3137 = vmatprep.mubr.bf16.mxu0 0
      %3138 = vmatmul.mubr.bf16.gmra.mrb[0].mxu0 %v2920
      %v3139 = vpop.f32.mrb[0].mxu0
      %v3140 = vadd.f32 %v2866, %v3139
      %v3141 = vpop.f32.mrb[0].mxu0
      %v3142 = vpop.f32.mrb[0].mxu0
      %v3143 = vadd.f32 %v2866, %v3142
      %v3144 = vpop.f32.mrb[0].mxu0
      %3145 = vmatprep.mubr.bf16.mxu0 0
      %3146 = vmatmul.mubr.bf16.gmra.mrb[0].mxu0 %v2923
      %v3147 = vpop.f32.mrb[0].mxu0
      %v3148 = vadd.f32 %v2866, %v3147
      %v3149 = vpop.f32.mrb[0].mxu0
      %v3150 = vpop.f32.mrb[0].mxu0
      %v3151 = vadd.f32 %v2866, %v3150
      %v3152 = vpop.f32.mrb[0].mxu0
      %3153 = vmatprep.mubr.bf16.mxu0 0
      %3154 = vmatmul.mubr.bf16.gmra.mrb[0].mxu0 %v2926
      %v3155 = vpop.f32.mrb[0].mxu0
      %v3156 = vadd.f32 %v2866, %v3155
      %v3157 = vpop.f32.mrb[0].mxu0
      %v3158 = vpop.f32.mrb[0].mxu0
      %v3159 = vadd.f32 %v2866, %v3158
      %v3160 = vpop.f32.mrb[0].mxu0
      %3161 = vmatprep.mubr.bf16.mxu0 0
      %3162 = vmatmul.mubr.bf16.gmra.mrb[0].mxu0 %v2929
      %v3163 = vpop.f32.mrb[0].mxu0
      %v3164 = vadd.f32 %v2866, %v3163
      %v3165 = vpop.f32.mrb[0].mxu0
      %v3166 = vpop.f32.mrb[0].mxu0
      %v3167 = vadd.f32 %v2866, %v3166
      %v3168 = vpop.f32.mrb[0].mxu0
      %3169 = vmatprep.mubr.bf16.mxu0 0
      %3170 = vmatmul.mubr.bf16.gmra.mrb[0].mxu0 %v2932
      %v3171 = vpop.f32.mrb[0].mxu0
      %v3172 = vadd.f32 %v2866, %v3171
      %v3173 = vpop.f32.mrb[0].mxu0
      %v3174 = vpop.f32.mrb[0].mxu0
      %v3175 = vadd.f32 %v2866, %v3174
      %v3176 = vpop.f32.mrb[0].mxu0
      %3177 = vmatprep.mubr.bf16.mxu0 0
      %3178 = vmatmul.mubr.bf16.gmra.mrb[0].mxu0 %v2935
      %v3179 = vpop.f32.mrb[0].mxu0
      %v3180 = vadd.f32 %v2866, %v3179
      %v3181 = vpop.f32.mrb[0].mxu0
      %v3182 = vpop.f32.mrb[0].mxu0
      %v3183 = vadd.f32 %v2866, %v3182
      %v3184 = vpop.f32.mrb[0].mxu0
      %3185 = vmatprep.mubr.bf16.mxu0 0
      %3186 = vmatmul.mubr.bf16.gmra.mrb[0].mxu0 %v2938
      %v3187 = vpop.f32.mrb[0].mxu0
      %v3188 = vadd.f32 %v2866, %v3187
      %v3189 = vpop.f32.mrb[0].mxu0
      %v3190 = vpop.f32.mrb[0].mxu0
      %v3191 = vadd.f32 %v2866, %v3190
      %v3192 = vpop.f32.mrb[0].mxu0
      %3193 = vmatprep.mubr.bf16.mxu0 0
      %3194 = vmatmul.mubr.bf16.gmra.mrb[0].mxu0 %v2941
      %v3195 = vpop.f32.mrb[0].mxu0
      %v3196 = vadd.f32 %v2866, %v3195
      %v3197 = vpop.f32.mrb[0].mxu0
      %v3198 = vpop.f32.mrb[0].mxu0
      %v3199 = vadd.f32 %v2866, %v3198
      %v3200 = vpop.f32.mrb[0].mxu0
      %3201 = vmatprep.mubr.bf16.mxu0 0
      %3202 = vmatmul.mubr.bf16.gmra.mrb[0].mxu0 %v2944
      %v3203 = vpop.f32.mrb[0].mxu0
      %v3204 = vadd.f32 %v2866, %v3203
      %v3205 = vpop.f32.mrb[0].mxu0
      %v3206 = vpop.f32.mrb[0].mxu0
      %v3207 = vadd.f32 %v2866, %v3206
      %v3208 = vpop.f32.mrb[0].mxu0
      %3209 = vmatprep.mubr.bf16.mxu0 0
      %3210 = vmatmul.mubr.bf16.gmra.mrb[0].mxu0 %v2947
      %v3211 = vpop.f32.mrb[0].mxu0
      %v3212 = vadd.f32 %v2866, %v3211
      %v3213 = vpop.f32.mrb[0].mxu0
      %v3214 = vpop.f32.mrb[0].mxu0
      %v3215 = vadd.f32 %v2866, %v3214
      %v3216 = vpop.f32.mrb[0].mxu0
      %3217 = vmatprep.mubr.bf16.mxu0 0
      %3218 = vmatmul.mubr.bf16.gmra.mrb[0].mxu0 %v2950
      %v3219 = vpop.f32.mrb[0].mxu0
      %v3220 = vadd.f32 %v2866, %v3219
      %v3221 = vpop.f32.mrb[0].mxu0
      %v3222 = vpop.f32.mrb[0].mxu0
      %v3223 = vadd.f32 %v2866, %v3222
      %v3224 = vpop.f32.mrb[0].mxu0
      %3225 = vmatprep.mubr.bf16.mxu0 0
      %3226 = vmatmul.mubr.bf16.gmra.mrb[0].mxu0 %v2953
      %v3227 = vpop.f32.mrb[0].mxu0
      %v3228 = vadd.f32 %v2866, %v3227
      %v3229 = vpop.f32.mrb[0].mxu0
      %v3230 = vpop.f32.mrb[0].mxu0
      %v3231 = vadd.f32 %v2866, %v3230
      %v3232 = vpop.f32.mrb[0].mxu0
      %3233 = vmatprep.mubr.bf16.mxu0 0
      %3234 = vmatmul.mubr.bf16.gmra.mrb[0].mxu0 %v2956
      %v3235 = vpop.f32.mrb[0].mxu0
      %v3236 = vadd.f32 %v2866, %v3235
      %v3237 = vpop.f32.mrb[0].mxu0
      %v3238 = vpop.f32.mrb[0].mxu0
      %v3239 = vadd.f32 %v2866, %v3238
      %v3240 = vpop.f32.mrb[0].mxu0
      %3241 = vmatprep.mubr.bf16.mxu0 0
      %3242 = vmatmul.mubr.bf16.gmra.mrb[0].mxu0 %v2959
      %v3243 = vpop.f32.mrb[0].mxu0
      %v3244 = vadd.f32 %v2866, %v3243
      %v3245 = vpop.f32.mrb[0].mxu0
      %v3246 = vpop.f32.mrb[0].mxu0
      %v3247 = vadd.f32 %v2866, %v3246
      %v3248 = vpop.f32.mrb[0].mxu0
      %3249 = vmatprep.mubr.bf16.mxu0 0
      %3250 = vmatmul.mubr.bf16.gmra.mrb[0].mxu0 %v2962
      %v3251 = vpop.f32.mrb[0].mxu0
      %v3252 = vadd.f32 %v2866, %v3251
      %v3253 = vpop.f32.mrb[0].mxu0
      %v3254 = vpop.f32.mrb[0].mxu0
      %v3255 = vadd.f32 %v2866, %v3254
      %v3256 = vpop.f32.mrb[0].mxu0
      %3257 = vdwg.mxu0
      %v3258 = vld [vmem:[#allocation3] sm:$0xff]
      %v3259 = vld [vmem:[#allocation3 + $0x8] sm:$0xff]
      %v3260 = vld [vmem:[#allocation3 + $0x18] sm:$0xff]
      %v3261 = vld [vmem:[#allocation3 + $0x20] sm:$0xff]
      %v3262 = vld [vmem:[#allocation3 + $0x30] sm:$0xff]
      %v3263 = vld [vmem:[#allocation3 + $0x38] sm:$0xff]
      %v3264 = vld [vmem:[#allocation3 + $0x48] sm:$0xff]
      %v3265 = vld [vmem:[#allocation3 + $0x50] sm:$0xff]
      %v3266 = vld [vmem:[#allocation3 + $0x60] sm:$0xff]
      %v3267 = vld [vmem:[#allocation3 + $0x68] sm:$0xff]
      %v3268 = vld [vmem:[#allocation3 + $0x78] sm:$0xff]
      %v3269 = vld [vmem:[#allocation3 + $0x80] sm:$0xff]
      %v3270 = vld [vmem:[#allocation3 + $0x90] sm:$0xff]
      %v3271 = vld [vmem:[#allocation3 + $0x98] sm:$0xff]
      %v3272 = vld [vmem:[#allocation3 + $0xa8] sm:$0xff]
      %v3273 = vld [vmem:[#allocation3 + $0xb0] sm:$0xff]
      %v3274 = vld [vmem:[#allocation3 + $0xc0] sm:$0xff]
      %v3275 = vld [vmem:[#allocation3 + $0xc8] sm:$0xff]
      %v3276 = vld [vmem:[#allocation3 + $0xd8] sm:$0xff]
      %v3277 = vld [vmem:[#allocation3 + $0xe0] sm:$0xff]
      %v3278 = vld [vmem:[#allocation3 + $0xf0] sm:$0xff]
      %v3279 = vld [vmem:[#allocation3 + $0xf8] sm:$0xff]
      %v3280 = vld [vmem:[#allocation3 + $0x108] sm:$0xff]
      %v3281 = vld [vmem:[#allocation3 + $0x110] sm:$0xff]
      %v3282 = vld [vmem:[#allocation3 + $0x120] sm:$0xff]
      %v3283 = vld [vmem:[#allocation3 + $0x128] sm:$0xff]
      %v3284 = vld [vmem:[#allocation3 + $0x138] sm:$0xff]
      %v3285 = vld [vmem:[#allocation3 + $0x140] sm:$0xff]
      %v3286 = vld [vmem:[#allocation3 + $0x150] sm:$0xff]
      %v3287 = vld [vmem:[#allocation3 + $0x158] sm:$0xff]
      %v3288 = vld [vmem:[#allocation3 + $0x168] sm:$0xff]
      %v3289 = vld [vmem:[#allocation3 + $0x170] sm:$0xff]
      %v3290 = vld [vmem:[#allocation3 + $0x180] sm:$0xff]
      %v3291 = vld [vmem:[#allocation3 + $0x188] sm:$0xff]
      %v3292 = vld [vmem:[#allocation3 + $0x198] sm:$0xff]
      %v3293 = vld [vmem:[#allocation3 + $0x1a0] sm:$0xff]
      %v3294 = vld [vmem:[#allocation3 + $0x1b0] sm:$0xff]
      %v3295 = vld [vmem:[#allocation3 + $0x1b8] sm:$0xff]
      %v3296 = vld [vmem:[#allocation3 + $0x1c8] sm:$0xff]
      %v3297 = vld [vmem:[#allocation3 + $0x1d0] sm:$0xff]
      %v3298 = vld [vmem:[#allocation3 + $0x1e0] sm:$0xff]
      %v3299 = vld [vmem:[#allocation3 + $0x1e8] sm:$0xff]
      %v3300 = vld [vmem:[#allocation3 + $0x1f8] sm:$0xff]
      %v3301 = vld [vmem:[#allocation3 + $0x200] sm:$0xff]
      %v3302 = vld [vmem:[#allocation3 + $0x210] sm:$0xff]
      %v3303 = vld [vmem:[#allocation3 + $0x218] sm:$0xff]
      %v3304 = vld [vmem:[#allocation3 + $0x228] sm:$0xff]
      %v3305 = vld [vmem:[#allocation3 + $0x230] sm:$0xff]
      %v3306 = vld [vmem:[#allocation3 + $0x240] sm:$0xff]
      %v3307 = vld [vmem:[#allocation3 + $0x248] sm:$0xff]
      %v3308 = vld [vmem:[#allocation3 + $0x258] sm:$0xff]
      %v3309 = vld [vmem:[#allocation3 + $0x260] sm:$0xff]
      %v3310 = vld [vmem:[#allocation3 + $0x270] sm:$0xff]
      %v3311 = vld [vmem:[#allocation3 + $0x278] sm:$0xff]
      %v3312 = vld [vmem:[#allocation3 + $0x288] sm:$0xff]
      %v3313 = vld [vmem:[#allocation3 + $0x290] sm:$0xff]
      %v3314 = vld [vmem:[#allocation3 + $0x2a0] sm:$0xff]
      %v3315 = vld [vmem:[#allocation3 + $0x2a8] sm:$0xff]
      %v3316 = vld [vmem:[#allocation3 + $0x2b8] sm:$0xff]
      %v3317 = vld [vmem:[#allocation3 + $0x2c0] sm:$0xff]
      %v3318 = vld [vmem:[#allocation3 + $0x2d0] sm:$0xff]
      %v3319 = vld [vmem:[#allocation3 + $0x2d8] sm:$0xff]
      %v3320 = vld [vmem:[#allocation3 + $0x2e8] sm:$0xff]
      %v3321 = vld [vmem:[#allocation3 + $0x2f0] sm:$0xff]
      %v3322 = vld [vmem:[#allocation3 + $0x300] sm:$0xff]
      %v3323 = vld [vmem:[#allocation3 + $0x308] sm:$0xff]
      %v3324 = vld [vmem:[#allocation3 + $0x318] sm:$0xff]
      %v3325 = vld [vmem:[#allocation3 + $0x320] sm:$0xff]
      %v3326 = vld [vmem:[#allocation3 + $0x330] sm:$0xff]
      %v3327 = vld [vmem:[#allocation3 + $0x338] sm:$0xff]
      %v3328 = vld [vmem:[#allocation3 + $0x348] sm:$0xff]
      %v3329 = vld [vmem:[#allocation3 + $0x350] sm:$0xff]
      %v3330 = vpack.c.bf16 %v3259, %v3258
      %v3331 = vpack.c.bf16 %v3261, %v3260
      %v3332 = vpack.c.bf16 %v3263, %v3262
      %v3333 = vpack.c.bf16 %v3265, %v3264
      %v3334 = vpack.c.bf16 %v3267, %v3266
      %v3335 = vpack.c.bf16 %v3269, %v3268
      %v3336 = vpack.c.bf16 %v3271, %v3270
      %v3337 = vpack.c.bf16 %v3273, %v3272
      %v3338 = vpack.c.bf16 %v3275, %v3274
      %v3339 = vpack.c.bf16 %v3277, %v3276
      %v3340 = vpack.c.bf16 %v3279, %v3278
      %v3341 = vpack.c.bf16 %v3281, %v3280
      %v3342 = vpack.c.bf16 %v3283, %v3282
      %v3343 = vpack.c.bf16 %v3285, %v3284
      %v3344 = vpack.c.bf16 %v3287, %v3286
      %v3345 = vpack.c.bf16 %v3289, %v3288
      %v3346 = vpack.c.bf16 %v3291, %v3290
      %v3347 = vpack.c.bf16 %v3293, %v3292
      %v3348 = vpack.c.bf16 %v3295, %v3294
      %v3349 = vpack.c.bf16 %v3297, %v3296
      %v3350 = vpack.c.bf16 %v3299, %v3298
      %v3351 = vpack.c.bf16 %v3301, %v3300
      %v3352 = vpack.c.bf16 %v3303, %v3302
      %v3353 = vpack.c.bf16 %v3305, %v3304
      %v3354 = vpack.c.bf16 %v3307, %v3306
      %v3355 = vpack.c.bf16 %v3309, %v3308
      %v3356 = vpack.c.bf16 %v3311, %v3310
      %v3357 = vpack.c.bf16 %v3313, %v3312
      %v3358 = vpack.c.bf16 %v3315, %v3314
      %v3359 = vpack.c.bf16 %v3317, %v3316
      %v3360 = vpack.c.bf16 %v3319, %v3318
      %v3361 = vpack.c.bf16 %v3321, %v3320
      %v3362 = vpack.c.bf16 %v3323, %v3322
      %v3363 = vpack.c.bf16 %v3325, %v3324
      %v3364 = vpack.c.bf16 %v3327, %v3326
      %v3365 = vpack.c.bf16 %v3329, %v3328
      %3366 = vst.msk [vmem:[#allocation4] sm:$0xff] %vm2610, %v3330
      %3367 = vst.msk [vmem:[#allocation4 + $0x8] sm:$0xff] %vm2610, %v3331
      %3368 = vst.msk [vmem:[#allocation4 + $0x10] sm:$0xff] %vm2610, %v3332
      %3369 = vst.msk [vmem:[#allocation4 + $0x18] sm:$0xff] %vm2610, %v3333
      %3370 = vst.msk [vmem:[#allocation4 + $0x20] sm:$0xff] %vm2610, %v3334
      %3371 = vst.msk [vmem:[#allocation4 + $0x28] sm:$0xff] %vm2610, %v3335
      %3372 = vst.msk [vmem:[#allocation4 + $0x30] sm:$0xff] %vm2610, %v3336
      %3373 = vst.msk [vmem:[#allocation4 + $0x38] sm:$0xff] %vm2610, %v3337
      %3374 = vst.msk [vmem:[#allocation4 + $0x40] sm:$0xff] %vm2610, %v3338
      %3375 = vst.msk [vmem:[#allocation4 + $0x48] sm:$0xff] %vm2610, %v3339
      %3376 = vst.msk [vmem:[#allocation4 + $0x50] sm:$0xff] %vm2610, %v3340
      %3377 = vst.msk [vmem:[#allocation4 + $0x58] sm:$0xff] %vm2610, %v3341
      %3378 = vst.msk [vmem:[#allocation4 + $0x60] sm:$0xff] %vm2610, %v3342
      %3379 = vst.msk [vmem:[#allocation4 + $0x68] sm:$0xff] %vm2610, %v3343
      %3380 = vst.msk [vmem:[#allocation4 + $0x70] sm:$0xff] %vm2610, %v3344
      %3381 = vst.msk [vmem:[#allocation4 + $0x78] sm:$0xff] %vm2610, %v3345
      %3382 = vst.msk [vmem:[#allocation4 + $0x80] sm:$0xff] %vm2610, %v3346
      %3383 = vst.msk [vmem:[#allocation4 + $0x88] sm:$0xff] %vm2610, %v3347
      %3384 = vst.msk [vmem:[#allocation4 + $0x90] sm:$0xff] %vm2610, %v3348
      %3385 = vst.msk [vmem:[#allocation4 + $0x98] sm:$0xff] %vm2610, %v3349
      %3386 = vst.msk [vmem:[#allocation4 + $0xa0] sm:$0xff] %vm2610, %v3350
      %3387 = vst.msk [vmem:[#allocation4 + $0xa8] sm:$0xff] %vm2610, %v3351
      %3388 = vst.msk [vmem:[#allocation4 + $0xb0] sm:$0xff] %vm2610, %v3352
      %3389 = vst.msk [vmem:[#allocation4 + $0xb8] sm:$0xff] %vm2610, %v3353
      %3390 = vst.msk [vmem:[#allocation4 + $0xc0] sm:$0xff] %vm2610, %v3354
      %3391 = vst.msk [vmem:[#allocation4 + $0xc8] sm:$0xff] %vm2610, %v3355
      %3392 = vst.msk [vmem:[#allocation4 + $0xd0] sm:$0xff] %vm2610, %v3356
      %3393 = vst.msk [vmem:[#allocation4 + $0xd8] sm:$0xff] %vm2610, %v3357
      %3394 = vst.msk [vmem:[#allocation4 + $0xe0] sm:$0xff] %vm2610, %v3358
      %3395 = vst.msk [vmem:[#allocation4 + $0xe8] sm:$0xff] %vm2610, %v3359
      %3396 = vst.msk [vmem:[#allocation4 + $0xf0] sm:$0xff] %vm2610, %v3360
      %3397 = vst.msk [vmem:[#allocation4 + $0xf8] sm:$0xff] %vm2610, %v3361
      %3398 = vst.msk [vmem:[#allocation4 + $0x100] sm:$0xff] %vm2610, %v3362
      %3399 = vst.msk [vmem:[#allocation4 + $0x108] sm:$0xff] %vm2610, %v3363
      %3400 = vst.msk [vmem:[#allocation4 + $0x110] sm:$0xff] %vm2610, %v3364
      %3401 = vst.msk [vmem:[#allocation4 + $0x118] sm:$0xff] %vm2610, %v3365
      %v3402 = vld [vmem:[#allocation3 + $0x1] sm:$0xff]
      %v3403 = vld [vmem:[#allocation3 + $0x9] sm:$0xff]
      %v3404 = vld [vmem:[#allocation3 + $0x19] sm:$0xff]
      %v3405 = vld [vmem:[#allocation3 + $0x21] sm:$0xff]
      %v3406 = vld [vmem:[#allocation3 + $0x31] sm:$0xff]
      %v3407 = vld [vmem:[#allocation3 + $0x39] sm:$0xff]
      %v3408 = vld [vmem:[#allocation3 + $0x49] sm:$0xff]
      %v3409 = vld [vmem:[#allocation3 + $0x51] sm:$0xff]
      %v3410 = vld [vmem:[#allocation3 + $0x61] sm:$0xff]
      %v3411 = vld [vmem:[#allocation3 + $0x69] sm:$0xff]
      %v3412 = vld [vmem:[#allocation3 + $0x79] sm:$0xff]
      %v3413 = vld [vmem:[#allocation3 + $0x81] sm:$0xff]
      %v3414 = vld [vmem:[#allocation3 + $0x91] sm:$0xff]
      %v3415 = vld [vmem:[#allocation3 + $0x99] sm:$0xff]
      %v3416 = vld [vmem:[#allocation3 + $0xa9] sm:$0xff]
      %v3417 = vld [vmem:[#allocation3 + $0xb1] sm:$0xff]
      %v3418 = vld [vmem:[#allocation3 + $0xc1] sm:$0xff]
      %v3419 = vld [vmem:[#allocation3 + $0xc9] sm:$0xff]
      %v3420 = vld [vmem:[#allocation3 + $0xd9] sm:$0xff]
      %v3421 = vld [vmem:[#allocation3 + $0xe1] sm:$0xff]
      %v3422 = vld [vmem:[#allocation3 + $0xf1] sm:$0xff]
      %v3423 = vld [vmem:[#allocation3 + $0xf9] sm:$0xff]
      %v3424 = vld [vmem:[#allocation3 + $0x109] sm:$0xff]
      %v3425 = vld [vmem:[#allocation3 + $0x111] sm:$0xff]
      %v3426 = vld [vmem:[#allocation3 + $0x121] sm:$0xff]
      %v3427 = vld [vmem:[#allocation3 + $0x129] sm:$0xff]
      %v3428 = vld [vmem:[#allocation3 + $0x139] sm:$0xff]
      %v3429 = vld [vmem:[#allocation3 + $0x141] sm:$0xff]
      %v3430 = vld [vmem:[#allocation3 + $0x151] sm:$0xff]
      %v3431 = vld [vmem:[#allocation3 + $0x159] sm:$0xff]
      %v3432 = vld [vmem:[#allocation3 + $0x169] sm:$0xff]
      %v3433 = vld [vmem:[#allocation3 + $0x171] sm:$0xff]
      %v3434 = vld [vmem:[#allocation3 + $0x181] sm:$0xff]
      %v3435 = vld [vmem:[#allocation3 + $0x189] sm:$0xff]
      %v3436 = vld [vmem:[#allocation3 + $0x199] sm:$0xff]
      %v3437 = vld [vmem:[#allocation3 + $0x1a1] sm:$0xff]
      %v3438 = vld [vmem:[#allocation3 + $0x1b1] sm:$0xff]
      %v3439 = vld [vmem:[#allocation3 + $0x1b9] sm:$0xff]
      %v3440 = vld [vmem:[#allocation3 + $0x1c9] sm:$0xff]
      %v3441 = vld [vmem:[#allocation3 + $0x1d1] sm:$0xff]
      %v3442 = vld [vmem:[#allocation3 + $0x1e1] sm:$0xff]
      %v3443 = vld [vmem:[#allocation3 + $0x1e9] sm:$0xff]
      %v3444 = vld [vmem:[#allocation3 + $0x1f9] sm:$0xff]
      %v3445 = vld [vmem:[#allocation3 + $0x201] sm:$0xff]
      %v3446 = vld [vmem:[#allocation3 + $0x211] sm:$0xff]
      %v3447 = vld [vmem:[#allocation3 + $0x219] sm:$0xff]
      %v3448 = vld [vmem:[#allocation3 + $0x229] sm:$0xff]
      %v3449 = vld [vmem:[#allocation3 + $0x231] sm:$0xff]
      %v3450 = vld [vmem:[#allocation3 + $0x241] sm:$0xff]
      %v3451 = vld [vmem:[#allocation3 + $0x249] sm:$0xff]
      %v3452 = vld [vmem:[#allocation3 + $0x259] sm:$0xff]
      %v3453 = vld [vmem:[#allocation3 + $0x261] sm:$0xff]
      %v3454 = vld [vmem:[#allocation3 + $0x271] sm:$0xff]
      %v3455 = vld [vmem:[#allocation3 + $0x279] sm:$0xff]
      %v3456 = vld [vmem:[#allocation3 + $0x289] sm:$0xff]
      %v3457 = vld [vmem:[#allocation3 + $0x291] sm:$0xff]
      %v3458 = vld [vmem:[#allocation3 + $0x2a1] sm:$0xff]
      %v3459 = vld [vmem:[#allocation3 + $0x2a9] sm:$0xff]
      %v3460 = vld [vmem:[#allocation3 + $0x2b9] sm:$0xff]
      %v3461 = vld [vmem:[#allocation3 + $0x2c1] sm:$0xff]
      %v3462 = vld [vmem:[#allocation3 + $0x2d1] sm:$0xff]
      %v3463 = vld [vmem:[#allocation3 + $0x2d9] sm:$0xff]
      %v3464 = vld [vmem:[#allocation3 + $0x2e9] sm:$0xff]
      %v3465 = vld [vmem:[#allocation3 + $0x2f1] sm:$0xff]
      %v3466 = vld [vmem:[#allocation3 + $0x301] sm:$0xff]
      %v3467 = vld [vmem:[#allocation3 + $0x309] sm:$0xff]
      %v3468 = vld [vmem:[#allocation3 + $0x319] sm:$0xff]
      %v3469 = vld [vmem:[#allocation3 + $0x321] sm:$0xff]
      %v3470 = vld [vmem:[#allocation3 + $0x331] sm:$0xff]
      %v3471 = vld [vmem:[#allocation3 + $0x339] sm:$0xff]
      %v3472 = vld [vmem:[#allocation3 + $0x349] sm:$0xff]
      %v3473 = vld [vmem:[#allocation3 + $0x351] sm:$0xff]
      %v3474 = vpack.c.bf16 %v3403, %v3402
      %v3475 = vpack.c.bf16 %v3405, %v3404
      %v3476 = vpack.c.bf16 %v3407, %v3406
      %v3477 = vpack.c.bf16 %v3409, %v3408
      %v3478 = vpack.c.bf16 %v3411, %v3410
      %v3479 = vpack.c.bf16 %v3413, %v3412
      %v3480 = vpack.c.bf16 %v3415, %v3414
      %v3481 = vpack.c.bf16 %v3417, %v3416
      %v3482 = vpack.c.bf16 %v3419, %v3418
      %v3483 = vpack.c.bf16 %v3421, %v3420
      %v3484 = vpack.c.bf16 %v3423, %v3422
      %v3485 = vpack.c.bf16 %v3425, %v3424
      %v3486 = vpack.c.bf16 %v3427, %v3426
      %v3487 = vpack.c.bf16 %v3429, %v3428
      %v3488 = vpack.c.bf16 %v3431, %v3430
      %v3489 = vpack.c.bf16 %v3433, %v3432
      %v3490 = vpack.c.bf16 %v3435, %v3434
      %v3491 = vpack.c.bf16 %v3437, %v3436
      %v3492 = vpack.c.bf16 %v3439, %v3438
      %v3493 = vpack.c.bf16 %v3441, %v3440
      %v3494 = vpack.c.bf16 %v3443, %v3442
      %v3495 = vpack.c.bf16 %v3445, %v3444
      %v3496 = vpack.c.bf16 %v3447, %v3446
      %v3497 = vpack.c.bf16 %v3449, %v3448
      %v3498 = vpack.c.bf16 %v3451, %v3450
      %v3499 = vpack.c.bf16 %v3453, %v3452
      %v3500 = vpack.c.bf16 %v3455, %v3454
      %v3501 = vpack.c.bf16 %v3457, %v3456
      %v3502 = vpack.c.bf16 %v3459, %v3458
      %v3503 = vpack.c.bf16 %v3461, %v3460
      %v3504 = vpack.c.bf16 %v3463, %v3462
      %v3505 = vpack.c.bf16 %v3465, %v3464
      %v3506 = vpack.c.bf16 %v3467, %v3466
      %v3507 = vpack.c.bf16 %v3469, %v3468
      %v3508 = vpack.c.bf16 %v3471, %v3470
      %v3509 = vpack.c.bf16 %v3473, %v3472
      %3546 = vrot.lane.b32.xlu0 %v3474, 4
      %v3547 = vpop.permute.xlu0 %3546
      %3548 = vrot.lane.b32.xlu0 %v3475, 4
      %v3549 = vpop.permute.xlu0 %3548
      %3550 = vrot.lane.b32.xlu0 %v3476, 4
      %v3551 = vpop.permute.xlu0 %3550
      %3552 = vrot.lane.b32.xlu0 %v3477, 4
      %v3553 = vpop.permute.xlu0 %3552
      %3554 = vrot.lane.b32.xlu0 %v3478, 4
      %v3555 = vpop.permute.xlu0 %3554
      %3556 = vrot.lane.b32.xlu0 %v3479, 4
      %v3557 = vpop.permute.xlu0 %3556
      %3558 = vrot.lane.b32.xlu0 %v3480, 4
      %v3559 = vpop.permute.xlu0 %3558
      %3560 = vrot.lane.b32.xlu0 %v3481, 4
      %v3561 = vpop.permute.xlu0 %3560
      %3562 = vrot.lane.b32.xlu0 %v3482, 4
      %v3563 = vpop.permute.xlu0 %3562
      %3564 = vrot.lane.b32.xlu0 %v3483, 4
      %v3565 = vpop.permute.xlu0 %3564
      %3566 = vrot.lane.b32.xlu0 %v3484, 4
      %v3567 = vpop.permute.xlu0 %3566
      %3568 = vrot.lane.b32.xlu0 %v3485, 4
      %v3569 = vpop.permute.xlu0 %3568
      %3570 = vrot.lane.b32.xlu0 %v3486, 4
      %v3571 = vpop.permute.xlu0 %3570
      %3572 = vrot.lane.b32.xlu0 %v3487, 4
      %v3573 = vpop.permute.xlu0 %3572
      %3574 = vrot.lane.b32.xlu0 %v3488, 4
      %v3575 = vpop.permute.xlu0 %3574
      %3576 = vrot.lane.b32.xlu0 %v3489, 4
      %v3577 = vpop.permute.xlu0 %3576
      %3578 = vrot.lane.b32.xlu0 %v3490, 4
      %v3579 = vpop.permute.xlu0 %3578
      %3580 = vrot.lane.b32.xlu0 %v3491, 4
      %v3581 = vpop.permute.xlu0 %3580
      %3582 = vrot.lane.b32.xlu0 %v3492, 4
      %v3583 = vpop.permute.xlu0 %3582
      %3584 = vrot.lane.b32.xlu0 %v3493, 4
      %v3585 = vpop.permute.xlu0 %3584
      %3586 = vrot.lane.b32.xlu0 %v3494, 4
      %v3587 = vpop.permute.xlu0 %3586
      %3588 = vrot.lane.b32.xlu0 %v3495, 4
      %v3589 = vpop.permute.xlu0 %3588
      %3590 = vrot.lane.b32.xlu0 %v3496, 4
      %v3591 = vpop.permute.xlu0 %3590
      %3592 = vrot.lane.b32.xlu0 %v3497, 4
      %v3593 = vpop.permute.xlu0 %3592
      %3594 = vrot.lane.b32.xlu0 %v3498, 4
      %v3595 = vpop.permute.xlu0 %3594
      %3596 = vrot.lane.b32.xlu0 %v3499, 4
      %v3597 = vpop.permute.xlu0 %3596
      %3598 = vrot.lane.b32.xlu0 %v3500, 4
      %v3599 = vpop.permute.xlu0 %3598
      %3600 = vrot.lane.b32.xlu0 %v3501, 4
      %v3601 = vpop.permute.xlu0 %3600
      %3602 = vrot.lane.b32.xlu0 %v3502, 4
      %v3603 = vpop.permute.xlu0 %3602
      %3604 = vrot.lane.b32.xlu0 %v3503, 4
      %v3605 = vpop.permute.xlu0 %3604
      %3606 = vrot.lane.b32.xlu0 %v3504, 4
      %v3607 = vpop.permute.xlu0 %3606
      %3608 = vrot.lane.b32.xlu0 %v3505, 4
      %v3609 = vpop.permute.xlu0 %3608
      %3610 = vrot.lane.b32.xlu0 %v3506, 4
      %v3611 = vpop.permute.xlu0 %3610
      %3612 = vrot.lane.b32.xlu0 %v3507, 4
      %v3613 = vpop.permute.xlu0 %3612
      %3614 = vrot.lane.b32.xlu0 %v3508, 4
      %v3615 = vpop.permute.xlu0 %3614
      %3616 = vrot.lane.b32.xlu0 %v3509, 4
      %v3617 = vpop.permute.xlu0 %3616
      %vm3654 = vcmask 64544
      %3655 = vst.msk [vmem:[#allocation4] sm:$0xff] %vm3654, %v3547
      %3656 = vst.msk [vmem:[#allocation4 + $0x8] sm:$0xff] %vm3654, %v3549
      %3657 = vst.msk [vmem:[#allocation4 + $0x10] sm:$0xff] %vm3654, %v3551
      %3658 = vst.msk [vmem:[#allocation4 + $0x18] sm:$0xff] %vm3654, %v3553
      %3659 = vst.msk [vmem:[#allocation4 + $0x20] sm:$0xff] %vm3654, %v3555
      %3660 = vst.msk [vmem:[#allocation4 + $0x28] sm:$0xff] %vm3654, %v3557
      %3661 = vst.msk [vmem:[#allocation4 + $0x30] sm:$0xff] %vm3654, %v3559
      %3662 = vst.msk [vmem:[#allocation4 + $0x38] sm:$0xff] %vm3654, %v3561
      %3663 = vst.msk [vmem:[#allocation4 + $0x40] sm:$0xff] %vm3654, %v3563
      %3664 = vst.msk [vmem:[#allocation4 + $0x48] sm:$0xff] %vm3654, %v3565
      %3665 = vst.msk [vmem:[#allocation4 + $0x50] sm:$0xff] %vm3654, %v3567
      %3666 = vst.msk [vmem:[#allocation4 + $0x58] sm:$0xff] %vm3654, %v3569
      %3667 = vst.msk [vmem:[#allocation4 + $0x60] sm:$0xff] %vm3654, %v3571
      %3668 = vst.msk [vmem:[#allocation4 + $0x68] sm:$0xff] %vm3654, %v3573
      %3669 = vst.msk [vmem:[#allocation4 + $0x70] sm:$0xff] %vm3654, %v3575
      %3670 = vst.msk [vmem:[#allocation4 + $0x78] sm:$0xff] %vm3654, %v3577
      %3671 = vst.msk [vmem:[#allocation4 + $0x80] sm:$0xff] %vm3654, %v3579
      %3672 = vst.msk [vmem:[#allocation4 + $0x88] sm:$0xff] %vm3654, %v3581
      %3673 = vst.msk [vmem:[#allocation4 + $0x90] sm:$0xff] %vm3654, %v3583
      %3674 = vst.msk [vmem:[#allocation4 + $0x98] sm:$0xff] %vm3654, %v3585
      %3675 = vst.msk [vmem:[#allocation4 + $0xa0] sm:$0xff] %vm3654, %v3587
      %3676 = vst.msk [vmem:[#allocation4 + $0xa8] sm:$0xff] %vm3654, %v3589
      %3677 = vst.msk [vmem:[#allocation4 + $0xb0] sm:$0xff] %vm3654, %v3591
      %3678 = vst.msk [vmem:[#allocation4 + $0xb8] sm:$0xff] %vm3654, %v3593
      %3679 = vst.msk [vmem:[#allocation4 + $0xc0] sm:$0xff] %vm3654, %v3595
      %3680 = vst.msk [vmem:[#allocation4 + $0xc8] sm:$0xff] %vm3654, %v3597
      %3681 = vst.msk [vmem:[#allocation4 + $0xd0] sm:$0xff] %vm3654, %v3599
      %3682 = vst.msk [vmem:[#allocation4 + $0xd8] sm:$0xff] %vm3654, %v3601
      %3683 = vst.msk [vmem:[#allocation4 + $0xe0] sm:$0xff] %vm3654, %v3603
      %3684 = vst.msk [vmem:[#allocation4 + $0xe8] sm:$0xff] %vm3654, %v3605
      %3685 = vst.msk [vmem:[#allocation4 + $0xf0] sm:$0xff] %vm3654, %v3607
      %3686 = vst.msk [vmem:[#allocation4 + $0xf8] sm:$0xff] %vm3654, %v3609
      %3687 = vst.msk [vmem:[#allocation4 + $0x100] sm:$0xff] %vm3654, %v3611
      %3688 = vst.msk [vmem:[#allocation4 + $0x108] sm:$0xff] %vm3654, %v3613
      %3689 = vst.msk [vmem:[#allocation4 + $0x110] sm:$0xff] %vm3654, %v3615
      %3690 = vst.msk [vmem:[#allocation4 + $0x118] sm:$0xff] %vm3654, %v3617
      %v3691 = vld [vmem:[#allocation3 + $0x2] sm:$0xff]
      %v3692 = vld [vmem:[#allocation3 + $0xa] sm:$0xff]
      %v3693 = vld [vmem:[#allocation3 + $0x1a] sm:$0xff]
      %v3694 = vld [vmem:[#allocation3 + $0x22] sm:$0xff]
      %v3695 = vld [vmem:[#allocation3 + $0x32] sm:$0xff]
      %v3696 = vld [vmem:[#allocation3 + $0x3a] sm:$0xff]
      %v3697 = vld [vmem:[#allocation3 + $0x4a] sm:$0xff]
      %v3698 = vld [vmem:[#allocation3 + $0x52] sm:$0xff]
      %v3699 = vld [vmem:[#allocation3 + $0x62] sm:$0xff]
      %v3700 = vld [vmem:[#allocation3 + $0x6a] sm:$0xff]
      %v3701 = vld [vmem:[#allocation3 + $0x7a] sm:$0xff]
      %v3702 = vld [vmem:[#allocation3 + $0x82] sm:$0xff]
      %v3703 = vld [vmem:[#allocation3 + $0x92] sm:$0xff]
      %v3704 = vld [vmem:[#allocation3 + $0x9a] sm:$0xff]
      %v3705 = vld [vmem:[#allocation3 + $0xaa] sm:$0xff]
      %v3706 = vld [vmem:[#allocation3 + $0xb2] sm:$0xff]
      %v3707 = vld [vmem:[#allocation3 + $0xc2] sm:$0xff]
      %v3708 = vld [vmem:[#allocation3 + $0xca] sm:$0xff]
      %v3709 = vld [vmem:[#allocation3 + $0xda] sm:$0xff]
      %v3710 = vld [vmem:[#allocation3 + $0xe2] sm:$0xff]
      %v3711 = vld [vmem:[#allocation3 + $0xf2] sm:$0xff]
      %v3712 = vld [vmem:[#allocation3 + $0xfa] sm:$0xff]
      %v3713 = vld [vmem:[#allocation3 + $0x10a] sm:$0xff]
      %v3714 = vld [vmem:[#allocation3 + $0x112] sm:$0xff]
      %v3715 = vld [vmem:[#allocation3 + $0x122] sm:$0xff]
      %v3716 = vld [vmem:[#allocation3 + $0x12a] sm:$0xff]
      %v3717 = vld [vmem:[#allocation3 + $0x13a] sm:$0xff]
      %v3718 = vld [vmem:[#allocation3 + $0x142] sm:$0xff]
      %v3719 = vld [vmem:[#allocation3 + $0x152] sm:$0xff]
      %v3720 = vld [vmem:[#allocation3 + $0x15a] sm:$0xff]
      %v3721 = vld [vmem:[#allocation3 + $0x16a] sm:$0xff]
      %v3722 = vld [vmem:[#allocation3 + $0x172] sm:$0xff]
      %v3723 = vld [vmem:[#allocation3 + $0x182] sm:$0xff]
      %v3724 = vld [vmem:[#allocation3 + $0x18a] sm:$0xff]
      %v3725 = vld [vmem:[#allocation3 + $0x19a] sm:$0xff]
      %v3726 = vld [vmem:[#allocation3 + $0x1a2] sm:$0xff]
      %v3727 = vld [vmem:[#allocation3 + $0x1b2] sm:$0xff]
      %v3728 = vld [vmem:[#allocation3 + $0x1ba] sm:$0xff]
      %v3729 = vld [vmem:[#allocation3 + $0x1ca] sm:$0xff]
      %v3730 = vld [vmem:[#allocation3 + $0x1d2] sm:$0xff]
      %v3731 = vld [vmem:[#allocation3 + $0x1e2] sm:$0xff]
      %v3732 = vld [vmem:[#allocation3 + $0x1ea] sm:$0xff]
      %v3733 = vld [vmem:[#allocation3 + $0x1fa] sm:$0xff]
      %v3734 = vld [vmem:[#allocation3 + $0x202] sm:$0xff]
      %v3735 = vld [vmem:[#allocation3 + $0x212] sm:$0xff]
      %v3736 = vld [vmem:[#allocation3 + $0x21a] sm:$0xff]
      %v3737 = vld [vmem:[#allocation3 + $0x22a] sm:$0xff]
      %v3738 = vld [vmem:[#allocation3 + $0x232] sm:$0xff]
      %v3739 = vld [vmem:[#allocation3 + $0x242] sm:$0xff]
      %v3740 = vld [vmem:[#allocation3 + $0x24a] sm:$0xff]
      %v3741 = vld [vmem:[#allocation3 + $0x25a] sm:$0xff]
      %v3742 = vld [vmem:[#allocation3 + $0x262] sm:$0xff]
      %v3743 = vld [vmem:[#allocation3 + $0x272] sm:$0xff]
      %v3744 = vld [vmem:[#allocation3 + $0x27a] sm:$0xff]
      %v3745 = vld [vmem:[#allocation3 + $0x28a] sm:$0xff]
      %v3746 = vld [vmem:[#allocation3 + $0x292] sm:$0xff]
      %v3747 = vld [vmem:[#allocation3 + $0x2a2] sm:$0xff]
      %v3748 = vld [vmem:[#allocation3 + $0x2aa] sm:$0xff]
      %v3749 = vld [vmem:[#allocation3 + $0x2ba] sm:$0xff]
      %v3750 = vld [vmem:[#allocation3 + $0x2c2] sm:$0xff]
      %v3751 = vld [vmem:[#allocation3 + $0x2d2] sm:$0xff]
      %v3752 = vld [vmem:[#allocation3 + $0x2da] sm:$0xff]
      %v3753 = vld [vmem:[#allocation3 + $0x2ea] sm:$0xff]
      %v3754 = vld [vmem:[#allocation3 + $0x2f2] sm:$0xff]
      %v3755 = vld [vmem:[#allocation3 + $0x302] sm:$0xff]
      %v3756 = vld [vmem:[#allocation3 + $0x30a] sm:$0xff]
      %v3757 = vld [vmem:[#allocation3 + $0x31a] sm:$0xff]
      %v3758 = vld [vmem:[#allocation3 + $0x322] sm:$0xff]
      %v3759 = vld [vmem:[#allocation3 + $0x332] sm:$0xff]
      %v3760 = vld [vmem:[#allocation3 + $0x33a] sm:$0xff]
      %v3761 = vld [vmem:[#allocation3 + $0x34a] sm:$0xff]
      %v3762 = vld [vmem:[#allocation3 + $0x352] sm:$0xff]
      %v3763 = vpack.c.bf16 %v3692, %v3691
      %v3764 = vpack.c.bf16 %v3694, %v3693
      %v3765 = vpack.c.bf16 %v3696, %v3695
      %v3766 = vpack.c.bf16 %v3698, %v3697
      %v3767 = vpack.c.bf16 %v3700, %v3699
      %v3768 = vpack.c.bf16 %v3702, %v3701
      %v3769 = vpack.c.bf16 %v3704, %v3703
      %v3770 = vpack.c.bf16 %v3706, %v3705
      %v3771 = vpack.c.bf16 %v3708, %v3707
      %v3772 = vpack.c.bf16 %v3710, %v3709
      %v3773 = vpack.c.bf16 %v3712, %v3711
      %v3774 = vpack.c.bf16 %v3714, %v3713
      %v3775 = vpack.c.bf16 %v3716, %v3715
      %v3776 = vpack.c.bf16 %v3718, %v3717
      %v3777 = vpack.c.bf16 %v3720, %v3719
      %v3778 = vpack.c.bf16 %v3722, %v3721
      %v3779 = vpack.c.bf16 %v3724, %v3723
      %v3780 = vpack.c.bf16 %v3726, %v3725
      %v3781 = vpack.c.bf16 %v3728, %v3727
      %v3782 = vpack.c.bf16 %v3730, %v3729
      %v3783 = vpack.c.bf16 %v3732, %v3731
      %v3784 = vpack.c.bf16 %v3734, %v3733
      %v3785 = vpack.c.bf16 %v3736, %v3735
      %v3786 = vpack.c.bf16 %v3738, %v3737
      %v3787 = vpack.c.bf16 %v3740, %v3739
      %v3788 = vpack.c.bf16 %v3742, %v3741
      %v3789 = vpack.c.bf16 %v3744, %v3743
      %v3790 = vpack.c.bf16 %v3746, %v3745
      %v3791 = vpack.c.bf16 %v3748, %v3747
      %v3792 = vpack.c.bf16 %v3750, %v3749
      %v3793 = vpack.c.bf16 %v3752, %v3751
      %v3794 = vpack.c.bf16 %v3754, %v3753
      %v3795 = vpack.c.bf16 %v3756, %v3755
      %v3796 = vpack.c.bf16 %v3758, %v3757
      %v3797 = vpack.c.bf16 %v3760, %v3759
      %v3798 = vpack.c.bf16 %v3762, %v3761
      %3835 = vrot.lane.b32.xlu0 %v3763, 8
      %v3836 = vpop.permute.xlu0 %3835
      %3837 = vrot.lane.b32.xlu0 %v3764, 8
      %v3838 = vpop.permute.xlu0 %3837
      %3839 = vrot.lane.b32.xlu0 %v3765, 8
      %v3840 = vpop.permute.xlu0 %3839
      %3841 = vrot.lane.b32.xlu0 %v3766, 8
      %v3842 = vpop.permute.xlu0 %3841
      %3843 = vrot.lane.b32.xlu0 %v3767, 8
      %v3844 = vpop.permute.xlu0 %3843
      %3845 = vrot.lane.b32.xlu0 %v3768, 8
      %v3846 = vpop.permute.xlu0 %3845
      %3847 = vrot.lane.b32.xlu0 %v3769, 8
      %v3848 = vpop.permute.xlu0 %3847
      %3849 = vrot.lane.b32.xlu0 %v3770, 8
      %v3850 = vpop.permute.xlu0 %3849
      %3851 = vrot.lane.b32.xlu0 %v3771, 8
      %v3852 = vpop.permute.xlu0 %3851
      %3853 = vrot.lane.b32.xlu0 %v3772, 8
      %v3854 = vpop.permute.xlu0 %3853
      %3855 = vrot.lane.b32.xlu0 %v3773, 8
      %v3856 = vpop.permute.xlu0 %3855
      %3857 = vrot.lane.b32.xlu0 %v3774, 8
      %v3858 = vpop.permute.xlu0 %3857
      %3859 = vrot.lane.b32.xlu0 %v3775, 8
      %v3860 = vpop.permute.xlu0 %3859
      %3861 = vrot.lane.b32.xlu0 %v3776, 8
      %v3862 = vpop.permute.xlu0 %3861
      %3863 = vrot.lane.b32.xlu0 %v3777, 8
      %v3864 = vpop.permute.xlu0 %3863
      %3865 = vrot.lane.b32.xlu0 %v3778, 8
      %v3866 = vpop.permute.xlu0 %3865
      %3867 = vrot.lane.b32.xlu0 %v3779, 8
      %v3868 = vpop.permute.xlu0 %3867
      %3869 = vrot.lane.b32.xlu0 %v3780, 8
      %v3870 = vpop.permute.xlu0 %3869
      %3871 = vrot.lane.b32.xlu0 %v3781, 8
      %v3872 = vpop.permute.xlu0 %3871
      %3873 = vrot.lane.b32.xlu0 %v3782, 8
      %v3874 = vpop.permute.xlu0 %3873
      %3875 = vrot.lane.b32.xlu0 %v3783, 8
      %v3876 = vpop.permute.xlu0 %3875
      %3877 = vrot.lane.b32.xlu0 %v3784, 8
      %v3878 = vpop.permute.xlu0 %3877
      %3879 = vrot.lane.b32.xlu0 %v3785, 8
      %v3880 = vpop.permute.xlu0 %3879
      %3881 = vrot.lane.b32.xlu0 %v3786, 8
      %v3882 = vpop.permute.xlu0 %3881
      %3883 = vrot.lane.b32.xlu0 %v3787, 8
      %v3884 = vpop.permute.xlu0 %3883
      %3885 = vrot.lane.b32.xlu0 %v3788, 8
      %v3886 = vpop.permute.xlu0 %3885
      %3887 = vrot.lane.b32.xlu0 %v3789, 8
      %v3888 = vpop.permute.xlu0 %3887
      %3889 = vrot.lane.b32.xlu0 %v3790, 8
      %v3890 = vpop.permute.xlu0 %3889
      %3891 = vrot.lane.b32.xlu0 %v3791, 8
      %v3892 = vpop.permute.xlu0 %3891
      %3893 = vrot.lane.b32.xlu0 %v3792, 8
      %v3894 = vpop.permute.xlu0 %3893
      %3895 = vrot.lane.b32.xlu0 %v3793, 8
      %v3896 = vpop.permute.xlu0 %3895
      %3897 = vrot.lane.b32.xlu0 %v3794, 8
      %v3898 = vpop.permute.xlu0 %3897
      %3899 = vrot.lane.b32.xlu0 %v3795, 8
      %v3900 = vpop.permute.xlu0 %3899
      %3901 = vrot.lane.b32.xlu0 %v3796, 8
      %v3902 = vpop.permute.xlu0 %3901
      %3903 = vrot.lane.b32.xlu0 %v3797, 8
      %v3904 = vpop.permute.xlu0 %3903
      %3905 = vrot.lane.b32.xlu0 %v3798, 8
      %v3906 = vpop.permute.xlu0 %3905
      %vm3943 = vcmask 97344
      %3944 = vst.msk [vmem:[#allocation4] sm:$0xff] %vm3943, %v3836
      %3945 = vst.msk [vmem:[#allocation4 + $0x8] sm:$0xff] %vm3943, %v3838
      %3946 = vst.msk [vmem:[#allocation4 + $0x10] sm:$0xff] %vm3943, %v3840
      %3947 = vst.msk [vmem:[#allocation4 + $0x18] sm:$0xff] %vm3943, %v3842
      %3948 = vst.msk [vmem:[#allocation4 + $0x20] sm:$0xff] %vm3943, %v3844
      %3949 = vst.msk [vmem:[#allocation4 + $0x28] sm:$0xff] %vm3943, %v3846
      %3950 = vst.msk [vmem:[#allocation4 + $0x30] sm:$0xff] %vm3943, %v3848
      %3951 = vst.msk [vmem:[#allocation4 + $0x38] sm:$0xff] %vm3943, %v3850
      %3952 = vst.msk [vmem:[#allocation4 + $0x40] sm:$0xff] %vm3943, %v3852
      %3953 = vst.msk [vmem:[#allocation4 + $0x48] sm:$0xff] %vm3943, %v3854
      %3954 = vst.msk [vmem:[#allocation4 + $0x50] sm:$0xff] %vm3943, %v3856
      %3955 = vst.msk [vmem:[#allocation4 + $0x58] sm:$0xff] %vm3943, %v3858
      %3956 = vst.msk [vmem:[#allocation4 + $0x60] sm:$0xff] %vm3943, %v3860
      %3957 = vst.msk [vmem:[#allocation4 + $0x68] sm:$0xff] %vm3943, %v3862
      %3958 = vst.msk [vmem:[#allocation4 + $0x70] sm:$0xff] %vm3943, %v3864
      %3959 = vst.msk [vmem:[#allocation4 + $0x78] sm:$0xff] %vm3943, %v3866
      %3960 = vst.msk [vmem:[#allocation4 + $0x80] sm:$0xff] %vm3943, %v3868
      %3961 = vst.msk [vmem:[#allocation4 + $0x88] sm:$0xff] %vm3943, %v3870
      %3962 = vst.msk [vmem:[#allocation4 + $0x90] sm:$0xff] %vm3943, %v3872
      %3963 = vst.msk [vmem:[#allocation4 + $0x98] sm:$0xff] %vm3943, %v3874
      %3964 = vst.msk [vmem:[#allocation4 + $0xa0] sm:$0xff] %vm3943, %v3876
      %3965 = vst.msk [vmem:[#allocation4 + $0xa8] sm:$0xff] %vm3943, %v3878
      %3966 = vst.msk [vmem:[#allocation4 + $0xb0] sm:$0xff] %vm3943, %v3880
      %3967 = vst.msk [vmem:[#allocation4 + $0xb8] sm:$0xff] %vm3943, %v3882
      %3968 = vst.msk [vmem:[#allocation4 + $0xc0] sm:$0xff] %vm3943, %v3884
      %3969 = vst.msk [vmem:[#allocation4 + $0xc8] sm:$0xff] %vm3943, %v3886
      %3970 = vst.msk [vmem:[#allocation4 + $0xd0] sm:$0xff] %vm3943, %v3888
      %3971 = vst.msk [vmem:[#allocation4 + $0xd8] sm:$0xff] %vm3943, %v3890
      %3972 = vst.msk [vmem:[#allocation4 + $0xe0] sm:$0xff] %vm3943, %v3892
      %3973 = vst.msk [vmem:[#allocation4 + $0xe8] sm:$0xff] %vm3943, %v3894
      %3974 = vst.msk [vmem:[#allocation4 + $0xf0] sm:$0xff] %vm3943, %v3896
      %3975 = vst.msk [vmem:[#allocation4 + $0xf8] sm:$0xff] %vm3943, %v3898
      %3976 = vst.msk [vmem:[#allocation4 + $0x100] sm:$0xff] %vm3943, %v3900
      %3977 = vst.msk [vmem:[#allocation4 + $0x108] sm:$0xff] %vm3943, %v3902
      %3978 = vst.msk [vmem:[#allocation4 + $0x110] sm:$0xff] %vm3943, %v3904
      %3979 = vst.msk [vmem:[#allocation4 + $0x118] sm:$0xff] %vm3943, %v3906
      %v3980 = vld [vmem:[#allocation4] sm:$0xff]
      %v3981 = vld [vmem:[#allocation4 + $0x8] sm:$0xff]
      %v3982 = vld [vmem:[#allocation4 + $0x10] sm:$0xff]
      %v3983 = vld [vmem:[#allocation4 + $0x18] sm:$0xff]
      %v3984 = vld [vmem:[#allocation4 + $0x20] sm:$0xff]
      %v3985 = vld [vmem:[#allocation4 + $0x28] sm:$0xff]
      %v3986 = vld [vmem:[#allocation4 + $0x30] sm:$0xff]
      %v3987 = vld [vmem:[#allocation4 + $0x38] sm:$0xff]
      %v3988 = vld [vmem:[#allocation4 + $0x40] sm:$0xff]
      %v3989 = vld [vmem:[#allocation4 + $0x48] sm:$0xff]
      %v3990 = vld [vmem:[#allocation4 + $0x50] sm:$0xff]
      %v3991 = vld [vmem:[#allocation4 + $0x58] sm:$0xff]
      %v3992 = vld [vmem:[#allocation4 + $0x60] sm:$0xff]
      %v3993 = vld [vmem:[#allocation4 + $0x68] sm:$0xff]
      %v3994 = vld [vmem:[#allocation4 + $0x70] sm:$0xff]
      %v3995 = vld [vmem:[#allocation4 + $0x78] sm:$0xff]
      %v3996 = vld [vmem:[#allocation4 + $0x90] sm:$0xff]
      %v3997 = vld [vmem:[#allocation4 + $0x98] sm:$0xff]
      %v3998 = vld [vmem:[#allocation4 + $0xa0] sm:$0xff]
      %v3999 = vld [vmem:[#allocation4 + $0xa8] sm:$0xff]
      %v4000 = vld [vmem:[#allocation4 + $0xb0] sm:$0xff]
      %v4001 = vld [vmem:[#allocation4 + $0xb8] sm:$0xff]
      %v4002 = vld [vmem:[#allocation4 + $0xc0] sm:$0xff]
      %v4003 = vld [vmem:[#allocation4 + $0xc8] sm:$0xff]
      %v4004 = vld [vmem:[#allocation4 + $0xd0] sm:$0xff]
      %v4005 = vld [vmem:[#allocation4 + $0xd8] sm:$0xff]
      %v4006 = vld [vmem:[#allocation4 + $0xe0] sm:$0xff]
      %v4007 = vld [vmem:[#allocation4 + $0xe8] sm:$0xff]
      %v4008 = vld [vmem:[#allocation4 + $0xf0] sm:$0xff]
      %v4009 = vld [vmem:[#allocation4 + $0xf8] sm:$0xff]
      %v4010 = vld [vmem:[#allocation4 + $0x100] sm:$0xff]
      %v4011 = vld [vmem:[#allocation4 + $0x108] sm:$0xff]
      %v4012 = vld [vmem:[%s3] sm:$0xf]
      %v4013 = vld [vmem:[%s3 + $0x4] sm:$0x3]
      %s4014 = scalar_lea.vmem [#allocation4], 8
      %v4015 = vld [vmem:[%s4014] sm:$0xff]
      %v4016 = vld [vmem:[%s4014 + $0x8] sm:$0xff]
      %v4017 = vld [vmem:[%s4014 + $0x10] sm:$0xff]
      %v4018 = vld [vmem:[%s4014 + $0x18] sm:$0xff]
      %v4019 = vld [vmem:[%s4014 + $0x20] sm:$0xff]
      %v4020 = vld [vmem:[%s4014 + $0x28] sm:$0xff]
      %v4021 = vld [vmem:[%s4014 + $0x30] sm:$0xff]
      %v4022 = vld [vmem:[%s4014 + $0x38] sm:$0xff]
      %v4023 = vld [vmem:[%s4014 + $0x40] sm:$0xff]
      %v4024 = vld [vmem:[%s4014 + $0x48] sm:$0xff]
      %v4025 = vld [vmem:[%s4014 + $0x50] sm:$0xff]
      %v4026 = vld [vmem:[%s4014 + $0x58] sm:$0xff]
      %v4027 = vld [vmem:[%s4014 + $0x60] sm:$0xff]
      %v4028 = vld [vmem:[%s4014 + $0x68] sm:$0xff]
      %v4029 = vld [vmem:[%s4014 + $0x70] sm:$0xff]
      %v4030 = vld [vmem:[%s4014 + $0x78] sm:$0xff]
      %v4031 = vld [vmem:[%s4014 + $0x90] sm:$0xff]
      %v4032 = vld [vmem:[%s4014 + $0x98] sm:$0xff]
      %v4033 = vld [vmem:[%s4014 + $0xa0] sm:$0xff]
      %v4034 = vld [vmem:[%s4014 + $0xa8] sm:$0xff]
      %v4035 = vld [vmem:[%s4014 + $0xb0] sm:$0xff]
      %v4036 = vld [vmem:[%s4014 + $0xb8] sm:$0xff]
      %v4037 = vld [vmem:[%s4014 + $0xc0] sm:$0xff]
      %v4038 = vld [vmem:[%s4014 + $0xc8] sm:$0xff]
      %v4039 = vld [vmem:[%s4014 + $0xd0] sm:$0xff]
      %v4040 = vld [vmem:[%s4014 + $0xd8] sm:$0xff]
      %v4041 = vld [vmem:[%s4014 + $0xe0] sm:$0xff]
      %v4042 = vld [vmem:[%s4014 + $0xe8] sm:$0xff]
      %v4043 = vld [vmem:[%s4014 + $0xf0] sm:$0xff]
      %v4044 = vld [vmem:[%s4014 + $0xf8] sm:$0xff]
      %v4045 = vld [vmem:[%s4014 + $0x100] sm:$0xff]
      %v4046 = vld [vmem:[%s4014 + $0x108] sm:$0xff]
      %s4047 = scalar_lea.vmem %s3, 8
      %v4048 = vld [vmem:[%s4047] sm:$0xf]
      %v4049 = vld [vmem:[%s4047 + $0x4] sm:$0x3]
      %v4052 = vunpack.c.l.b16 %v4048
      %v4053 = vunpack.c.l.b16 %v4049
      %v4054 = vpack.c.b16 %v4053, %v4052
      %vm4055 = vcmask 97280
      %v4057 = vsel %vm4055, %v4015, 0
      %v4060 = vsel %vm4055, %v4016, 0
      %v4063 = vsel %vm4055, %v4017, 0
      %v4066 = vsel %vm4055, %v4018, 0
      %v4069 = vsel %vm4055, %v4019, 0
      %v4072 = vsel %vm4055, %v4020, 0
      %v4075 = vsel %vm4055, %v4021, 0
      %v4078 = vsel %vm4055, %v4022, 0
      %v4081 = vsel %vm4055, %v4023, 0
      %v4084 = vsel %vm4055, %v4024, 0
      %v4087 = vsel %vm4055, %v4025, 0
      %v4090 = vsel %vm4055, %v4026, 0
      %v4093 = vsel %vm4055, %v4027, 0
      %v4096 = vsel %vm4055, %v4028, 0
      %v4099 = vsel %vm4055, %v4029, 0
      %v4102 = vsel %vm4055, %v4030, 0
      %v4105 = vsel %vm4055, %v4031, 0
      %v4108 = vsel %vm4055, %v4032, 0
      %v4111 = vsel %vm4055, %v4033, 0
      %v4114 = vsel %vm4055, %v4034, 0
      %v4117 = vsel %vm4055, %v4035, 0
      %v4120 = vsel %vm4055, %v4036, 0
      %v4123 = vsel %vm4055, %v4037, 0
      %v4126 = vsel %vm4055, %v4038, 0
      %v4129 = vsel %vm4055, %v4039, 0
      %v4132 = vsel %vm4055, %v4040, 0
      %v4135 = vsel %vm4055, %v4041, 0
      %v4138 = vsel %vm4055, %v4042, 0
      %v4141 = vsel %vm4055, %v4043, 0
      %v4144 = vsel %vm4055, %v4044, 0
      %v4147 = vsel %vm4055, %v4045, 0
      %v4150 = vsel %vm4055, %v4046, 0
      %vm4152 = vcmask 1045504
      %v4154 = vsel %vm4152, %v4054, 0
      %4156 = vmatprep.subr.bf16.mxu0 0
      %4157 = vmatpush1.bf16.msra.mxu0 %v4154
      %4158 = vmatprep.subr.bf16.mxu0 0
      %4159 = vmatpush1.bf16.msra.mxu0 0
      %4160 = vmatprep.subr.bf16.mxu0 0
      %4161 = vmatpush1.bf16.msra.mxu0 0
      %4162 = vmatprep.subr.bf16.mxu0 0
      %4163 = vmatpush1.bf16.msra.mxu0 0
      %4164 = vmatprep.subr.bf16.mxu0 0
      %4165 = vmatpush1.bf16.msra.mxu0 0
      %4166 = vmatprep.subr.bf16.mxu0 0
      %4167 = vmatpush1.bf16.msra.mxu0 0
      %4168 = vmatprep.subr.bf16.mxu0 0
      %4169 = vmatpush1.bf16.msra.mxu0 0
      %4170 = vmatprep.subr.bf16.mxu0 0
      %4171 = vmatpush1.bf16.msra.mxu0 0
      %4172 = vmatprep.subr.bf16.mxu0 0
      %4173 = vmatpush1.bf16.msra.mxu0 0
      %4174 = vmatprep.subr.bf16.mxu0 0
      %4175 = vmatpush1.bf16.msra.mxu0 0
      %4176 = vmatprep.subr.bf16.mxu0 0
      %4177 = vmatpush1.bf16.msra.mxu0 0
      %4178 = vmatprep.subr.bf16.mxu0 0
      %4179 = vmatpush1.bf16.msra.mxu0 0
      %4180 = vmatprep.subr.bf16.mxu0 0
      %4181 = vmatpush1.bf16.msra.mxu0 0
      %4182 = vmatprep.subr.bf16.mxu0 0
      %4183 = vmatpush1.bf16.msra.mxu0 0
      %4184 = vmatprep.subr.bf16.mxu0 0
      %4185 = vmatpush1.bf16.msra.mxu0 0
      %4186 = vmatprep.subr.bf16.mxu0 0
      %4187 = vmatpush1.bf16.msra.mxu0 0
      %4188 = vmatprep.mubr.bf16.mxu0 0
      %4189 = vmatmul.mubr.bf16.gmra.mrb[0].mxu0 %v4057
      %v4190 = vpop.f32.mrb[0].mxu0
      %v4191 = vadd.f32 0.0, %v4190
      %v4192 = vpop.f32.mrb[0].mxu0
      %v4193 = vpop.f32.mrb[0].mxu0
      %v4194 = vadd.f32 0.0, %v4193
      %v4195 = vpop.f32.mrb[0].mxu0
      %4196 = vmatprep.mubr.bf16.mxu0 0
      %4197 = vmatmul.mubr.bf16.gmra.mrb[0].mxu0 %v4060
      %v4198 = vpop.f32.mrb[0].mxu0
      %v4199 = vadd.f32 0.0, %v4198
      %v4200 = vpop.f32.mrb[0].mxu0
      %v4201 = vpop.f32.mrb[0].mxu0
      %v4202 = vadd.f32 0.0, %v4201
      %v4203 = vpop.f32.mrb[0].mxu0
      %4204 = vmatprep.mubr.bf16.mxu0 0
      %4205 = vmatmul.mubr.bf16.gmra.mrb[0].mxu0 %v4063
      %v4206 = vpop.f32.mrb[0].mxu0
      %v4207 = vadd.f32 0.0, %v4206
      %v4208 = vpop.f32.mrb[0].mxu0
      %v4209 = vpop.f32.mrb[0].mxu0
      %v4210 = vadd.f32 0.0, %v4209
      %v4211 = vpop.f32.mrb[0].mxu0
      %4212 = vmatprep.mubr.bf16.mxu0 0
      %4213 = vmatmul.mubr.bf16.gmra.mrb[0].mxu0 %v4066
      %v4214 = vpop.f32.mrb[0].mxu0
      %v4215 = vadd.f32 0.0, %v4214
      %v4216 = vpop.f32.mrb[0].mxu0
      %v4217 = vpop.f32.mrb[0].mxu0
      %v4218 = vadd.f32 0.0, %v4217
      %v4219 = vpop.f32.mrb[0].mxu0
      %4220 = vmatprep.mubr.bf16.mxu0 0
      %4221 = vmatmul.mubr.bf16.gmra.mrb[0].mxu0 %v4069
      %v4222 = vpop.f32.mrb[0].mxu0
      %v4223 = vadd.f32 0.0, %v4222
      %v4224 = vpop.f32.mrb[0].mxu0
      %v4225 = vpop.f32.mrb[0].mxu0
      %v4226 = vadd.f32 0.0, %v4225
      %v4227 = vpop.f32.mrb[0].mxu0
      %4228 = vmatprep.mubr.bf16.mxu0 0
      %4229 = vmatmul.mubr.bf16.gmra.mrb[0].mxu0 %v4072
      %v4230 = vpop.f32.mrb[0].mxu0
      %v4231 = vadd.f32 0.0, %v4230
      %v4232 = vpop.f32.mrb[0].mxu0
      %v4233 = vpop.f32.mrb[0].mxu0
      %v4234 = vadd.f32 0.0, %v4233
      %v4235 = vpop.f32.mrb[0].mxu0
      %4236 = vmatprep.mubr.bf16.mxu0 0
      %4237 = vmatmul.mubr.bf16.gmra.mrb[0].mxu0 %v4075
      %v4238 = vpop.f32.mrb[0].mxu0
      %v4239 = vadd.f32 0.0, %v4238
      %v4240 = vpop.f32.mrb[0].mxu0
      %v4241 = vpop.f32.mrb[0].mxu0
      %v4242 = vadd.f32 0.0, %v4241
      %v4243 = vpop.f32.mrb[0].mxu0
      %4244 = vmatprep.mubr.bf16.mxu0 0
      %4245 = vmatmul.mubr.bf16.gmra.mrb[0].mxu0 %v4078
      %v4246 = vpop.f32.mrb[0].mxu0
      %v4247 = vadd.f32 0.0, %v4246
      %v4248 = vpop.f32.mrb[0].mxu0
      %v4249 = vpop.f32.mrb[0].mxu0
      %v4250 = vadd.f32 0.0, %v4249
      %v4251 = vpop.f32.mrb[0].mxu0
      %4252 = vmatprep.mubr.bf16.mxu0 0
      %4253 = vmatmul.mubr.bf16.gmra.mrb[0].mxu0 %v4081
      %v4254 = vpop.f32.mrb[0].mxu0
      %v4255 = vadd.f32 0.0, %v4254
      %v4256 = vpop.f32.mrb[0].mxu0
      %v4257 = vpop.f32.mrb[0].mxu0
      %v4258 = vadd.f32 0.0, %v4257
      %v4259 = vpop.f32.mrb[0].mxu0
      %4260 = vmatprep.mubr.bf16.mxu0 0
      %4261 = vmatmul.mubr.bf16.gmra.mrb[0].mxu0 %v4084
      %v4262 = vpop.f32.mrb[0].mxu0
      %v4263 = vadd.f32 0.0, %v4262
      %v4264 = vpop.f32.mrb[0].mxu0
      %v4265 = vpop.f32.mrb[0].mxu0
      %v4266 = vadd.f32 0.0, %v4265
      %v4267 = vpop.f32.mrb[0].mxu0
      %4268 = vmatprep.mubr.bf16.mxu0 0
      %4269 = vmatmul.mubr.bf16.gmra.mrb[0].mxu0 %v4087
      %v4270 = vpop.f32.mrb[0].mxu0
      %v4271 = vadd.f32 0.0, %v4270
      %v4272 = vpop.f32.mrb[0].mxu0
      %v4273 = vpop.f32.mrb[0].mxu0
      %v4274 = vadd.f32 0.0, %v4273
      %v4275 = vpop.f32.mrb[0].mxu0
      %4276 = vmatprep.mubr.bf16.mxu0 0
      %4277 = vmatmul.mubr.bf16.gmra.mrb[0].mxu0 %v4090
      %v4278 = vpop.f32.mrb[0].mxu0
      %v4279 = vadd.f32 0.0, %v4278
      %v4280 = vpop.f32.mrb[0].mxu0
      %v4281 = vpop.f32.mrb[0].mxu0
      %v4282 = vadd.f32 0.0, %v4281
      %v4283 = vpop.f32.mrb[0].mxu0
      %4284 = vmatprep.mubr.bf16.mxu0 0
      %4285 = vmatmul.mubr.bf16.gmra.mrb[0].mxu0 %v4093
      %v4286 = vpop.f32.mrb[0].mxu0
      %v4287 = vadd.f32 0.0, %v4286
      %v4288 = vpop.f32.mrb[0].mxu0
      %v4289 = vpop.f32.mrb[0].mxu0
      %v4290 = vadd.f32 0.0, %v4289
      %v4291 = vpop.f32.mrb[0].mxu0
      %4292 = vmatprep.mubr.bf16.mxu0 0
      %4293 = vmatmul.mubr.bf16.gmra.mrb[0].mxu0 %v4096
      %v4294 = vpop.f32.mrb[0].mxu0
      %v4295 = vadd.f32 0.0, %v4294
      %v4296 = vpop.f32.mrb[0].mxu0
      %v4297 = vpop.f32.mrb[0].mxu0
      %v4298 = vadd.f32 0.0, %v4297
      %v4299 = vpop.f32.mrb[0].mxu0
      %4300 = vmatprep.mubr.bf16.mxu0 0
      %4301 = vmatmul.mubr.bf16.gmra.mrb[0].mxu0 %v4099
      %v4302 = vpop.f32.mrb[0].mxu0
      %v4303 = vadd.f32 0.0, %v4302
      %v4304 = vpop.f32.mrb[0].mxu0
      %v4305 = vpop.f32.mrb[0].mxu0
      %v4306 = vadd.f32 0.0, %v4305
      %v4307 = vpop.f32.mrb[0].mxu0
      %4308 = vmatprep.mubr.bf16.mxu0 0
      %4309 = vmatmul.mubr.bf16.gmra.mrb[0].mxu0 %v4102
      %v4310 = vpop.f32.mrb[0].mxu0
      %v4311 = vadd.f32 0.0, %v4310
      %v4312 = vpop.f32.mrb[0].mxu0
      %v4313 = vpop.f32.mrb[0].mxu0
      %v4314 = vadd.f32 0.0, %v4313
      %v4315 = vpop.f32.mrb[0].mxu0
      %4316 = vmatprep.mubr.bf16.mxu0 0
      %4317 = vmatmul.mubr.bf16.gmra.mrb[0].mxu0 %v4105
      %v4318 = vpop.f32.mrb[0].mxu0
      %v4319 = vadd.f32 0.0, %v4318
      %v4320 = vpop.f32.mrb[0].mxu0
      %v4321 = vpop.f32.mrb[0].mxu0
      %v4322 = vadd.f32 0.0, %v4321
      %v4323 = vpop.f32.mrb[0].mxu0
      %4324 = vmatprep.mubr.bf16.mxu0 0
      %4325 = vmatmul.mubr.bf16.gmra.mrb[0].mxu0 %v4108
      %v4326 = vpop.f32.mrb[0].mxu0
      %v4327 = vadd.f32 0.0, %v4326
      %v4328 = vpop.f32.mrb[0].mxu0
      %v4329 = vpop.f32.mrb[0].mxu0
      %v4330 = vadd.f32 0.0, %v4329
      %v4331 = vpop.f32.mrb[0].mxu0
      %4332 = vmatprep.mubr.bf16.mxu0 0
      %4333 = vmatmul.mubr.bf16.gmra.mrb[0].mxu0 %v4111
      %v4334 = vpop.f32.mrb[0].mxu0
      %v4335 = vadd.f32 0.0, %v4334
      %v4336 = vpop.f32.mrb[0].mxu0
      %v4337 = vpop.f32.mrb[0].mxu0
      %v4338 = vadd.f32 0.0, %v4337
      %v4339 = vpop.f32.mrb[0].mxu0
      %4340 = vmatprep.mubr.bf16.mxu0 0
      %4341 = vmatmul.mubr.bf16.gmra.mrb[0].mxu0 %v4114
      %v4342 = vpop.f32.mrb[0].mxu0
      %v4343 = vadd.f32 0.0, %v4342
      %v4344 = vpop.f32.mrb[0].mxu0
      %v4345 = vpop.f32.mrb[0].mxu0
      %v4346 = vadd.f32 0.0, %v4345
      %v4347 = vpop.f32.mrb[0].mxu0
      %4348 = vmatprep.mubr.bf16.mxu0 0
      %4349 = vmatmul.mubr.bf16.gmra.mrb[0].mxu0 %v4117
      %v4350 = vpop.f32.mrb[0].mxu0
      %v4351 = vadd.f32 0.0, %v4350
      %v4352 = vpop.f32.mrb[0].mxu0
      %v4353 = vpop.f32.mrb[0].mxu0
      %v4354 = vadd.f32 0.0, %v4353
      %v4355 = vpop.f32.mrb[0].mxu0
      %4356 = vmatprep.mubr.bf16.mxu0 0
      %4357 = vmatmul.mubr.bf16.gmra.mrb[0].mxu0 %v4120
      %v4358 = vpop.f32.mrb[0].mxu0
      %v4359 = vadd.f32 0.0, %v4358
      %v4360 = vpop.f32.mrb[0].mxu0
      %v4361 = vpop.f32.mrb[0].mxu0
      %v4362 = vadd.f32 0.0, %v4361
      %v4363 = vpop.f32.mrb[0].mxu0
      %4364 = vmatprep.mubr.bf16.mxu0 0
      %4365 = vmatmul.mubr.bf16.gmra.mrb[0].mxu0 %v4123
      %v4366 = vpop.f32.mrb[0].mxu0
      %v4367 = vadd.f32 0.0, %v4366
      %v4368 = vpop.f32.mrb[0].mxu0
      %v4369 = vpop.f32.mrb[0].mxu0
      %v4370 = vadd.f32 0.0, %v4369
      %v4371 = vpop.f32.mrb[0].mxu0
      %4372 = vmatprep.mubr.bf16.mxu0 0
      %4373 = vmatmul.mubr.bf16.gmra.mrb[0].mxu0 %v4126
      %v4374 = vpop.f32.mrb[0].mxu0
      %v4375 = vadd.f32 0.0, %v4374
      %v4376 = vpop.f32.mrb[0].mxu0
      %v4377 = vpop.f32.mrb[0].mxu0
      %v4378 = vadd.f32 0.0, %v4377
      %v4379 = vpop.f32.mrb[0].mxu0
      %4380 = vmatprep.mubr.bf16.mxu0 0
      %4381 = vmatmul.mubr.bf16.gmra.mrb[0].mxu0 %v4129
      %v4382 = vpop.f32.mrb[0].mxu0
      %v4383 = vadd.f32 0.0, %v4382
      %v4384 = vpop.f32.mrb[0].mxu0
      %v4385 = vpop.f32.mrb[0].mxu0
      %v4386 = vadd.f32 0.0, %v4385
      %v4387 = vpop.f32.mrb[0].mxu0
      %4388 = vmatprep.mubr.bf16.mxu0 0
      %4389 = vmatmul.mubr.bf16.gmra.mrb[0].mxu0 %v4132
      %v4390 = vpop.f32.mrb[0].mxu0
      %v4391 = vadd.f32 0.0, %v4390
      %v4392 = vpop.f32.mrb[0].mxu0
      %v4393 = vpop.f32.mrb[0].mxu0
      %v4394 = vadd.f32 0.0, %v4393
      %v4395 = vpop.f32.mrb[0].mxu0
      %4396 = vmatprep.mubr.bf16.mxu0 0
      %4397 = vmatmul.mubr.bf16.gmra.mrb[0].mxu0 %v4135
      %v4398 = vpop.f32.mrb[0].mxu0
      %v4399 = vadd.f32 0.0, %v4398
      %v4400 = vpop.f32.mrb[0].mxu0
      %v4401 = vpop.f32.mrb[0].mxu0
      %v4402 = vadd.f32 0.0, %v4401
      %v4403 = vpop.f32.mrb[0].mxu0
      %4404 = vmatprep.mubr.bf16.mxu0 0
      %4405 = vmatmul.mubr.bf16.gmra.mrb[0].mxu0 %v4138
      %v4406 = vpop.f32.mrb[0].mxu0
      %v4407 = vadd.f32 0.0, %v4406
      %v4408 = vpop.f32.mrb[0].mxu0
      %v4409 = vpop.f32.mrb[0].mxu0
      %v4410 = vadd.f32 0.0, %v4409
      %v4411 = vpop.f32.mrb[0].mxu0
      %4412 = vmatprep.mubr.bf16.mxu0 0
      %4413 = vmatmul.mubr.bf16.gmra.mrb[0].mxu0 %v4141
      %v4414 = vpop.f32.mrb[0].mxu0
      %v4415 = vadd.f32 0.0, %v4414
      %v4416 = vpop.f32.mrb[0].mxu0
      %v4417 = vpop.f32.mrb[0].mxu0
      %v4418 = vadd.f32 0.0, %v4417
      %v4419 = vpop.f32.mrb[0].mxu0
      %4420 = vmatprep.mubr.bf16.mxu0 0
      %4421 = vmatmul.mubr.bf16.gmra.mrb[0].mxu0 %v4144
      %v4422 = vpop.f32.mrb[0].mxu0
      %v4423 = vadd.f32 0.0, %v4422
      %v4424 = vpop.f32.mrb[0].mxu0
      %v4425 = vpop.f32.mrb[0].mxu0
      %v4426 = vadd.f32 0.0, %v4425
      %v4427 = vpop.f32.mrb[0].mxu0
      %4428 = vmatprep.mubr.bf16.mxu0 0
      %4429 = vmatmul.mubr.bf16.gmra.mrb[0].mxu0 %v4147
      %v4430 = vpop.f32.mrb[0].mxu0
      %v4431 = vadd.f32 0.0, %v4430
      %v4432 = vpop.f32.mrb[0].mxu0
      %v4433 = vpop.f32.mrb[0].mxu0
      %v4434 = vadd.f32 0.0, %v4433
      %v4435 = vpop.f32.mrb[0].mxu0
      %4436 = vmatprep.mubr.bf16.mxu0 0
      %4437 = vmatmul.mubr.bf16.gmra.mrb[0].mxu0 %v4150
      %v4438 = vpop.f32.mrb[0].mxu0
      %v4439 = vadd.f32 0.0, %v4438
      %v4440 = vpop.f32.mrb[0].mxu0
      %v4441 = vpop.f32.mrb[0].mxu0
      %v4442 = vadd.f32 0.0, %v4441
      %v4443 = vpop.f32.mrb[0].mxu0
      %4444 = vdwg.mxu0
      %v4447 = vunpack.c.l.b16 %v4012
      %v4448 = vunpack.c.l.b16 %v4013
      %v4449 = vpack.c.b16 %v4448, %v4447
      %v4451 = vsel %vm4055, %v3980, 0
      %v4454 = vsel %vm4055, %v3981, 0
      %v4457 = vsel %vm4055, %v3982, 0
      %v4460 = vsel %vm4055, %v3983, 0
      %v4463 = vsel %vm4055, %v3984, 0
      %v4466 = vsel %vm4055, %v3985, 0
      %v4469 = vsel %vm4055, %v3986, 0
      %v4472 = vsel %vm4055, %v3987, 0
      %v4475 = vsel %vm4055, %v3988, 0
      %v4478 = vsel %vm4055, %v3989, 0
      %v4481 = vsel %vm4055, %v3990, 0
      %v4484 = vsel %vm4055, %v3991, 0
      %v4487 = vsel %vm4055, %v3992, 0
      %v4490 = vsel %vm4055, %v3993, 0
      %v4493 = vsel %vm4055, %v3994, 0
      %v4496 = vsel %vm4055, %v3995, 0
      %v4499 = vsel %vm4055, %v3996, 0
      %v4502 = vsel %vm4055, %v3997, 0
      %v4505 = vsel %vm4055, %v3998, 0
      %v4508 = vsel %vm4055, %v3999, 0
      %v4511 = vsel %vm4055, %v4000, 0
      %v4514 = vsel %vm4055, %v4001, 0
      %v4517 = vsel %vm4055, %v4002, 0
      %v4520 = vsel %vm4055, %v4003, 0
      %v4523 = vsel %vm4055, %v4004, 0
      %v4526 = vsel %vm4055, %v4005, 0
      %v4529 = vsel %vm4055, %v4006, 0
      %v4532 = vsel %vm4055, %v4007, 0
      %v4535 = vsel %vm4055, %v4008, 0
      %v4538 = vsel %vm4055, %v4009, 0
      %v4541 = vsel %vm4055, %v4010, 0
      %v4544 = vsel %vm4055, %v4011, 0
      %v4547 = vsel %vm4152, %v4449, 0
      %4549 = vmatprep.subr.bf16.mxu0 0
      %4550 = vmatpush1.bf16.msra.mxu0 %v4547
      %4551 = vmatprep.subr.bf16.mxu0 0
      %4552 = vmatpush1.bf16.msra.mxu0 0
      %4553 = vmatprep.subr.bf16.mxu0 0
      %4554 = vmatpush1.bf16.msra.mxu0 0
      %4555 = vmatprep.subr.bf16.mxu0 0
      %4556 = vmatpush1.bf16.msra.mxu0 0
      %4557 = vmatprep.subr.bf16.mxu0 0
      %4558 = vmatpush1.bf16.msra.mxu0 0
      %4559 = vmatprep.subr.bf16.mxu0 0
      %4560 = vmatpush1.bf16.msra.mxu0 0
      %4561 = vmatprep.subr.bf16.mxu0 0
      %4562 = vmatpush1.bf16.msra.mxu0 0
      %4563 = vmatprep.subr.bf16.mxu0 0
      %4564 = vmatpush1.bf16.msra.mxu0 0
      %4565 = vmatprep.subr.bf16.mxu0 0
      %4566 = vmatpush1.bf16.msra.mxu0 0
      %4567 = vmatprep.subr.bf16.mxu0 0
      %4568 = vmatpush1.bf16.msra.mxu0 0
      %4569 = vmatprep.subr.bf16.mxu0 0
      %4570 = vmatpush1.bf16.msra.mxu0 0
      %4571 = vmatprep.subr.bf16.mxu0 0
      %4572 = vmatpush1.bf16.msra.mxu0 0
      %4573 = vmatprep.subr.bf16.mxu0 0
      %4574 = vmatpush1.bf16.msra.mxu0 0
      %4575 = vmatprep.subr.bf16.mxu0 0
      %4576 = vmatpush1.bf16.msra.mxu0 0
      %4577 = vmatprep.subr.bf16.mxu0 0
      %4578 = vmatpush1.bf16.msra.mxu0 0
      %4579 = vmatprep.subr.bf16.mxu0 0
      %4580 = vmatpush1.bf16.msra.mxu0 0
      %4581 = vmatprep.mubr.bf16.mxu0 0
      %4582 = vmatmul.mubr.bf16.gmra.mrb[0].mxu0 %v4451
      %v4583 = vpop.f32.mrb[0].mxu0
      %v4584 = vadd.f32 %v4191, %v4583
      %v4585 = vpop.f32.mrb[0].mxu0
      %v4586 = vpop.f32.mrb[0].mxu0
      %v4587 = vadd.f32 %v4194, %v4586
      %v4588 = vpop.f32.mrb[0].mxu0
      %4589 = vmatprep.mubr.bf16.mxu0 0
      %4590 = vmatmul.mubr.bf16.gmra.mrb[0].mxu0 %v4454
      %v4591 = vpop.f32.mrb[0].mxu0
      %v4592 = vadd.f32 %v4199, %v4591
      %v4593 = vpop.f32.mrb[0].mxu0
      %v4594 = vpop.f32.mrb[0].mxu0
      %v4595 = vadd.f32 %v4202, %v4594
      %v4596 = vpop.f32.mrb[0].mxu0
      %4597 = vmatprep.mubr.bf16.mxu0 0
      %4598 = vmatmul.mubr.bf16.gmra.mrb[0].mxu0 %v4457
      %v4599 = vpop.f32.mrb[0].mxu0
      %v4600 = vadd.f32 %v4207, %v4599
      %v4601 = vpop.f32.mrb[0].mxu0
      %v4602 = vpop.f32.mrb[0].mxu0
      %v4603 = vadd.f32 %v4210, %v4602
      %v4604 = vpop.f32.mrb[0].mxu0
      %4605 = vmatprep.mubr.bf16.mxu0 0
      %4606 = vmatmul.mubr.bf16.gmra.mrb[0].mxu0 %v4460
      %v4607 = vpop.f32.mrb[0].mxu0
      %v4608 = vadd.f32 %v4215, %v4607
      %v4609 = vpop.f32.mrb[0].mxu0
      %v4610 = vpop.f32.mrb[0].mxu0
      %v4611 = vadd.f32 %v4218, %v4610
      %v4612 = vpop.f32.mrb[0].mxu0
      %4613 = vmatprep.mubr.bf16.mxu0 0
      %4614 = vmatmul.mubr.bf16.gmra.mrb[0].mxu0 %v4463
      %v4615 = vpop.f32.mrb[0].mxu0
      %v4616 = vadd.f32 %v4223, %v4615
      %v4617 = vpop.f32.mrb[0].mxu0
      %v4618 = vpop.f32.mrb[0].mxu0
      %v4619 = vadd.f32 %v4226, %v4618
      %v4620 = vpop.f32.mrb[0].mxu0
      %4621 = vmatprep.mubr.bf16.mxu0 0
      %4622 = vmatmul.mubr.bf16.gmra.mrb[0].mxu0 %v4466
      %v4623 = vpop.f32.mrb[0].mxu0
      %v4624 = vadd.f32 %v4231, %v4623
      %v4625 = vpop.f32.mrb[0].mxu0
      %v4626 = vpop.f32.mrb[0].mxu0
      %v4627 = vadd.f32 %v4234, %v4626
      %v4628 = vpop.f32.mrb[0].mxu0
      %4629 = vmatprep.mubr.bf16.mxu0 0
      %4630 = vmatmul.mubr.bf16.gmra.mrb[0].mxu0 %v4469
      %v4631 = vpop.f32.mrb[0].mxu0
      %v4632 = vadd.f32 %v4239, %v4631
      %v4633 = vpop.f32.mrb[0].mxu0
      %v4634 = vpop.f32.mrb[0].mxu0
      %v4635 = vadd.f32 %v4242, %v4634
      %v4636 = vpop.f32.mrb[0].mxu0
      %4637 = vmatprep.mubr.bf16.mxu0 0
      %4638 = vmatmul.mubr.bf16.gmra.mrb[0].mxu0 %v4472
      %v4639 = vpop.f32.mrb[0].mxu0
      %v4640 = vadd.f32 %v4247, %v4639
      %v4641 = vpop.f32.mrb[0].mxu0
      %v4642 = vpop.f32.mrb[0].mxu0
      %v4643 = vadd.f32 %v4250, %v4642
      %v4644 = vpop.f32.mrb[0].mxu0
      %4645 = vmatprep.mubr.bf16.mxu0 0
      %4646 = vmatmul.mubr.bf16.gmra.mrb[0].mxu0 %v4475
      %v4647 = vpop.f32.mrb[0].mxu0
      %v4648 = vadd.f32 %v4255, %v4647
      %v4649 = vpop.f32.mrb[0].mxu0
      %v4650 = vpop.f32.mrb[0].mxu0
      %v4651 = vadd.f32 %v4258, %v4650
      %v4652 = vpop.f32.mrb[0].mxu0
      %4653 = vmatprep.mubr.bf16.mxu0 0
      %4654 = vmatmul.mubr.bf16.gmra.mrb[0].mxu0 %v4478
      %v4655 = vpop.f32.mrb[0].mxu0
      %v4656 = vadd.f32 %v4263, %v4655
      %v4657 = vpop.f32.mrb[0].mxu0
      %v4658 = vpop.f32.mrb[0].mxu0
      %v4659 = vadd.f32 %v4266, %v4658
      %v4660 = vpop.f32.mrb[0].mxu0
      %4661 = vmatprep.mubr.bf16.mxu0 0
      %4662 = vmatmul.mubr.bf16.gmra.mrb[0].mxu0 %v4481
      %v4663 = vpop.f32.mrb[0].mxu0
      %v4664 = vadd.f32 %v4271, %v4663
      %v4665 = vpop.f32.mrb[0].mxu0
      %v4666 = vpop.f32.mrb[0].mxu0
      %v4667 = vadd.f32 %v4274, %v4666
      %v4668 = vpop.f32.mrb[0].mxu0
      %4669 = vmatprep.mubr.bf16.mxu0 0
      %4670 = vmatmul.mubr.bf16.gmra.mrb[0].mxu0 %v4484
      %v4671 = vpop.f32.mrb[0].mxu0
      %v4672 = vadd.f32 %v4279, %v4671
      %v4673 = vpop.f32.mrb[0].mxu0
      %v4674 = vpop.f32.mrb[0].mxu0
      %v4675 = vadd.f32 %v4282, %v4674
      %v4676 = vpop.f32.mrb[0].mxu0
      %4677 = vmatprep.mubr.bf16.mxu0 0
      %4678 = vmatmul.mubr.bf16.gmra.mrb[0].mxu0 %v4487
      %v4679 = vpop.f32.mrb[0].mxu0
      %v4680 = vadd.f32 %v4287, %v4679
      %v4681 = vpop.f32.mrb[0].mxu0
      %v4682 = vpop.f32.mrb[0].mxu0
      %v4683 = vadd.f32 %v4290, %v4682
      %v4684 = vpop.f32.mrb[0].mxu0
      %4685 = vmatprep.mubr.bf16.mxu0 0
      %4686 = vmatmul.mubr.bf16.gmra.mrb[0].mxu0 %v4490
      %v4687 = vpop.f32.mrb[0].mxu0
      %v4688 = vadd.f32 %v4295, %v4687
      %v4689 = vpop.f32.mrb[0].mxu0
      %v4690 = vpop.f32.mrb[0].mxu0
      %v4691 = vadd.f32 %v4298, %v4690
      %v4692 = vpop.f32.mrb[0].mxu0
      %4693 = vmatprep.mubr.bf16.mxu0 0
      %4694 = vmatmul.mubr.bf16.gmra.mrb[0].mxu0 %v4493
      %v4695 = vpop.f32.mrb[0].mxu0
      %v4696 = vadd.f32 %v4303, %v4695
      %v4697 = vpop.f32.mrb[0].mxu0
      %v4698 = vpop.f32.mrb[0].mxu0
      %v4699 = vadd.f32 %v4306, %v4698
      %v4700 = vpop.f32.mrb[0].mxu0
      %4701 = vmatprep.mubr.bf16.mxu0 0
      %4702 = vmatmul.mubr.bf16.gmra.mrb[0].mxu0 %v4496
      %v4703 = vpop.f32.mrb[0].mxu0
      %v4704 = vadd.f32 %v4311, %v4703
      %v4705 = vpop.f32.mrb[0].mxu0
      %v4706 = vpop.f32.mrb[0].mxu0
      %v4707 = vadd.f32 %v4314, %v4706
      %v4708 = vpop.f32.mrb[0].mxu0
      %4709 = vmatprep.mubr.bf16.mxu0 0
      %4710 = vmatmul.mubr.bf16.gmra.mrb[0].mxu0 %v4499
      %v4711 = vpop.f32.mrb[0].mxu0
      %v4712 = vadd.f32 %v4319, %v4711
      %v4713 = vpop.f32.mrb[0].mxu0
      %v4714 = vpop.f32.mrb[0].mxu0
      %v4715 = vadd.f32 %v4322, %v4714
      %v4716 = vpop.f32.mrb[0].mxu0
      %4717 = vmatprep.mubr.bf16.mxu0 0
      %4718 = vmatmul.mubr.bf16.gmra.mrb[0].mxu0 %v4502
      %v4719 = vpop.f32.mrb[0].mxu0
      %v4720 = vadd.f32 %v4327, %v4719
      %v4721 = vpop.f32.mrb[0].mxu0
      %v4722 = vpop.f32.mrb[0].mxu0
      %v4723 = vadd.f32 %v4330, %v4722
      %v4724 = vpop.f32.mrb[0].mxu0
      %4725 = vmatprep.mubr.bf16.mxu0 0
      %4726 = vmatmul.mubr.bf16.gmra.mrb[0].mxu0 %v4505
      %v4727 = vpop.f32.mrb[0].mxu0
      %v4728 = vadd.f32 %v4335, %v4727
      %v4729 = vpop.f32.mrb[0].mxu0
      %v4730 = vpop.f32.mrb[0].mxu0
      %v4731 = vadd.f32 %v4338, %v4730
      %v4732 = vpop.f32.mrb[0].mxu0
      %4733 = vmatprep.mubr.bf16.mxu0 0
      %4734 = vmatmul.mubr.bf16.gmra.mrb[0].mxu0 %v4508
      %v4735 = vpop.f32.mrb[0].mxu0
      %v4736 = vadd.f32 %v4343, %v4735
      %v4737 = vpop.f32.mrb[0].mxu0
      %v4738 = vpop.f32.mrb[0].mxu0
      %v4739 = vadd.f32 %v4346, %v4738
      %v4740 = vpop.f32.mrb[0].mxu0
      %4741 = vmatprep.mubr.bf16.mxu0 0
      %4742 = vmatmul.mubr.bf16.gmra.mrb[0].mxu0 %v4511
      %v4743 = vpop.f32.mrb[0].mxu0
      %v4744 = vadd.f32 %v4351, %v4743
      %v4745 = vpop.f32.mrb[0].mxu0
      %v4746 = vpop.f32.mrb[0].mxu0
      %v4747 = vadd.f32 %v4354, %v4746
      %v4748 = vpop.f32.mrb[0].mxu0
      %4749 = vmatprep.mubr.bf16.mxu0 0
      %4750 = vmatmul.mubr.bf16.gmra.mrb[0].mxu0 %v4514
      %v4751 = vpop.f32.mrb[0].mxu0
      %v4752 = vadd.f32 %v4359, %v4751
      %v4753 = vpop.f32.mrb[0].mxu0
      %v4754 = vpop.f32.mrb[0].mxu0
      %v4755 = vadd.f32 %v4362, %v4754
      %v4756 = vpop.f32.mrb[0].mxu0
      %4757 = vmatprep.mubr.bf16.mxu0 0
      %4758 = vmatmul.mubr.bf16.gmra.mrb[0].mxu0 %v4517
      %v4759 = vpop.f32.mrb[0].mxu0
      %v4760 = vadd.f32 %v4367, %v4759
      %v4761 = vpop.f32.mrb[0].mxu0
      %v4762 = vpop.f32.mrb[0].mxu0
      %v4763 = vadd.f32 %v4370, %v4762
      %v4764 = vpop.f32.mrb[0].mxu0
      %4765 = vmatprep.mubr.bf16.mxu0 0
      %4766 = vmatmul.mubr.bf16.gmra.mrb[0].mxu0 %v4520
      %v4767 = vpop.f32.mrb[0].mxu0
      %v4768 = vadd.f32 %v4375, %v4767
      %v4769 = vpop.f32.mrb[0].mxu0
      %v4770 = vpop.f32.mrb[0].mxu0
      %v4771 = vadd.f32 %v4378, %v4770
      %v4772 = vpop.f32.mrb[0].mxu0
      %4773 = vmatprep.mubr.bf16.mxu0 0
      %4774 = vmatmul.mubr.bf16.gmra.mrb[0].mxu0 %v4523
      %v4775 = vpop.f32.mrb[0].mxu0
      %v4776 = vadd.f32 %v4383, %v4775
      %v4777 = vpop.f32.mrb[0].mxu0
      %v4778 = vpop.f32.mrb[0].mxu0
      %v4779 = vadd.f32 %v4386, %v4778
      %v4780 = vpop.f32.mrb[0].mxu0
      %4781 = vmatprep.mubr.bf16.mxu0 0
      %4782 = vmatmul.mubr.bf16.gmra.mrb[0].mxu0 %v4526
      %v4783 = vpop.f32.mrb[0].mxu0
      %v4784 = vadd.f32 %v4391, %v4783
      %v4785 = vpop.f32.mrb[0].mxu0
      %v4786 = vpop.f32.mrb[0].mxu0
      %v4787 = vadd.f32 %v4394, %v4786
      %v4788 = vpop.f32.mrb[0].mxu0
      %4789 = vmatprep.mubr.bf16.mxu0 0
      %4790 = vmatmul.mubr.bf16.gmra.mrb[0].mxu0 %v4529
      %v4791 = vpop.f32.mrb[0].mxu0
      %v4792 = vadd.f32 %v4399, %v4791
      %v4793 = vpop.f32.mrb[0].mxu0
      %v4794 = vpop.f32.mrb[0].mxu0
      %v4795 = vadd.f32 %v4402, %v4794
      %v4796 = vpop.f32.mrb[0].mxu0
      %4797 = vmatprep.mubr.bf16.mxu0 0
      %4798 = vmatmul.mubr.bf16.gmra.mrb[0].mxu0 %v4532
      %v4799 = vpop.f32.mrb[0].mxu0
      %v4800 = vadd.f32 %v4407, %v4799
      %v4801 = vpop.f32.mrb[0].mxu0
      %v4802 = vpop.f32.mrb[0].mxu0
      %v4803 = vadd.f32 %v4410, %v4802
      %v4804 = vpop.f32.mrb[0].mxu0
      %4805 = vmatprep.mubr.bf16.mxu0 0
      %4806 = vmatmul.mubr.bf16.gmra.mrb[0].mxu0 %v4535
      %v4807 = vpop.f32.mrb[0].mxu0
      %v4808 = vadd.f32 %v4415, %v4807
      %v4809 = vpop.f32.mrb[0].mxu0
      %v4810 = vpop.f32.mrb[0].mxu0
      %v4811 = vadd.f32 %v4418, %v4810
      %v4812 = vpop.f32.mrb[0].mxu0
      %4813 = vmatprep.mubr.bf16.mxu0 0
      %4814 = vmatmul.mubr.bf16.gmra.mrb[0].mxu0 %v4538
      %v4815 = vpop.f32.mrb[0].mxu0
      %v4816 = vadd.f32 %v4423, %v4815
      %v4817 = vpop.f32.mrb[0].mxu0
      %v4818 = vpop.f32.mrb[0].mxu0
      %v4819 = vadd.f32 %v4426, %v4818
      %v4820 = vpop.f32.mrb[0].mxu0
      %4821 = vmatprep.mubr.bf16.mxu0 0
      %4822 = vmatmul.mubr.bf16.gmra.mrb[0].mxu0 %v4541
      %v4823 = vpop.f32.mrb[0].mxu0
      %v4824 = vadd.f32 %v4431, %v4823
      %v4825 = vpop.f32.mrb[0].mxu0
      %v4826 = vpop.f32.mrb[0].mxu0
      %v4827 = vadd.f32 %v4434, %v4826
      %v4828 = vpop.f32.mrb[0].mxu0
      %4829 = vmatprep.mubr.bf16.mxu0 0
      %4830 = vmatmul.mubr.bf16.gmra.mrb[0].mxu0 %v4544
      %v4831 = vpop.f32.mrb[0].mxu0
      %v4832 = vadd.f32 %v4439, %v4831
      %v4833 = vpop.f32.mrb[0].mxu0
      %v4834 = vpop.f32.mrb[0].mxu0
      %v4835 = vadd.f32 %v4442, %v4834
      %v4836 = vpop.f32.mrb[0].mxu0
      %4837 = vdwg.mxu0
      %s4838 = scalar_lea.vmem [#allocation4], 16
      %v4839 = vld [vmem:[%s4838] sm:$0xff]
      %v4840 = vld [vmem:[%s4838 + $0x8] sm:$0xff]
      %v4841 = vld [vmem:[%s4838 + $0x10] sm:$0xff]
      %v4842 = vld [vmem:[%s4838 + $0x18] sm:$0xff]
      %v4843 = vld [vmem:[%s4838 + $0x20] sm:$0xff]
      %v4844 = vld [vmem:[%s4838 + $0x28] sm:$0xff]
      %v4845 = vld [vmem:[%s4838 + $0x30] sm:$0xff]
      %v4846 = vld [vmem:[%s4838 + $0x38] sm:$0xff]
      %v4847 = vld [vmem:[%s4838 + $0x40] sm:$0xff]
      %v4848 = vld [vmem:[%s4838 + $0x48] sm:$0xff]
      %v4849 = vld [vmem:[%s4838 + $0x50] sm:$0xff]
      %v4850 = vld [vmem:[%s4838 + $0x58] sm:$0xff]
      %v4851 = vld [vmem:[%s4838 + $0x60] sm:$0xff]
      %v4852 = vld [vmem:[%s4838 + $0x68] sm:$0xff]
      %v4853 = vld [vmem:[%s4838 + $0x70] sm:$0xff]
      %v4854 = vld [vmem:[%s4838 + $0x78] sm:$0xff]
      %v4855 = vld [vmem:[%s4838 + $0x90] sm:$0xff]
      %v4856 = vld [vmem:[%s4838 + $0x98] sm:$0xff]
      %v4857 = vld [vmem:[%s4838 + $0xa0] sm:$0xff]
      %v4858 = vld [vmem:[%s4838 + $0xa8] sm:$0xff]
      %v4859 = vld [vmem:[%s4838 + $0xb0] sm:$0xff]
      %v4860 = vld [vmem:[%s4838 + $0xb8] sm:$0xff]
      %v4861 = vld [vmem:[%s4838 + $0xc0] sm:$0xff]
      %v4862 = vld [vmem:[%s4838 + $0xc8] sm:$0xff]
      %v4863 = vld [vmem:[%s4838 + $0xd0] sm:$0xff]
      %v4864 = vld [vmem:[%s4838 + $0xd8] sm:$0xff]
      %v4865 = vld [vmem:[%s4838 + $0xe0] sm:$0xff]
      %v4866 = vld [vmem:[%s4838 + $0xe8] sm:$0xff]
      %v4867 = vld [vmem:[%s4838 + $0xf0] sm:$0xff]
      %v4868 = vld [vmem:[%s4838 + $0xf8] sm:$0xff]
      %v4869 = vld [vmem:[%s4838 + $0x100] sm:$0xff]
      %v4870 = vld [vmem:[%s4838 + $0x108] sm:$0xff]
      %s4871 = scalar_lea.vmem %s3, 16
      %v4872 = vld [vmem:[%s4871] sm:$0xf]
      %v4873 = vld [vmem:[%s4871 + $0x4] sm:$0x3]
      %v4876 = vunpack.c.l.b16 %v4872
      %v4877 = vunpack.c.l.b16 %v4873
      %v4878 = vpack.c.b16 %v4877, %v4876
      %v4880 = vsel %vm4055, %v4839, 0
      %v4883 = vsel %vm4055, %v4840, 0
      %v4886 = vsel %vm4055, %v4841, 0
      %v4889 = vsel %vm4055, %v4842, 0
      %v4892 = vsel %vm4055, %v4843, 0
      %v4895 = vsel %vm4055, %v4844, 0
      %v4898 = vsel %vm4055, %v4845, 0
      %v4901 = vsel %vm4055, %v4846, 0
      %v4904 = vsel %vm4055, %v4847, 0
      %v4907 = vsel %vm4055, %v4848, 0
      %v4910 = vsel %vm4055, %v4849, 0
      %v4913 = vsel %vm4055, %v4850, 0
      %v4916 = vsel %vm4055, %v4851, 0
      %v4919 = vsel %vm4055, %v4852, 0
      %v4922 = vsel %vm4055, %v4853, 0
      %v4925 = vsel %vm4055, %v4854, 0
      %v4928 = vsel %vm4055, %v4855, 0
      %v4931 = vsel %vm4055, %v4856, 0
      %v4934 = vsel %vm4055, %v4857, 0
      %v4937 = vsel %vm4055, %v4858, 0
      %v4940 = vsel %vm4055, %v4859, 0
      %v4943 = vsel %vm4055, %v4860, 0
      %v4946 = vsel %vm4055, %v4861, 0
      %v4949 = vsel %vm4055, %v4862, 0
      %v4952 = vsel %vm4055, %v4863, 0
      %v4955 = vsel %vm4055, %v4864, 0
      %v4958 = vsel %vm4055, %v4865, 0
      %v4961 = vsel %vm4055, %v4866, 0
      %v4964 = vsel %vm4055, %v4867, 0
      %v4967 = vsel %vm4055, %v4868, 0
      %v4970 = vsel %vm4055, %v4869, 0
      %v4973 = vsel %vm4055, %v4870, 0
      %v4976 = vsel %vm4152, %v4878, 0
      %4978 = vmatprep.subr.bf16.mxu0 0
      %4979 = vmatpush1.bf16.msra.mxu0 %v4976
      %4980 = vmatprep.subr.bf16.mxu0 0
      %4981 = vmatpush1.bf16.msra.mxu0 0
      %4982 = vmatprep.subr.bf16.mxu0 0
      %4983 = vmatpush1.bf16.msra.mxu0 0
      %4984 = vmatprep.subr.bf16.mxu0 0
      %4985 = vmatpush1.bf16.msra.mxu0 0
      %4986 = vmatprep.subr.bf16.mxu0 0
      %4987 = vmatpush1.bf16.msra.mxu0 0
      %4988 = vmatprep.subr.bf16.mxu0 0
      %4989 = vmatpush1.bf16.msra.mxu0 0
      %4990 = vmatprep.subr.bf16.mxu0 0
      %4991 = vmatpush1.bf16.msra.mxu0 0
      %4992 = vmatprep.subr.bf16.mxu0 0
      %4993 = vmatpush1.bf16.msra.mxu0 0
      %4994 = vmatprep.subr.bf16.mxu0 0
      %4995 = vmatpush1.bf16.msra.mxu0 0
      %4996 = vmatprep.subr.bf16.mxu0 0
      %4997 = vmatpush1.bf16.msra.mxu0 0
      %4998 = vmatprep.subr.bf16.mxu0 0
      %4999 = vmatpush1.bf16.msra.mxu0 0
      %5000 = vmatprep.subr.bf16.mxu0 0
      %5001 = vmatpush1.bf16.msra.mxu0 0
      %5002 = vmatprep.subr.bf16.mxu0 0
      %5003 = vmatpush1.bf16.msra.mxu0 0
      %5004 = vmatprep.subr.bf16.mxu0 0
      %5005 = vmatpush1.bf16.msra.mxu0 0
      %5006 = vmatprep.subr.bf16.mxu0 0
      %5007 = vmatpush1.bf16.msra.mxu0 0
      %5008 = vmatprep.subr.bf16.mxu0 0
      %5009 = vmatpush1.bf16.msra.mxu0 0
      %5010 = vmatprep.mubr.bf16.mxu0 0
      %5011 = vmatmul.mubr.bf16.gmra.mrb[0].mxu0 %v4880
      %v5012 = vpop.f32.mrb[0].mxu0
      %v5013 = vadd.f32 0.0, %v5012
      %v5014 = vpop.f32.mrb[0].mxu0
      %v5015 = vpop.f32.mrb[0].mxu0
      %v5016 = vadd.f32 0.0, %v5015
      %v5017 = vpop.f32.mrb[0].mxu0
      %5018 = vmatprep.mubr.bf16.mxu0 0
      %5019 = vmatmul.mubr.bf16.gmra.mrb[0].mxu0 %v4883
      %v5020 = vpop.f32.mrb[0].mxu0
      %v5021 = vadd.f32 0.0, %v5020
      %v5022 = vpop.f32.mrb[0].mxu0
      %v5023 = vpop.f32.mrb[0].mxu0
      %v5024 = vadd.f32 0.0, %v5023
      %v5025 = vpop.f32.mrb[0].mxu0
      %5026 = vmatprep.mubr.bf16.mxu0 0
      %5027 = vmatmul.mubr.bf16.gmra.mrb[0].mxu0 %v4886
      %v5028 = vpop.f32.mrb[0].mxu0
      %v5029 = vadd.f32 0.0, %v5028
      %v5030 = vpop.f32.mrb[0].mxu0
      %v5031 = vpop.f32.mrb[0].mxu0
      %v5032 = vadd.f32 0.0, %v5031
      %v5033 = vpop.f32.mrb[0].mxu0
      %5034 = vmatprep.mubr.bf16.mxu0 0
      %5035 = vmatmul.mubr.bf16.gmra.mrb[0].mxu0 %v4889
      %v5036 = vpop.f32.mrb[0].mxu0
      %v5037 = vadd.f32 0.0, %v5036
      %v5038 = vpop.f32.mrb[0].mxu0
      %v5039 = vpop.f32.mrb[0].mxu0
      %v5040 = vadd.f32 0.0, %v5039
      %v5041 = vpop.f32.mrb[0].mxu0
      %5042 = vmatprep.mubr.bf16.mxu0 0
      %5043 = vmatmul.mubr.bf16.gmra.mrb[0].mxu0 %v4892
      %v5044 = vpop.f32.mrb[0].mxu0
      %v5045 = vadd.f32 0.0, %v5044
      %v5046 = vpop.f32.mrb[0].mxu0
      %v5047 = vpop.f32.mrb[0].mxu0
      %v5048 = vadd.f32 0.0, %v5047
      %v5049 = vpop.f32.mrb[0].mxu0
      %5050 = vmatprep.mubr.bf16.mxu0 0
      %5051 = vmatmul.mubr.bf16.gmra.mrb[0].mxu0 %v4895
      %v5052 = vpop.f32.mrb[0].mxu0
      %v5053 = vadd.f32 0.0, %v5052
      %v5054 = vpop.f32.mrb[0].mxu0
      %v5055 = vpop.f32.mrb[0].mxu0
      %v5056 = vadd.f32 0.0, %v5055
      %v5057 = vpop.f32.mrb[0].mxu0
      %5058 = vmatprep.mubr.bf16.mxu0 0
      %5059 = vmatmul.mubr.bf16.gmra.mrb[0].mxu0 %v4898
      %v5060 = vpop.f32.mrb[0].mxu0
      %v5061 = vadd.f32 0.0, %v5060
      %v5062 = vpop.f32.mrb[0].mxu0
      %v5063 = vpop.f32.mrb[0].mxu0
      %v5064 = vadd.f32 0.0, %v5063
      %v5065 = vpop.f32.mrb[0].mxu0
      %5066 = vmatprep.mubr.bf16.mxu0 0
      %5067 = vmatmul.mubr.bf16.gmra.mrb[0].mxu0 %v4901
      %v5068 = vpop.f32.mrb[0].mxu0
      %v5069 = vadd.f32 0.0, %v5068
      %v5070 = vpop.f32.mrb[0].mxu0
      %v5071 = vpop.f32.mrb[0].mxu0
      %v5072 = vadd.f32 0.0, %v5071
      %v5073 = vpop.f32.mrb[0].mxu0
      %5074 = vmatprep.mubr.bf16.mxu0 0
      %5075 = vmatmul.mubr.bf16.gmra.mrb[0].mxu0 %v4904
      %v5076 = vpop.f32.mrb[0].mxu0
      %v5077 = vadd.f32 0.0, %v5076
      %v5078 = vpop.f32.mrb[0].mxu0
      %v5079 = vpop.f32.mrb[0].mxu0
      %v5080 = vadd.f32 0.0, %v5079
      %v5081 = vpop.f32.mrb[0].mxu0
      %5082 = vmatprep.mubr.bf16.mxu0 0
      %5083 = vmatmul.mubr.bf16.gmra.mrb[0].mxu0 %v4907
      %v5084 = vpop.f32.mrb[0].mxu0
      %v5085 = vadd.f32 0.0, %v5084
      %v5086 = vpop.f32.mrb[0].mxu0
      %v5087 = vpop.f32.mrb[0].mxu0
      %v5088 = vadd.f32 0.0, %v5087
      %v5089 = vpop.f32.mrb[0].mxu0
      %5090 = vmatprep.mubr.bf16.mxu0 0
      %5091 = vmatmul.mubr.bf16.gmra.mrb[0].mxu0 %v4910
      %v5092 = vpop.f32.mrb[0].mxu0
      %v5093 = vadd.f32 0.0, %v5092
      %v5094 = vpop.f32.mrb[0].mxu0
      %v5095 = vpop.f32.mrb[0].mxu0
      %v5096 = vadd.f32 0.0, %v5095
      %v5097 = vpop.f32.mrb[0].mxu0
      %5098 = vmatprep.mubr.bf16.mxu0 0
      %5099 = vmatmul.mubr.bf16.gmra.mrb[0].mxu0 %v4913
      %v5100 = vpop.f32.mrb[0].mxu0
      %v5101 = vadd.f32 0.0, %v5100
      %v5102 = vpop.f32.mrb[0].mxu0
      %v5103 = vpop.f32.mrb[0].mxu0
      %v5104 = vadd.f32 0.0, %v5103
      %v5105 = vpop.f32.mrb[0].mxu0
      %5106 = vmatprep.mubr.bf16.mxu0 0
      %5107 = vmatmul.mubr.bf16.gmra.mrb[0].mxu0 %v4916
      %v5108 = vpop.f32.mrb[0].mxu0
      %v5109 = vadd.f32 0.0, %v5108
      %v5110 = vpop.f32.mrb[0].mxu0
      %v5111 = vpop.f32.mrb[0].mxu0
      %v5112 = vadd.f32 0.0, %v5111
      %v5113 = vpop.f32.mrb[0].mxu0
      %5114 = vmatprep.mubr.bf16.mxu0 0
      %5115 = vmatmul.mubr.bf16.gmra.mrb[0].mxu0 %v4919
      %v5116 = vpop.f32.mrb[0].mxu0
      %v5117 = vadd.f32 0.0, %v5116
      %v5118 = vpop.f32.mrb[0].mxu0
      %v5119 = vpop.f32.mrb[0].mxu0
      %v5120 = vadd.f32 0.0, %v5119
      %v5121 = vpop.f32.mrb[0].mxu0
      %5122 = vmatprep.mubr.bf16.mxu0 0
      %5123 = vmatmul.mubr.bf16.gmra.mrb[0].mxu0 %v4922
      %v5124 = vpop.f32.mrb[0].mxu0
      %v5125 = vadd.f32 0.0, %v5124
      %v5126 = vpop.f32.mrb[0].mxu0
      %v5127 = vpop.f32.mrb[0].mxu0
      %v5128 = vadd.f32 0.0, %v5127
      %v5129 = vpop.f32.mrb[0].mxu0
      %5130 = vmatprep.mubr.bf16.mxu0 0
      %5131 = vmatmul.mubr.bf16.gmra.mrb[0].mxu0 %v4925
      %v5132 = vpop.f32.mrb[0].mxu0
      %v5133 = vadd.f32 0.0, %v5132
      %v5134 = vpop.f32.mrb[0].mxu0
      %v5135 = vpop.f32.mrb[0].mxu0
      %v5136 = vadd.f32 0.0, %v5135
      %v5137 = vpop.f32.mrb[0].mxu0
      %5138 = vmatprep.mubr.bf16.mxu0 0
      %5139 = vmatmul.mubr.bf16.gmra.mrb[0].mxu0 %v4928
      %v5140 = vpop.f32.mrb[0].mxu0
      %v5141 = vadd.f32 0.0, %v5140
      %v5142 = vpop.f32.mrb[0].mxu0
      %v5143 = vpop.f32.mrb[0].mxu0
      %v5144 = vadd.f32 0.0, %v5143
      %v5145 = vpop.f32.mrb[0].mxu0
      %5146 = vmatprep.mubr.bf16.mxu0 0
      %5147 = vmatmul.mubr.bf16.gmra.mrb[0].mxu0 %v4931
      %v5148 = vpop.f32.mrb[0].mxu0
      %v5149 = vadd.f32 0.0, %v5148
      %v5150 = vpop.f32.mrb[0].mxu0
      %v5151 = vpop.f32.mrb[0].mxu0
      %v5152 = vadd.f32 0.0, %v5151
      %v5153 = vpop.f32.mrb[0].mxu0
      %5154 = vmatprep.mubr.bf16.mxu0 0
      %5155 = vmatmul.mubr.bf16.gmra.mrb[0].mxu0 %v4934
      %v5156 = vpop.f32.mrb[0].mxu0
      %v5157 = vadd.f32 0.0, %v5156
      %v5158 = vpop.f32.mrb[0].mxu0
      %v5159 = vpop.f32.mrb[0].mxu0
      %v5160 = vadd.f32 0.0, %v5159
      %v5161 = vpop.f32.mrb[0].mxu0
      %5162 = vmatprep.mubr.bf16.mxu0 0
      %5163 = vmatmul.mubr.bf16.gmra.mrb[0].mxu0 %v4937
      %v5164 = vpop.f32.mrb[0].mxu0
      %v5165 = vadd.f32 0.0, %v5164
      %v5166 = vpop.f32.mrb[0].mxu0
      %v5167 = vpop.f32.mrb[0].mxu0
      %v5168 = vadd.f32 0.0, %v5167
      %v5169 = vpop.f32.mrb[0].mxu0
      %5170 = vmatprep.mubr.bf16.mxu0 0
      %5171 = vmatmul.mubr.bf16.gmra.mrb[0].mxu0 %v4940
      %v5172 = vpop.f32.mrb[0].mxu0
      %v5173 = vadd.f32 0.0, %v5172
      %v5174 = vpop.f32.mrb[0].mxu0
      %v5175 = vpop.f32.mrb[0].mxu0
      %v5176 = vadd.f32 0.0, %v5175
      %v5177 = vpop.f32.mrb[0].mxu0
      %5178 = vmatprep.mubr.bf16.mxu0 0
      %5179 = vmatmul.mubr.bf16.gmra.mrb[0].mxu0 %v4943
      %v5180 = vpop.f32.mrb[0].mxu0
      %v5181 = vadd.f32 0.0, %v5180
      %v5182 = vpop.f32.mrb[0].mxu0
      %v5183 = vpop.f32.mrb[0].mxu0
      %v5184 = vadd.f32 0.0, %v5183
      %v5185 = vpop.f32.mrb[0].mxu0
      %5186 = vmatprep.mubr.bf16.mxu0 0
      %5187 = vmatmul.mubr.bf16.gmra.mrb[0].mxu0 %v4946
      %v5188 = vpop.f32.mrb[0].mxu0
      %v5189 = vadd.f32 0.0, %v5188
      %v5190 = vpop.f32.mrb[0].mxu0
      %v5191 = vpop.f32.mrb[0].mxu0
      %v5192 = vadd.f32 0.0, %v5191
      %v5193 = vpop.f32.mrb[0].mxu0
      %5194 = vmatprep.mubr.bf16.mxu0 0
      %5195 = vmatmul.mubr.bf16.gmra.mrb[0].mxu0 %v4949
      %v5196 = vpop.f32.mrb[0].mxu0
      %v5197 = vadd.f32 0.0, %v5196
      %v5198 = vpop.f32.mrb[0].mxu0
      %v5199 = vpop.f32.mrb[0].mxu0
      %v5200 = vadd.f32 0.0, %v5199
      %v5201 = vpop.f32.mrb[0].mxu0
      %5202 = vmatprep.mubr.bf16.mxu0 0
      %5203 = vmatmul.mubr.bf16.gmra.mrb[0].mxu0 %v4952
      %v5204 = vpop.f32.mrb[0].mxu0
      %v5205 = vadd.f32 0.0, %v5204
      %v5206 = vpop.f32.mrb[0].mxu0
      %v5207 = vpop.f32.mrb[0].mxu0
      %v5208 = vadd.f32 0.0, %v5207
      %v5209 = vpop.f32.mrb[0].mxu0
      %5210 = vmatprep.mubr.bf16.mxu0 0
      %5211 = vmatmul.mubr.bf16.gmra.mrb[0].mxu0 %v4955
      %v5212 = vpop.f32.mrb[0].mxu0
      %v5213 = vadd.f32 0.0, %v5212
      %v5214 = vpop.f32.mrb[0].mxu0
      %v5215 = vpop.f32.mrb[0].mxu0
      %v5216 = vadd.f32 0.0, %v5215
      %v5217 = vpop.f32.mrb[0].mxu0
      %5218 = vmatprep.mubr.bf16.mxu0 0
      %5219 = vmatmul.mubr.bf16.gmra.mrb[0].mxu0 %v4958
      %v5220 = vpop.f32.mrb[0].mxu0
      %v5221 = vadd.f32 0.0, %v5220
      %v5222 = vpop.f32.mrb[0].mxu0
      %v5223 = vpop.f32.mrb[0].mxu0
      %v5224 = vadd.f32 0.0, %v5223
      %v5225 = vpop.f32.mrb[0].mxu0
      %5226 = vmatprep.mubr.bf16.mxu0 0
      %5227 = vmatmul.mubr.bf16.gmra.mrb[0].mxu0 %v4961
      %v5228 = vpop.f32.mrb[0].mxu0
      %v5229 = vadd.f32 0.0, %v5228
      %v5230 = vpop.f32.mrb[0].mxu0
      %v5231 = vpop.f32.mrb[0].mxu0
      %v5232 = vadd.f32 0.0, %v5231
      %v5233 = vpop.f32.mrb[0].mxu0
      %5234 = vmatprep.mubr.bf16.mxu0 0
      %5235 = vmatmul.mubr.bf16.gmra.mrb[0].mxu0 %v4964
      %v5236 = vpop.f32.mrb[0].mxu0
      %v5237 = vadd.f32 0.0, %v5236
      %v5238 = vpop.f32.mrb[0].mxu0
      %v5239 = vpop.f32.mrb[0].mxu0
      %v5240 = vadd.f32 0.0, %v5239
      %v5241 = vpop.f32.mrb[0].mxu0
      %5242 = vmatprep.mubr.bf16.mxu0 0
      %5243 = vmatmul.mubr.bf16.gmra.mrb[0].mxu0 %v4967
      %v5244 = vpop.f32.mrb[0].mxu0
      %v5245 = vadd.f32 0.0, %v5244
      %v5246 = vpop.f32.mrb[0].mxu0
      %v5247 = vpop.f32.mrb[0].mxu0
      %v5248 = vadd.f32 0.0, %v5247
      %v5249 = vpop.f32.mrb[0].mxu0
      %5250 = vmatprep.mubr.bf16.mxu0 0
      %5251 = vmatmul.mubr.bf16.gmra.mrb[0].mxu0 %v4970
      %v5252 = vpop.f32.mrb[0].mxu0
      %v5253 = vadd.f32 0.0, %v5252
      %v5254 = vpop.f32.mrb[0].mxu0
      %v5255 = vpop.f32.mrb[0].mxu0
      %v5256 = vadd.f32 0.0, %v5255
      %v5257 = vpop.f32.mrb[0].mxu0
      %5258 = vmatprep.mubr.bf16.mxu0 0
      %5259 = vmatmul.mubr.bf16.gmra.mrb[0].mxu0 %v4973
      %v5260 = vpop.f32.mrb[0].mxu0
      %v5261 = vadd.f32 0.0, %v5260
      %v5262 = vpop.f32.mrb[0].mxu0
      %v5263 = vpop.f32.mrb[0].mxu0
      %v5264 = vadd.f32 0.0, %v5263
      %v5265 = vpop.f32.mrb[0].mxu0
      %5266 = vdwg.mxu0
      %v5267 = vadd.f32 %v4584, %v5013
      %v5268 = vadd.f32 %v4587, %v5016
      %v5269 = vadd.f32 %v4592, %v5021
      %v5270 = vadd.f32 %v4595, %v5024
      %v5271 = vadd.f32 %v4600, %v5029
      %v5272 = vadd.f32 %v4603, %v5032
      %v5273 = vadd.f32 %v4608, %v5037
      %v5274 = vadd.f32 %v4611, %v5040
      %v5275 = vadd.f32 %v4616, %v5045
      %v5276 = vadd.f32 %v4619, %v5048
      %v5277 = vadd.f32 %v4624, %v5053
      %v5278 = vadd.f32 %v4627, %v5056
      %v5279 = vadd.f32 %v4632, %v5061
      %v5280 = vadd.f32 %v4635, %v5064
      %v5281 = vadd.f32 %v4640, %v5069
      %v5282 = vadd.f32 %v4643, %v5072
      %v5283 = vadd.f32 %v4648, %v5077
      %v5284 = vadd.f32 %v4651, %v5080
      %v5285 = vadd.f32 %v4656, %v5085
      %v5286 = vadd.f32 %v4659, %v5088
      %v5287 = vadd.f32 %v4664, %v5093
      %v5288 = vadd.f32 %v4667, %v5096
      %v5289 = vadd.f32 %v4672, %v5101
      %v5290 = vadd.f32 %v4675, %v5104
      %v5291 = vadd.f32 %v4680, %v5109
      %v5292 = vadd.f32 %v4683, %v5112
      %v5293 = vadd.f32 %v4688, %v5117
      %v5294 = vadd.f32 %v4691, %v5120
      %v5295 = vadd.f32 %v4696, %v5125
      %v5296 = vadd.f32 %v4699, %v5128
      %v5297 = vadd.f32 %v4704, %v5133
      %v5298 = vadd.f32 %v4707, %v5136
      %v5299 = vadd.f32 %v4712, %v5141
      %v5300 = vadd.f32 %v4715, %v5144
      %v5301 = vadd.f32 %v4720, %v5149
      %v5302 = vadd.f32 %v4723, %v5152
      %v5303 = vadd.f32 %v4728, %v5157
      %v5304 = vadd.f32 %v4731, %v5160
      %v5305 = vadd.f32 %v4736, %v5165
      %v5306 = vadd.f32 %v4739, %v5168
      %v5307 = vadd.f32 %v4744, %v5173
      %v5308 = vadd.f32 %v4747, %v5176
      %v5309 = vadd.f32 %v4752, %v5181
      %v5310 = vadd.f32 %v4755, %v5184
      %v5311 = vadd.f32 %v4760, %v5189
      %v5312 = vadd.f32 %v4763, %v5192
      %v5313 = vadd.f32 %v4768, %v5197
      %v5314 = vadd.f32 %v4771, %v5200
      %v5315 = vadd.f32 %v4776, %v5205
      %v5316 = vadd.f32 %v4779, %v5208
      %v5317 = vadd.f32 %v4784, %v5213
      %v5318 = vadd.f32 %v4787, %v5216
      %v5319 = vadd.f32 %v4792, %v5221
      %v5320 = vadd.f32 %v4795, %v5224
      %v5321 = vadd.f32 %v4800, %v5229
      %v5322 = vadd.f32 %v4803, %v5232
      %v5323 = vadd.f32 %v4808, %v5237
      %v5324 = vadd.f32 %v4811, %v5240
      %v5325 = vadd.f32 %v4816, %v5245
      %v5326 = vadd.f32 %v4819, %v5248
      %v5327 = vadd.f32 %v4824, %v5253
      %v5328 = vadd.f32 %v4827, %v5256
      %v5329 = vadd.f32 %v4832, %v5261
      %v5330 = vadd.f32 %v4835, %v5264
      %v5331 = vld [vmem:[%s4] sm:$0x1]
      %v5333 = vlaneseq
      %v5334 = vshrl.u32 %v5333, 7
      %v5335 = vsub.s32 0, %v5334
      %v5336 = vrot.slane %v5331, %v5335
      %v5338 = vadd.f32 %v5267, %v5336
      %v5339 = vadd.f32 %v5268, %v5336
      %v5340 = vadd.f32 %v5269, %v5336
      %v5341 = vadd.f32 %v5270, %v5336
      %v5342 = vadd.f32 %v5271, %v5336
      %v5343 = vadd.f32 %v5272, %v5336
      %v5344 = vadd.f32 %v5273, %v5336
      %v5345 = vadd.f32 %v5274, %v5336
      %v5346 = vadd.f32 %v5275, %v5336
      %v5347 = vadd.f32 %v5276, %v5336
      %v5348 = vadd.f32 %v5277, %v5336
      %v5349 = vadd.f32 %v5278, %v5336
      %v5350 = vadd.f32 %v5279, %v5336
      %v5351 = vadd.f32 %v5280, %v5336
      %v5352 = vadd.f32 %v5281, %v5336
      %v5353 = vadd.f32 %v5282, %v5336
      %v5354 = vadd.f32 %v5283, %v5336
      %v5355 = vadd.f32 %v5284, %v5336
      %v5356 = vadd.f32 %v5285, %v5336
      %v5357 = vadd.f32 %v5286, %v5336
      %v5358 = vadd.f32 %v5287, %v5336
      %v5359 = vadd.f32 %v5288, %v5336
      %v5360 = vadd.f32 %v5289, %v5336
      %v5361 = vadd.f32 %v5290, %v5336
      %v5362 = vadd.f32 %v5291, %v5336
      %v5363 = vadd.f32 %v5292, %v5336
      %v5364 = vadd.f32 %v5293, %v5336
      %v5365 = vadd.f32 %v5294, %v5336
      %v5366 = vadd.f32 %v5295, %v5336
      %v5367 = vadd.f32 %v5296, %v5336
      %v5368 = vadd.f32 %v5297, %v5336
      %v5369 = vadd.f32 %v5298, %v5336
      %v5370 = vadd.f32 %v5299, %v5336
      %v5371 = vadd.f32 %v5300, %v5336
      %v5372 = vadd.f32 %v5301, %v5336
      %v5373 = vadd.f32 %v5302, %v5336
      %v5374 = vadd.f32 %v5303, %v5336
      %v5375 = vadd.f32 %v5304, %v5336
      %v5376 = vadd.f32 %v5305, %v5336
      %v5377 = vadd.f32 %v5306, %v5336
      %v5378 = vadd.f32 %v5307, %v5336
      %v5379 = vadd.f32 %v5308, %v5336
      %v5380 = vadd.f32 %v5309, %v5336
      %v5381 = vadd.f32 %v5310, %v5336
      %v5382 = vadd.f32 %v5311, %v5336
      %v5383 = vadd.f32 %v5312, %v5336
      %v5384 = vadd.f32 %v5313, %v5336
      %v5385 = vadd.f32 %v5314, %v5336
      %v5386 = vadd.f32 %v5315, %v5336
      %v5387 = vadd.f32 %v5316, %v5336
      %v5388 = vadd.f32 %v5317, %v5336
      %v5389 = vadd.f32 %v5318, %v5336
      %v5390 = vadd.f32 %v5319, %v5336
      %v5391 = vadd.f32 %v5320, %v5336
      %v5392 = vadd.f32 %v5321, %v5336
      %v5393 = vadd.f32 %v5322, %v5336
      %v5394 = vadd.f32 %v5323, %v5336
      %v5395 = vadd.f32 %v5324, %v5336
      %v5396 = vadd.f32 %v5325, %v5336
      %v5397 = vadd.f32 %v5326, %v5336
      %v5398 = vadd.f32 %v5327, %v5336
      %v5399 = vadd.f32 %v5328, %v5336
      %v5400 = vadd.f32 %v5329, %v5336
      %v5401 = vadd.f32 %v5330, %v5336
      %v5402 = vadd.f32 %v5338, %v3004
      %v5403 = vadd.f32 %v5339, %v3007
      %v5404 = vadd.f32 %v5340, %v3012
      %v5405 = vadd.f32 %v5341, %v3015
      %v5406 = vadd.f32 %v5342, %v3020
      %v5407 = vadd.f32 %v5343, %v3023
      %v5408 = vadd.f32 %v5344, %v3028
      %v5409 = vadd.f32 %v5345, %v3031
      %v5410 = vadd.f32 %v5346, %v3036
      %v5411 = vadd.f32 %v5347, %v3039
      %v5412 = vadd.f32 %v5348, %v3044
      %v5413 = vadd.f32 %v5349, %v3047
      %v5414 = vadd.f32 %v5350, %v3052
      %v5415 = vadd.f32 %v5351, %v3055
      %v5416 = vadd.f32 %v5352, %v3060
      %v5417 = vadd.f32 %v5353, %v3063
      %v5418 = vadd.f32 %v5354, %v3068
      %v5419 = vadd.f32 %v5355, %v3071
      %v5420 = vadd.f32 %v5356, %v3076
      %v5421 = vadd.f32 %v5357, %v3079
      %v5422 = vadd.f32 %v5358, %v3084
      %v5423 = vadd.f32 %v5359, %v3087
      %v5424 = vadd.f32 %v5360, %v3092
      %v5425 = vadd.f32 %v5361, %v3095
      %v5426 = vadd.f32 %v5362, %v3100
      %v5427 = vadd.f32 %v5363, %v3103
      %v5428 = vadd.f32 %v5364, %v3108
      %v5429 = vadd.f32 %v5365, %v3111
      %v5430 = vadd.f32 %v5366, %v3116
      %v5431 = vadd.f32 %v5367, %v3119
      %v5432 = vadd.f32 %v5368, %v3124
      %v5433 = vadd.f32 %v5369, %v3127
      %v5434 = vadd.f32 %v5370, %v3132
      %v5435 = vadd.f32 %v5371, %v3135
      %v5436 = vadd.f32 %v5372, %v3140
      %v5437 = vadd.f32 %v5373, %v3143
      %v5438 = vadd.f32 %v5374, %v3148
      %v5439 = vadd.f32 %v5375, %v3151
      %v5440 = vadd.f32 %v5376, %v3156
      %v5441 = vadd.f32 %v5377, %v3159
      %v5442 = vadd.f32 %v5378, %v3164
      %v5443 = vadd.f32 %v5379, %v3167
      %v5444 = vadd.f32 %v5380, %v3172
      %v5445 = vadd.f32 %v5381, %v3175
      %v5446 = vadd.f32 %v5382, %v3180
      %v5447 = vadd.f32 %v5383, %v3183
      %v5448 = vadd.f32 %v5384, %v3188
      %v5449 = vadd.f32 %v5385, %v3191
      %v5450 = vadd.f32 %v5386, %v3196
      %v5451 = vadd.f32 %v5387, %v3199
      %v5452 = vadd.f32 %v5388, %v3204
      %v5453 = vadd.f32 %v5389, %v3207
      %v5454 = vadd.f32 %v5390, %v3212
      %v5455 = vadd.f32 %v5391, %v3215
      %v5456 = vadd.f32 %v5392, %v3220
      %v5457 = vadd.f32 %v5393, %v3223
      %v5458 = vadd.f32 %v5394, %v3228
      %v5459 = vadd.f32 %v5395, %v3231
      %v5460 = vadd.f32 %v5396, %v3236
      %v5461 = vadd.f32 %v5397, %v3239
      %v5462 = vadd.f32 %v5398, %v3244
      %v5463 = vadd.f32 %v5399, %v3247
      %v5464 = vadd.f32 %v5400, %v3252
      %v5465 = vadd.f32 %v5401, %v3255
      %vm5466 = vcmp.gt.f32.partialorder %v5402, 0.0
      %vm5467 = vcmp.gt.f32.partialorder %v5403, 0.0
      %vm5468 = vcmp.gt.f32.partialorder %v5404, 0.0
      %vm5469 = vcmp.gt.f32.partialorder %v5405, 0.0
      %vm5470 = vcmp.gt.f32.partialorder %v5406, 0.0
      %vm5471 = vcmp.gt.f32.partialorder %v5407, 0.0
      %vm5472 = vcmp.gt.f32.partialorder %v5408, 0.0
      %vm5473 = vcmp.gt.f32.partialorder %v5409, 0.0
      %vm5474 = vcmp.gt.f32.partialorder %v5410, 0.0
      %vm5475 = vcmp.gt.f32.partialorder %v5411, 0.0
      %vm5476 = vcmp.gt.f32.partialorder %v5412, 0.0
      %vm5477 = vcmp.gt.f32.partialorder %v5413, 0.0
      %vm5478 = vcmp.gt.f32.partialorder %v5414, 0.0
      %vm5479 = vcmp.gt.f32.partialorder %v5415, 0.0
      %vm5480 = vcmp.gt.f32.partialorder %v5416, 0.0
      %vm5481 = vcmp.gt.f32.partialorder %v5417, 0.0
      %vm5482 = vcmp.gt.f32.partialorder %v5418, 0.0
      %vm5483 = vcmp.gt.f32.partialorder %v5419, 0.0
      %vm5484 = vcmp.gt.f32.partialorder %v5420, 0.0
      %vm5485 = vcmp.gt.f32.partialorder %v5421, 0.0
      %vm5486 = vcmp.gt.f32.partialorder %v5422, 0.0
      %vm5487 = vcmp.gt.f32.partialorder %v5423, 0.0
      %vm5488 = vcmp.gt.f32.partialorder %v5424, 0.0
      %vm5489 = vcmp.gt.f32.partialorder %v5425, 0.0
      %vm5490 = vcmp.gt.f32.partialorder %v5426, 0.0
      %vm5491 = vcmp.gt.f32.partialorder %v5427, 0.0
      %vm5492 = vcmp.gt.f32.partialorder %v5428, 0.0
      %vm5493 = vcmp.gt.f32.partialorder %v5429, 0.0
      %vm5494 = vcmp.gt.f32.partialorder %v5430, 0.0
      %vm5495 = vcmp.gt.f32.partialorder %v5431, 0.0
      %vm5496 = vcmp.gt.f32.partialorder %v5432, 0.0
      %vm5497 = vcmp.gt.f32.partialorder %v5433, 0.0
      %vm5498 = vcmp.gt.f32.partialorder %v5434, 0.0
      %vm5499 = vcmp.gt.f32.partialorder %v5435, 0.0
      %vm5500 = vcmp.gt.f32.partialorder %v5436, 0.0
      %vm5501 = vcmp.gt.f32.partialorder %v5437, 0.0
      %vm5502 = vcmp.gt.f32.partialorder %v5438, 0.0
      %vm5503 = vcmp.gt.f32.partialorder %v5439, 0.0
      %vm5504 = vcmp.gt.f32.partialorder %v5440, 0.0
      %vm5505 = vcmp.gt.f32.partialorder %v5441, 0.0
      %vm5506 = vcmp.gt.f32.partialorder %v5442, 0.0
      %vm5507 = vcmp.gt.f32.partialorder %v5443, 0.0
      %vm5508 = vcmp.gt.f32.partialorder %v5444, 0.0
      %vm5509 = vcmp.gt.f32.partialorder %v5445, 0.0
      %vm5510 = vcmp.gt.f32.partialorder %v5446, 0.0
      %vm5511 = vcmp.gt.f32.partialorder %v5447, 0.0
      %vm5512 = vcmp.gt.f32.partialorder %v5448, 0.0
      %vm5513 = vcmp.gt.f32.partialorder %v5449, 0.0
      %vm5514 = vcmp.gt.f32.partialorder %v5450, 0.0
      %vm5515 = vcmp.gt.f32.partialorder %v5451, 0.0
      %vm5516 = vcmp.gt.f32.partialorder %v5452, 0.0
      %vm5517 = vcmp.gt.f32.partialorder %v5453, 0.0
      %vm5518 = vcmp.gt.f32.partialorder %v5454, 0.0
      %vm5519 = vcmp.gt.f32.partialorder %v5455, 0.0
      %vm5520 = vcmp.gt.f32.partialorder %v5456, 0.0
      %vm5521 = vcmp.gt.f32.partialorder %v5457, 0.0
      %vm5522 = vcmp.gt.f32.partialorder %v5458, 0.0
      %vm5523 = vcmp.gt.f32.partialorder %v5459, 0.0
      %vm5524 = vcmp.gt.f32.partialorder %v5460, 0.0
      %vm5525 = vcmp.gt.f32.partialorder %v5461, 0.0
      %vm5526 = vcmp.gt.f32.partialorder %v5462, 0.0
      %vm5527 = vcmp.gt.f32.partialorder %v5463, 0.0
      %vm5528 = vcmp.gt.f32.partialorder %v5464, 0.0
      %vm5529 = vcmp.gt.f32.partialorder %v5465, 0.0
      %v5530 = vmul.f32 %v5402, 0.01
      %v5531 = vmul.f32 %v5403, 0.01
      %v5532 = vmul.f32 %v5404, 0.01
      %v5533 = vmul.f32 %v5405, 0.01
      %v5534 = vmul.f32 %v5406, 0.01
      %v5535 = vmul.f32 %v5407, 0.01
      %v5536 = vmul.f32 %v5408, 0.01
      %v5537 = vmul.f32 %v5409, 0.01
      %v5538 = vmul.f32 %v5410, 0.01
      %v5539 = vmul.f32 %v5411, 0.01
      %v5540 = vmul.f32 %v5412, 0.01
      %v5541 = vmul.f32 %v5413, 0.01
      %v5542 = vmul.f32 %v5414, 0.01
      %v5543 = vmul.f32 %v5415, 0.01
      %v5544 = vmul.f32 %v5416, 0.01
      %v5545 = vmul.f32 %v5417, 0.01
      %v5546 = vmul.f32 %v5418, 0.01
      %v5547 = vmul.f32 %v5419, 0.01
      %v5548 = vmul.f32 %v5420, 0.01
      %v5549 = vmul.f32 %v5421, 0.01
      %v5550 = vmul.f32 %v5422, 0.01
      %v5551 = vmul.f32 %v5423, 0.01
      %v5552 = vmul.f32 %v5424, 0.01
      %v5553 = vmul.f32 %v5425, 0.01
      %v5554 = vmul.f32 %v5426, 0.01
      %v5555 = vmul.f32 %v5427, 0.01
      %v5556 = vmul.f32 %v5428, 0.01
      %v5557 = vmul.f32 %v5429, 0.01
      %v5558 = vmul.f32 %v5430, 0.01
      %v5559 = vmul.f32 %v5431, 0.01
      %v5560 = vmul.f32 %v5432, 0.01
      %v5561 = vmul.f32 %v5433, 0.01
      %v5562 = vmul.f32 %v5434, 0.01
      %v5563 = vmul.f32 %v5435, 0.01
      %v5564 = vmul.f32 %v5436, 0.01
      %v5565 = vmul.f32 %v5437, 0.01
      %v5566 = vmul.f32 %v5438, 0.01
      %v5567 = vmul.f32 %v5439, 0.01
      %v5568 = vmul.f32 %v5440, 0.01
      %v5569 = vmul.f32 %v5441, 0.01
      %v5570 = vmul.f32 %v5442, 0.01
      %v5571 = vmul.f32 %v5443, 0.01
      %v5572 = vmul.f32 %v5444, 0.01
      %v5573 = vmul.f32 %v5445, 0.01
      %v5574 = vmul.f32 %v5446, 0.01
      %v5575 = vmul.f32 %v5447, 0.01
      %v5576 = vmul.f32 %v5448, 0.01
      %v5577 = vmul.f32 %v5449, 0.01
      %v5578 = vmul.f32 %v5450, 0.01
      %v5579 = vmul.f32 %v5451, 0.01
      %v5580 = vmul.f32 %v5452, 0.01
      %v5581 = vmul.f32 %v5453, 0.01
      %v5582 = vmul.f32 %v5454, 0.01
      %v5583 = vmul.f32 %v5455, 0.01
      %v5584 = vmul.f32 %v5456, 0.01
      %v5585 = vmul.f32 %v5457, 0.01
      %v5586 = vmul.f32 %v5458, 0.01
      %v5587 = vmul.f32 %v5459, 0.01
      %v5588 = vmul.f32 %v5460, 0.01
      %v5589 = vmul.f32 %v5461, 0.01
      %v5590 = vmul.f32 %v5462, 0.01
      %v5591 = vmul.f32 %v5463, 0.01
      %v5592 = vmul.f32 %v5464, 0.01
      %v5593 = vmul.f32 %v5465, 0.01
      %v5594 = vsel %vm5466, %v5402, %v5530
      %v5595 = vsel %vm5467, %v5403, %v5531
      %v5596 = vsel %vm5468, %v5404, %v5532
      %v5597 = vsel %vm5469, %v5405, %v5533
      %v5598 = vsel %vm5470, %v5406, %v5534
      %v5599 = vsel %vm5471, %v5407, %v5535
      %v5600 = vsel %vm5472, %v5408, %v5536
      %v5601 = vsel %vm5473, %v5409, %v5537
      %v5602 = vsel %vm5474, %v5410, %v5538
      %v5603 = vsel %vm5475, %v5411, %v5539
      %v5604 = vsel %vm5476, %v5412, %v5540
      %v5605 = vsel %vm5477, %v5413, %v5541
      %v5606 = vsel %vm5478, %v5414, %v5542
      %v5607 = vsel %vm5479, %v5415, %v5543
      %v5608 = vsel %vm5480, %v5416, %v5544
      %v5609 = vsel %vm5481, %v5417, %v5545
      %v5610 = vsel %vm5482, %v5418, %v5546
      %v5611 = vsel %vm5483, %v5419, %v5547
      %v5612 = vsel %vm5484, %v5420, %v5548
      %v5613 = vsel %vm5485, %v5421, %v5549
      %v5614 = vsel %vm5486, %v5422, %v5550
      %v5615 = vsel %vm5487, %v5423, %v5551
      %v5616 = vsel %vm5488, %v5424, %v5552
      %v5617 = vsel %vm5489, %v5425, %v5553
      %v5618 = vsel %vm5490, %v5426, %v5554
      %v5619 = vsel %vm5491, %v5427, %v5555
      %v5620 = vsel %vm5492, %v5428, %v5556
      %v5621 = vsel %vm5493, %v5429, %v5557
      %v5622 = vsel %vm5494, %v5430, %v5558
      %v5623 = vsel %vm5495, %v5431, %v5559
      %v5624 = vsel %vm5496, %v5432, %v5560
      %v5625 = vsel %vm5497, %v5433, %v5561
      %v5626 = vsel %vm5498, %v5434, %v5562
      %v5627 = vsel %vm5499, %v5435, %v5563
      %v5628 = vsel %vm5500, %v5436, %v5564
      %v5629 = vsel %vm5501, %v5437, %v5565
      %v5630 = vsel %vm5502, %v5438, %v5566
      %v5631 = vsel %vm5503, %v5439, %v5567
      %v5632 = vsel %vm5504, %v5440, %v5568
      %v5633 = vsel %vm5505, %v5441, %v5569
      %v5634 = vsel %vm5506, %v5442, %v5570
      %v5635 = vsel %vm5507, %v5443, %v5571
      %v5636 = vsel %vm5508, %v5444, %v5572
      %v5637 = vsel %vm5509, %v5445, %v5573
      %v5638 = vsel %vm5510, %v5446, %v5574
      %v5639 = vsel %vm5511, %v5447, %v5575
      %v5640 = vsel %vm5512, %v5448, %v5576
      %v5641 = vsel %vm5513, %v5449, %v5577
      %v5642 = vsel %vm5514, %v5450, %v5578
      %v5643 = vsel %vm5515, %v5451, %v5579
      %v5644 = vsel %vm5516, %v5452, %v5580
      %v5645 = vsel %vm5517, %v5453, %v5581
      %v5646 = vsel %vm5518, %v5454, %v5582
      %v5647 = vsel %vm5519, %v5455, %v5583
      %v5648 = vsel %vm5520, %v5456, %v5584
      %v5649 = vsel %vm5521, %v5457, %v5585
      %v5650 = vsel %vm5522, %v5458, %v5586
      %v5651 = vsel %vm5523, %v5459, %v5587
      %v5652 = vsel %vm5524, %v5460, %v5588
      %v5653 = vsel %vm5525, %v5461, %v5589
      %v5654 = vsel %vm5526, %v5462, %v5590
      %v5655 = vsel %vm5527, %v5463, %v5591
      %v5656 = vsel %vm5528, %v5464, %v5592
      %v5657 = vsel %vm5529, %v5465, %v5593
      %5658 = vst.msk [vmem:[%s285] sm:$0xff] %vm2610, %v5594
      %5659 = vst.msk [vmem:[%s285 + $0x8] sm:$0xff] %vm2610, %v5595
      %5660 = vst.msk [vmem:[%s285 + $0x10] sm:$0xff] %vm2610, %v5596
      %5661 = vst.msk [vmem:[%s285 + $0x18] sm:$0xff] %vm2610, %v5597
      %5662 = vst.msk [vmem:[%s285 + $0x20] sm:$0xff] %vm2610, %v5598
      %5663 = vst.msk [vmem:[%s285 + $0x28] sm:$0xff] %vm2610, %v5599
      %5664 = vst.msk [vmem:[%s285 + $0x30] sm:$0xff] %vm2610, %v5600
      %5665 = vst.msk [vmem:[%s285 + $0x38] sm:$0xff] %vm2610, %v5601
      %5666 = vst.msk [vmem:[%s285 + $0x40] sm:$0xff] %vm2610, %v5602
      %5667 = vst.msk [vmem:[%s285 + $0x48] sm:$0xff] %vm2610, %v5603
      %5668 = vst.msk [vmem:[%s285 + $0x50] sm:$0xff] %vm2610, %v5604
      %5669 = vst.msk [vmem:[%s285 + $0x58] sm:$0xff] %vm2610, %v5605
      %5670 = vst.msk [vmem:[%s285 + $0x60] sm:$0xff] %vm2610, %v5606
      %5671 = vst.msk [vmem:[%s285 + $0x68] sm:$0xff] %vm2610, %v5607
      %5672 = vst.msk [vmem:[%s285 + $0x70] sm:$0xff] %vm2610, %v5608
      %5673 = vst.msk [vmem:[%s285 + $0x78] sm:$0xff] %vm2610, %v5609
      %5674 = vst.msk [vmem:[%s285 + $0x80] sm:$0xff] %vm2610, %v5610
      %5675 = vst.msk [vmem:[%s285 + $0x88] sm:$0xff] %vm2610, %v5611
      %5676 = vst.msk [vmem:[%s285 + $0x90] sm:$0xff] %vm2610, %v5612
      %5677 = vst.msk [vmem:[%s285 + $0x98] sm:$0xff] %vm2610, %v5613
      %5678 = vst.msk [vmem:[%s285 + $0xa0] sm:$0xff] %vm2610, %v5614
      %5679 = vst.msk [vmem:[%s285 + $0xa8] sm:$0xff] %vm2610, %v5615
      %5680 = vst.msk [vmem:[%s285 + $0xb0] sm:$0xff] %vm2610, %v5616
      %5681 = vst.msk [vmem:[%s285 + $0xb8] sm:$0xff] %vm2610, %v5617
      %5682 = vst.msk [vmem:[%s285 + $0xc0] sm:$0xff] %vm2610, %v5618
      %5683 = vst.msk [vmem:[%s285 + $0xc8] sm:$0xff] %vm2610, %v5619
      %5684 = vst.msk [vmem:[%s285 + $0xd0] sm:$0xff] %vm2610, %v5620
      %5685 = vst.msk [vmem:[%s285 + $0xd8] sm:$0xff] %vm2610, %v5621
      %5686 = vst.msk [vmem:[%s285 + $0xe0] sm:$0xff] %vm2610, %v5622
      %5687 = vst.msk [vmem:[%s285 + $0xe8] sm:$0xff] %vm2610, %v5623
      %5688 = vst.msk [vmem:[%s285 + $0xf0] sm:$0xff] %vm2610, %v5624
      %5689 = vst.msk [vmem:[%s285 + $0xf8] sm:$0xff] %vm2610, %v5625
      %5690 = vst.msk [vmem:[%s285 + $0x100] sm:$0xff] %vm2610, %v5626
      %5691 = vst.msk [vmem:[%s285 + $0x108] sm:$0xff] %vm2610, %v5627
      %5692 = vst.msk [vmem:[%s285 + $0x110] sm:$0xff] %vm2610, %v5628
      %5693 = vst.msk [vmem:[%s285 + $0x118] sm:$0xff] %vm2610, %v5629
      %5694 = vst.msk [vmem:[%s285 + $0x120] sm:$0xff] %vm2610, %v5630
      %5695 = vst.msk [vmem:[%s285 + $0x128] sm:$0xff] %vm2610, %v5631
      %5696 = vst.msk [vmem:[%s285 + $0x130] sm:$0xff] %vm2610, %v5632
      %5697 = vst.msk [vmem:[%s285 + $0x138] sm:$0xff] %vm2610, %v5633
      %5698 = vst.msk [vmem:[%s285 + $0x140] sm:$0xff] %vm2610, %v5634
      %5699 = vst.msk [vmem:[%s285 + $0x148] sm:$0xff] %vm2610, %v5635
      %5700 = vst.msk [vmem:[%s285 + $0x150] sm:$0xff] %vm2610, %v5636
      %5701 = vst.msk [vmem:[%s285 + $0x158] sm:$0xff] %vm2610, %v5637
      %5702 = vst.msk [vmem:[%s285 + $0x160] sm:$0xff] %vm2610, %v5638
      %5703 = vst.msk [vmem:[%s285 + $0x168] sm:$0xff] %vm2610, %v5639
      %5704 = vst.msk [vmem:[%s285 + $0x170] sm:$0xff] %vm2610, %v5640
      %5705 = vst.msk [vmem:[%s285 + $0x178] sm:$0xff] %vm2610, %v5641
      %5706 = vst.msk [vmem:[%s285 + $0x180] sm:$0xff] %vm2610, %v5642
      %5707 = vst.msk [vmem:[%s285 + $0x188] sm:$0xff] %vm2610, %v5643
      %5708 = vst.msk [vmem:[%s285 + $0x190] sm:$0xff] %vm2610, %v5644
      %5709 = vst.msk [vmem:[%s285 + $0x198] sm:$0xff] %vm2610, %v5645
      %5710 = vst.msk [vmem:[%s285 + $0x1a0] sm:$0xff] %vm2610, %v5646
      %5711 = vst.msk [vmem:[%s285 + $0x1a8] sm:$0xff] %vm2610, %v5647
      %5712 = vst.msk [vmem:[%s285 + $0x1b0] sm:$0xff] %vm2610, %v5648
      %5713 = vst.msk [vmem:[%s285 + $0x1b8] sm:$0xff] %vm2610, %v5649
      %5714 = vst.msk [vmem:[%s285 + $0x1c0] sm:$0xff] %vm2610, %v5650
      %5715 = vst.msk [vmem:[%s285 + $0x1c8] sm:$0xff] %vm2610, %v5651
      %5716 = vst.msk [vmem:[%s285 + $0x1d0] sm:$0xff] %vm2610, %v5652
      %5717 = vst.msk [vmem:[%s285 + $0x1d8] sm:$0xff] %vm2610, %v5653
      %5718 = vst.msk [vmem:[%s285 + $0x1e0] sm:$0xff] %vm2610, %v5654
      %5719 = vst.msk [vmem:[%s285 + $0x1e8] sm:$0xff] %vm2610, %v5655
      %5720 = vst.msk [vmem:[%s285 + $0x1f0] sm:$0xff] %vm2610, %v5656
      %5721 = vst.msk [vmem:[%s285 + $0x1f8] sm:$0xff] %vm2610, %v5657
      %s5722 = smul.u32 2, %s18
      %p5723 = scmp.lt.s32.totalorder %s5722, 15
      %s5724 = scalar_select %p5723, %s5722, 15
      %s5725 = smul.addr %s5724, 32
      %s5726 = smul.addr %s5725, 8
      %s5727 = scalar_lea.vmem %s7, %s5726
      // Predicated region
      $region49: #{tpu_custom_call.1} parent=47 // pred_check
        %p5728 = pneg %p188
      $region50: #{tpu_custom_call.1} parent=47 // pred_check_branch
        %5730 = sbr.rel (%p5728) target = $region52
      $region51: #{tpu_custom_call.1} parent=47 // pred_region
        %s5731 = smul.u32 2, %s18
      $region52: #{tpu_custom_call.1} parent=47 // pred_fallthru
        _
    $region48: #{tpu_custom_call.1} parent=5 // pred_fallthru
      _
    %p5732 = scmp.le.s32.totalorder 2, %s13
    // Predicated region
    $region53: #{tpu_custom_call.1} parent=5 // pred_check
      %p5733 = pneg %p5732
    $region54: #{tpu_custom_call.1} parent=5 // pred_check_branch
      %5735 = sbr.rel (%p5733) target = $region56
    $region55: #{tpu_custom_call.1} parent=5 // pred_region
      %s5736 = ssub.s32 %s13, 2
      // Predicated region
      $region57: #{tpu_custom_call.1} parent=55 // pred_check
        %p5737 = pneg %p194
      $region58: #{tpu_custom_call.1} parent=55 // pred_check_branch
        %5739 = sbr.rel (%p5737) target = $region60
      $region59: #{tpu_custom_call.1} parent=55 // pred_region
        %s5740 = smul.u32 2, %s19
        %p5741 = scmp.lt.s32.totalorder %s5740, 15
        %s5742 = scalar_select %p5741, %s5740, 15
        %s5743 = smul.addr %s5742, 32
        %s5744 = smul.addr %s5743, 8
        %s5745 = scalar_lea.vmem %s7, %s5744
      $region60: #{tpu_custom_call.1} parent=55 // pred_fallthru
        _
    $region56: #{tpu_custom_call.1} parent=5 // pred_fallthru
      _
  $region6: #{tpu_custom_call.1} parent=0 // loop_footer
    %s17 = sadd.s32 1, %s13
  $region7: #{tpu_custom_call.1} parent=0 // loop_footer_branch
    %12 = sbr.rel target = $region3
  $region8: #{tpu_custom_call.1} parent=0 // loop_exit
    _

</llo_original>
